<compile_context>
chip_gen: v6e
topology: v6e:2x2x1
jax: 0.10.0
libtpu: 0.0.40
codegen_flags: <defaults>
</compile_context>

<pallas_src>
import jax
import jax.numpy as jnp
import numpy as np
from jax import lax
from jax.experimental import pallas as pl
from jax.experimental.pallas import tpu as pltpu


def _round_up(x, m):
    return ((x + m - 1) // m) * m


# ---------------------------------------------------------------------------
# Fused multi-layer, bidirectional QRNN kernel.
# Ref order: x, (Wwh_i, bwh_i, Wuh_i) per layer, out,
#            [x_scr?], wh_scr per layer, [hid_scr per layer if bidir],
#            inter_scr per non-last layer.
# ---------------------------------------------------------------------------
def _make_qrnn_kernel(T, B, B_pad, D, D_pad, H_pads, real_hs, nxt_widths,
                      bidir, need_xscr):
    n_layers = len(H_pads)
    n_rows = T * B_pad
    # TODO(synk): sweep unroll 4..16 and confirm in the bundle dump that the
    # next step's wh load hoists under the current step's tanh.
    unroll = T if T <= 16 else 8

    def kernel(*refs):
        x_ref = refs[0]
        w_refs = refs[1:1 + 3 * n_layers]
        o_ref = refs[1 + 3 * n_layers]
        scratch = list(refs[2 + 3 * n_layers:])

        p = 0
        x_scr = None
        if need_xscr:
            x_scr = scratch[p]
            p += 1
        wh_scrs = scratch[p:p + n_layers]
        p += n_layers
        hid_scrs = []
        if bidir:
            hid_scrs = scratch[p:p + n_layers]
            p += n_layers
        inter_scrs = scratch[p:p + n_layers - 1]

        # ---- Layer-0 staging: batch/lane padding done in VMEM only (input
        # arrives unpadded from HBM). Padded rows/lanes stay exactly zero.
        if need_xscr:
            x_scr[...] = jnp.zeros_like(x_scr)
            # T is small in this harness; static copy loop, masked sub-tile
            # stores happen once, off the serial recurrence path.
            for k in range(T):
                x_scr[pl.ds(k * B_pad, B), pl.ds(0, D)] = (
                    x_ref[pl.ds(k * B, B), :])
            cur_in = x_scr
        else:
            cur_in = x_ref

        for li in range(n_layers):
            wwh_ref, bwh_ref, wuh_ref = w_refs[3 * li:3 * li + 3]
            H_pad = H_pads[li]
            h = real_hs[li]
            wh_scr = wh_scrs[li]
            last = li == n_layers - 1
            nxt = o_ref if last else inter_scrs[li]
            W = nxt_widths[li]

            # ---- Stage 1: input projection for every timestep at once (MXU),
            # computed once and shared by both direction chains.
            wh_scr[...] = (
                jnp.dot(cur_in[...], wwh_ref[...],
                        preferred_element_type=jnp.float32)
                + bwh_ref[...])

            if bidir:
                hid = hid_scrs[li]

                def step(k, h_cat, _wh=wh_scr, _hid=hid, _wuh=wuh_ref,
                         _H=H_pad):
                    # One stacked (2*B_pad, H_pad) dot covers fwd + bwd chains.
                    rf = pl.multiple_of(k * B_pad, 8)
                    rb = pl.multiple_of((T - 1 - k) * B_pad, 8)
                    wh_fb = jnp.concatenate(
                        [_wh[pl.ds(rf, B_pad), :], _wh[pl.ds(rb, B_pad), :]],
                        axis=0)
                    # Recurrent weight streamed from VMEM (not vreg-pinned).
                    a = wh_fb + jnp.dot(h_cat, _wuh[...],
                                        preferred_element_type=jnp.float32)
                    h_new = jnp.tanh(a)
                    # Aligned, unmasked per-step stores (128-lane regions).
                    _hid[pl.ds(rf, B_pad), pl.ds(0, _H)] = h_new[:B_pad]
                    _hid[pl.ds(rb, B_pad), pl.ds(_H, _H)] = h_new[B_pad:]
                    return h_new

                lax.fori_loop(0, T, step,
                              jnp.zeros((2 * B_pad, H_pad), jnp.float32),
                              unroll=unroll)

                # ---- Stage 3: one lane-compaction pass per layer (not per
                # step): pack [fwd 0:h | bwd 0:h | zeros] so the next matmul K
                # and the HBM writeback use round_up(2h,128) lanes.
                if 2 * h <= 128:
                    hf = hid[:, pl.ds(0, H_pad)]
                    hb = hid[:, pl.ds(H_pad, H_pad)]
                    hb_sh = pltpu.roll(hb, shift=h, axis=1)
                    lane = lax.broadcasted_iota(jnp.int32, (n_rows, H_pad), 1)
                    nxt[...] = jnp.where(
                        lane < h, hf, jnp.where(lane < 2 * h, hb_sh, 0.0))
                else:
                    hf = hid[:, pl.ds(0, h)]
                    hb = hid[:, pl.ds(H_pad, h)]
                    pieces = [hf, hb]
                    if W > 2 * h:
                        pieces.append(
                            jnp.zeros((n_rows, W - 2 * h), jnp.float32))
                    nxt[...] = jnp.concatenate(pieces, axis=-1)
            else:
                def step(k, h_prev, _wh=wh_scr, _nxt=nxt, _wuh=wuh_ref):
                    rf = pl.multiple_of(k * B_pad, 8)
                    a = _wh[pl.ds(rf, B_pad), :] + jnp.dot(
                        h_prev, _wuh[...], preferred_element_type=jnp.float32)
                    h_new = jnp.tanh(a)
                    _nxt[pl.ds(rf, B_pad), :] = h_new
                    return h_new

                lax.fori_loop(0, T, step,
                              jnp.zeros((B_pad, H_pad), jnp.float32),
                              unroll=unroll)

            cur_in = nxt

    return kernel


# ---------------------------------------------------------------------------
# Wrapper: pass x unpadded, build lane-padded weights (with eval-dropout keep
# factors folded in), call the fused kernel once, slice the real rows/lanes.
# ---------------------------------------------------------------------------
def qrnn_forward_pallas(x, params, rnn_lay, rnn_drop, bidir):
    T, B, D = x.shape
    n_dir = 2 if bidir else 1
    n_layers = len(rnn_lay)
    B_pad = _round_up(B, 8)
    D_pad = _round_up(D, 128)
    H_pads = [_round_up(h, 128) for h in rnn_lay]
    keeps = [float(1.0 - d) for d in rnn_drop]
    need_xscr = (B != B_pad) or (D != D_pad)

    # Padded input-feature width of each layer's wh projection.
    C_ins = [D_pad] + [_round_up(n_dir * h, 128) for h in rnn_lay[:-1]]
    out_lanes = _round_up(n_dir * rnn_lay[-1], 128)
    nxt_widths = [_round_up(n_dir * h, 128) for h in rnn_lay]

    x2 = x.reshape(T * B, D).astype(jnp.float32)      # NO padding in HBM

    flat_w = []
    in_specs = [pl.BlockSpec((T * B, D), lambda i: (0, 0))]
    bytes_in = 4 * T * B * D
    for li, h in enumerate(rnn_lay):
        H_pad = H_pads[li]
        C_in = C_ins[li]
        real_in = D if li == 0 else n_dir * rnn_lay[li - 1]
        w_wh = jnp.asarray(params[li]["w_wh"], jnp.float32)
        b_wh = jnp.asarray(params[li]["b_wh"], jnp.float32)
        w_uh = jnp.asarray(params[li]["w_uh"], jnp.float32)
        # Fold eval-mode keep factors into the weights (exact for scalar mask).
        if li > 0 and keeps[li - 1] != 1.0:
            w_wh = w_wh * keeps[li - 1]
        if keeps[li] != 1.0:
            w_uh = w_uh * keeps[li]
        w_wh_p = jnp.zeros((C_in, H_pad), jnp.float32).at[:real_in, :h].set(w_wh)
        b_wh_p = jnp.zeros((1, H_pad), jnp.float32).at[:, :h].set(b_wh)
        w_uh_p = jnp.zeros((H_pad, H_pad), jnp.float32).at[:h, :h].set(w_uh)
        flat_w += [w_wh_p, b_wh_p, w_uh_p]
        in_specs += [
            pl.BlockSpec((C_in, H_pad), lambda i: (0, 0)),
            pl.BlockSpec((1, H_pad), lambda i: (0, 0)),
            pl.BlockSpec((H_pad, H_pad), lambda i: (0, 0)),
        ]
        bytes_in += 4 * (C_in * H_pad + H_pad + H_pad * H_pad)

    n_rows = T * B_pad
    out_shape = jax.ShapeDtypeStruct((n_rows, out_lanes), jnp.float32)
    bytes_out = 4 * n_rows * out_lanes

    scratch_shapes = []
    bytes_scratch = 0
    if need_xscr:
        scratch_shapes.append(pltpu.VMEM((n_rows, D_pad), jnp.float32))
        bytes_scratch += 4 * n_rows * D_pad
    for li in range(n_layers):                               # wh scratches
        scratch_shapes.append(pltpu.VMEM((n_rows, H_pads[li]), jnp.float32))
        bytes_scratch += 4 * n_rows * H_pads[li]
    if bidir:                                                # hidden scratches
        for li in range(n_layers):
            scratch_shapes.append(
                pltpu.VMEM((n_rows, 2 * H_pads[li]), jnp.float32))
            bytes_scratch += 4 * n_rows * 2 * H_pads[li]
    for li in range(n_layers - 1):                           # compacted inter
        scratch_shapes.append(pltpu.VMEM((n_rows, C_ins[li + 1]), jnp.float32))
        bytes_scratch += 4 * n_rows * C_ins[li + 1]

    # VMEM budget: resident bytes counted once (grid=(1,)) + headroom; cap is
    # generation-aware (leave margin below physical VMEM).
    total_bytes = bytes_in + bytes_out + bytes_scratch
    try:
        phys = int(getattr(pltpu.get_tpu_info(), "vmem_capacity_bytes",
                           64 * 2**20))
    except Exception:
        phys = 64 * 2**20
    cap = max(16 * 2**20, phys - 8 * 2**20)
    vmem_limit = int(min(cap, max(16 * 2**20, total_bytes + 4 * 2**20)))

    kernel = _make_qrnn_kernel(T, B, B_pad, D, D_pad, H_pads, list(rnn_lay),
                               nxt_widths, bidir, need_xscr)

    out = pl.pallas_call(
        kernel,
        out_shape=out_shape,
        grid=(1,),
        in_specs=in_specs,
        out_specs=pl.BlockSpec((n_rows, out_lanes), lambda i: (0, 0)),
        scratch_shapes=scratch_shapes,
        compiler_params=pltpu.CompilerParams(
            dimension_semantics=("arbitrary",),
            vmem_limit_bytes=vmem_limit,
        ),
    )(x2, *flat_w)

    out = out.reshape(T, B_pad, out_lanes)[:, :B, :n_dir * rnn_lay[-1]]
    if keeps[-1] != 1.0:
        out = out * keeps[-1]          # finish the dropout-keep fold
    return out


# ---------------------------------------------------------------------------
# Parameter construction (QuaternionLinear effective weight) -- plain JAX glue.
# ---------------------------------------------------------------------------
def quaternion_weight(key, in_f, out_f):
    """Assemble the (in_f, out_f) real matrix of a QuaternionLinear layer."""
    assert in_f % 4 == 0 and out_f % 4 == 0
    qi, qo = in_f // 4, out_f // 4
    kr, ki, kj, kk = jax.random.split(key, 4)
    scale = 1.0 / np.sqrt(2.0 * (qi + qo))  # glorot-style quaternion init scale
    r = scale * jax.random.normal(kr, (qi, qo), jnp.float32)
    i = scale * jax.random.normal(ki, (qi, qo), jnp.float32)
    j = scale * jax.random.normal(kj, (qi, qo), jnp.float32)
    k = scale * jax.random.normal(kk, (qi, qo), jnp.float32)
    col_r = jnp.concatenate([r, -i, -j, -k], axis=0)
    col_i = jnp.concatenate([i, r, -k, j], axis=0)
    col_j = jnp.concatenate([j, k, r, -i], axis=0)
    col_k = jnp.concatenate([k, -j, i, r], axis=0)
    return jnp.concatenate([col_r, col_i, col_j, col_k], axis=1)  # (in_f, out_f)


def init_qrnn_params(key, input_dim, rnn_lay, bidir):
    params = []
    current_input = input_dim
    for h in rnn_lay:
        key, k_wh, k_uh = jax.random.split(key, 3)
        w_wh = quaternion_weight(k_wh, current_input, h)   # wh: in -> h (bias)
        b_wh = jnp.zeros((1, h), jnp.float32)
        w_uh = quaternion_weight(k_uh, h, h)                # uh: h -> h (no bias)
        params.append({"w_wh": w_wh, "b_wh": b_wh, "w_uh": w_uh})
        current_input = 2 * h if bidir else h
    return params


# ---------------------------------------------------------------------------
# Pure-JAX reference matching the PyTorch module exactly (for correctness).
# ---------------------------------------------------------------------------
def qrnn_forward_ref(x, params, rnn_lay, rnn_drop, bidir):
    for li, h_dim in enumerate(rnn_lay):
        T, B, _ = x.shape
        if bidir:
            x = jnp.concatenate([x, x[::-1]], axis=1)
            b_eff = 2 * B
        else:
            b_eff = B
        drop_keep = float(1.0 - rnn_drop[li])
        wh_out = jnp.einsum("tbd,dh->tbh", x, params[li]["w_wh"]) + params[li]["b_wh"]
        w_uh = params[li]["w_uh"]

        def step(ht, wh_t):
            at = wh_t + ht @ w_uh
            ht_new = jnp.tanh(at) * drop_keep
            return ht_new, ht_new

        h0 = jnp.zeros((b_eff, h_dim), jnp.float32)
        _, h = lax.scan(step, h0, wh_out)
        if bidir:
            h_f = h[:, :B]
            h_b = h[:, B:][::-1]
            h = jnp.concatenate([h_f, h_b], axis=2)
        x = h
    return x


# ---------------------------------------------------------------------------
if __name__ == "__main__":
    # Small, deterministic config consistent with the module's forward.
    T, B, D = 8, 2, 16            # (seq, batch, feat); D divisible by 4 (quaternion)
    rnn_lay = [32, 32]            # hidden sizes, divisible by 4
    rnn_drop = [0.0, 0.0]
    bidir = True                  # rnn_bidir = True

    key = jax.random.PRNGKey(0)
    key, kx, kp = jax.random.split(key, 3)
    x = jax.random.normal(kx, (T, B, D), jnp.float32)
    params = init_qrnn_params(kp, D, rnn_lay, bidir)

    fwd = jax.jit(lambda xx, pp: qrnn_forward_pallas(xx, pp, rnn_lay, rnn_drop, bidir))
    out = jax.block_until_ready(fwd(x, params))

    ref = jax.block_until_ready(qrnn_forward_ref(x, params, rnn_lay, rnn_drop, bidir))

    expected_out_dim = rnn_lay[-1] * (2 if bidir else 1)
    assert out.shape == (T, B, expected_out_dim), out.shape
    np.testing.assert_allclose(np.asarray(out), np.asarray(ref), atol=2e-5, rtol=2e-5)

    print("KERNEL_OK")
</pallas_src>

<mosaic_0001>
module attributes {stable_mosaic.version = 11 : i64} {
  func.func @kernel(%arg0: i32, %arg1: memref<16x16xf32, #tpu.memory_space<vmem>>, %arg2: memref<128x128xf32, #tpu.memory_space<vmem>>, %arg3: memref<1x128xf32, #tpu.memory_space<vmem>>, %arg4: memref<128x128xf32, #tpu.memory_space<vmem>>, %arg5: memref<128x128xf32, #tpu.memory_space<vmem>>, %arg6: memref<1x128xf32, #tpu.memory_space<vmem>>, %arg7: memref<128x128xf32, #tpu.memory_space<vmem>>, %arg8: memref<64x128xf32, #tpu.memory_space<vmem>>, %arg9: memref<64x128xf32, #tpu.memory_space<vmem>>, %arg10: memref<64x128xf32, #tpu.memory_space<vmem>>, %arg11: memref<64x128xf32, #tpu.memory_space<vmem>>, %arg12: memref<64x256xf32, #tpu.memory_space<vmem>>, %arg13: memref<64x256xf32, #tpu.memory_space<vmem>>, %arg14: memref<64x128xf32, #tpu.memory_space<vmem>>) attributes {dimension_semantics = [#tpu.dimension_semantics<arbitrary>], iteration_bounds = array<i64: 1>, scalar_prefetch = 0 : i64, scratch_operands = 6 : i64, tpu.core_type = #tpu.core_type<tc>, window_params = [{pipeline_mode = #tpu.pipeline_mode<synchronous>, transform_indices = @transform_0, window_bounds = array<i64: 16, 16>}, {pipeline_mode = #tpu.pipeline_mode<synchronous>, transform_indices = @transform_1, window_bounds = array<i64: 128, 128>}, {pipeline_mode = #tpu.pipeline_mode<synchronous>, transform_indices = @transform_2, window_bounds = array<i64: 1, 128>}, {pipeline_mode = #tpu.pipeline_mode<synchronous>, transform_indices = @transform_3, window_bounds = array<i64: 128, 128>}, {pipeline_mode = #tpu.pipeline_mode<synchronous>, transform_indices = @transform_4, window_bounds = array<i64: 128, 128>}, {pipeline_mode = #tpu.pipeline_mode<synchronous>, transform_indices = @transform_5, window_bounds = array<i64: 1, 128>}, {pipeline_mode = #tpu.pipeline_mode<synchronous>, transform_indices = @transform_6, window_bounds = array<i64: 128, 128>}, {pipeline_mode = #tpu.pipeline_mode<synchronous>, transform_indices = @transform_7, window_bounds = array<i64: 64, 128>}]} {
    %cst = arith.constant 0.000000e+00 : f32
    %0 = vector.broadcast %cst : f32 to vector<64x128xf32>
    %c0 = arith.constant 0 : index
    %c0_0 = arith.constant 0 : index
    %1 = vector.load %arg9[%c0, %c0_0] : memref<64x128xf32, #tpu.memory_space<vmem>>, vector<64x128xf32>
    tpu.vector_store %arg9[%c0, %c0_0], %0 {strides = array<i32>} : memref<64x128xf32, #tpu.memory_space<vmem>>, vector<64x128xf32>,
    %c0_1 = arith.constant 0 : index
    %c0_2 = arith.constant 0 : index
    %2 = vector.load %arg1[%c0_1, %c0_2] : memref<16x16xf32, #tpu.memory_space<vmem>>, vector<2x16xf32>
    %c0_3 = arith.constant 0 : index
    %c0_4 = arith.constant 0 : index
    %3 = vector.load %arg9[%c0_3, %c0_4] : memref<64x128xf32, #tpu.memory_space<vmem>>, vector<2x16xf32>
    tpu.vector_store %arg9[%c0_3, %c0_4], %2 {strides = array<i32>} : memref<64x128xf32, #tpu.memory_space<vmem>>, vector<2x16xf32>,
    %c2 = arith.constant 2 : index
    %c0_5 = arith.constant 0 : index
    %4 = vector.load %arg1[%c2, %c0_5] : memref<16x16xf32, #tpu.memory_space<vmem>>, vector<2x16xf32>
    %c8 = arith.constant 8 : index
    %c0_6 = arith.constant 0 : index
    %5 = vector.load %arg9[%c8, %c0_6] : memref<64x128xf32, #tpu.memory_space<vmem>>, vector<2x16xf32>
    tpu.vector_store %arg9[%c8, %c0_6], %4 {strides = array<i32>} : memref<64x128xf32, #tpu.memory_space<vmem>>, vector<2x16xf32>,
    %c4 = arith.constant 4 : index
    %c0_7 = arith.constant 0 : index
    %6 = vector.load %arg1[%c4, %c0_7] : memref<16x16xf32, #tpu.memory_space<vmem>>, vector<2x16xf32>
    %c16 = arith.constant 16 : index
    %c0_8 = arith.constant 0 : index
    %7 = vector.load %arg9[%c16, %c0_8] : memref<64x128xf32, #tpu.memory_space<vmem>>, vector<2x16xf32>
    tpu.vector_store %arg9[%c16, %c0_8], %6 {strides = array<i32>} : memref<64x128xf32, #tpu.memory_space<vmem>>, vector<2x16xf32>,
    %c6 = arith.constant 6 : index
    %c0_9 = arith.constant 0 : index
    %8 = vector.load %arg1[%c6, %c0_9] : memref<16x16xf32, #tpu.memory_space<vmem>>, vector<2x16xf32>
    %c24 = arith.constant 24 : index
    %c0_10 = arith.constant 0 : index
    %9 = vector.load %arg9[%c24, %c0_10] : memref<64x128xf32, #tpu.memory_space<vmem>>, vector<2x16xf32>
    tpu.vector_store %arg9[%c24, %c0_10], %8 {strides = array<i32>} : memref<64x128xf32, #tpu.memory_space<vmem>>, vector<2x16xf32>,
    %c8_11 = arith.constant 8 : index
    %c0_12 = arith.constant 0 : index
    %10 = vector.load %arg1[%c8_11, %c0_12] : memref<16x16xf32, #tpu.memory_space<vmem>>, vector<2x16xf32>
    %c32 = arith.constant 32 : index
    %c0_13 = arith.constant 0 : index
    %11 = vector.load %arg9[%c32, %c0_13] : memref<64x128xf32, #tpu.memory_space<vmem>>, vector<2x16xf32>
    tpu.vector_store %arg9[%c32, %c0_13], %10 {strides = array<i32>} : memref<64x128xf32, #tpu.memory_space<vmem>>, vector<2x16xf32>,
    %c10 = arith.constant 10 : index
    %c0_14 = arith.constant 0 : index
    %12 = vector.load %arg1[%c10, %c0_14] : memref<16x16xf32, #tpu.memory_space<vmem>>, vector<2x16xf32>
    %c40 = arith.constant 40 : index
    %c0_15 = arith.constant 0 : index
    %13 = vector.load %arg9[%c40, %c0_15] : memref<64x128xf32, #tpu.memory_space<vmem>>, vector<2x16xf32>
    tpu.vector_store %arg9[%c40, %c0_15], %12 {strides = array<i32>} : memref<64x128xf32, #tpu.memory_space<vmem>>, vector<2x16xf32>,
    %c12 = arith.constant 12 : index
    %c0_16 = arith.constant 0 : index
    %14 = vector.load %arg1[%c12, %c0_16] : memref<16x16xf32, #tpu.memory_space<vmem>>, vector<2x16xf32>
    %c48 = arith.constant 48 : index
    %c0_17 = arith.constant 0 : index
    %15 = vector.load %arg9[%c48, %c0_17] : memref<64x128xf32, #tpu.memory_space<vmem>>, vector<2x16xf32>
    tpu.vector_store %arg9[%c48, %c0_17], %14 {strides = array<i32>} : memref<64x128xf32, #tpu.memory_space<vmem>>, vector<2x16xf32>,
    %c14 = arith.constant 14 : index
    %c0_18 = arith.constant 0 : index
    %16 = vector.load %arg1[%c14, %c0_18] : memref<16x16xf32, #tpu.memory_space<vmem>>, vector<2x16xf32>
    %c56 = arith.constant 56 : index
    %c0_19 = arith.constant 0 : index
    %17 = vector.load %arg9[%c56, %c0_19] : memref<64x128xf32, #tpu.memory_space<vmem>>, vector<2x16xf32>
    tpu.vector_store %arg9[%c56, %c0_19], %16 {strides = array<i32>} : memref<64x128xf32, #tpu.memory_space<vmem>>, vector<2x16xf32>,
    %c0_20 = arith.constant 0 : index
    %c0_21 = arith.constant 0 : index
    %18 = vector.load %arg9[%c0_20, %c0_21] : memref<64x128xf32, #tpu.memory_space<vmem>>, vector<64x128xf32>
    %c0_22 = arith.constant 0 : index
    %c0_23 = arith.constant 0 : index
    %19 = vector.load %arg2[%c0_22, %c0_23] : memref<128x128xf32, #tpu.memory_space<vmem>>, vector<128x128xf32>
    %cst_24 = arith.constant dense<0.000000e+00> : vector<64x128xf32>
    %20 = tpu.matmul %18, %19, %cst_24 {dimension_numbers = #tpu.dot_dimension_numbers<[1], [0], [0], [1], [0, 0, 1, 1], [], []>} : vector<64x128xf32>, vector<128x128xf32>, vector<64x128xf32> -> vector<64x128xf32>
    %c0_25 = arith.constant 0 : index
    %c0_26 = arith.constant 0 : index
    %21 = vector.load %arg3[%c0_25, %c0_26] : memref<1x128xf32, #tpu.memory_space<vmem>>, vector<1x128xf32>
    %22 = vector.broadcast %21 : vector<1x128xf32> to vector<64x128xf32>
    %23 = arith.addf %20, %22 : vector<64x128xf32>
    %c0_27 = arith.constant 0 : index
    %c0_28 = arith.constant 0 : index
    %24 = vector.load %arg10[%c0_27, %c0_28] : memref<64x128xf32, #tpu.memory_space<vmem>>, vector<64x128xf32>
    tpu.vector_store %arg10[%c0_27, %c0_28], %23 {strides = array<i32>} : memref<64x128xf32, #tpu.memory_space<vmem>>, vector<64x128xf32>,
    %cst_29 = arith.constant 0.000000e+00 : f32
    %25 = vector.broadcast %cst_29 : f32 to vector<16x128xf32>
    %c0_i32 = arith.constant 0 : i32
    %c8_i32 = arith.constant 8 : i32
    %26 = arith.muli %c0_i32, %c8_i32 : i32
    %27 = tpu.assume_multiple %26, 8 : i32
    %c7_i32 = arith.constant 7 : i32
    %28 = arith.subi %c7_i32, %c0_i32 : i32
    %c8_i32_30 = arith.constant 8 : i32
    %29 = arith.muli %28, %c8_i32_30 : i32
    %30 = tpu.assume_multiple %29, 8 : i32
    %31 = arith.index_cast %27 : i32 to index
    %c0_31 = arith.constant 0 : index
    %32 = vector.load %arg10[%31, %c0_31] : memref<64x128xf32, #tpu.memory_space<vmem>>, vector<8x128xf32>
    %33 = arith.index_cast %30 : i32 to index
    %c0_32 = arith.constant 0 : index
    %34 = vector.load %arg10[%33, %c0_32] : memref<64x128xf32, #tpu.memory_space<vmem>>, vector<8x128xf32>
    %35 = tpu.concatenate %32, %34 in 0 : vector<8x128xf32>, vector<8x128xf32> -> vector<16x128xf32>
    %c0_33 = arith.constant 0 : index
    %c0_34 = arith.constant 0 : index
    %36 = vector.load %arg4[%c0_33, %c0_34] : memref<128x128xf32, #tpu.memory_space<vmem>>, vector<128x128xf32>
    %cst_35 = arith.constant dense<0.000000e+00> : vector<16x128xf32>
    %37 = tpu.matmul %25, %36, %cst_35 {dimension_numbers = #tpu.dot_dimension_numbers<[1], [0], [0], [1], [0, 0, 1, 1], [], []>} : vector<16x128xf32>, vector<128x128xf32>, vector<16x128xf32> -> vector<16x128xf32>
    %38 = arith.addf %35, %37 : vector<16x128xf32>
    %39 = math.tanh %38 : vector<16x128xf32>
    %40 = vector.extract_strided_slice %39 {offsets = [0, 0], sizes = [8, 128], strides = [1, 1]} : vector<16x128xf32> to vector<8x128xf32>
    %41 = arith.index_cast %27 : i32 to index
    %c0_36 = arith.constant 0 : index
    %42 = vector.load %arg12[%41, %c0_36] : memref<64x256xf32, #tpu.memory_space<vmem>>, vector<8x128xf32>
    tpu.vector_store %arg12[%41, %c0_36], %40 {strides = array<i32>} : memref<64x256xf32, #tpu.memory_space<vmem>>, vector<8x128xf32>,
    %43 = vector.extract_strided_slice %39 {offsets = [8, 0], sizes = [8, 128], strides = [1, 1]} : vector<16x128xf32> to vector<8x128xf32>
    %44 = arith.index_cast %30 : i32 to index
    %c128 = arith.constant 128 : index
    %45 = vector.load %arg12[%44, %c128] : memref<64x256xf32, #tpu.memory_space<vmem>>, vector<8x128xf32>
    tpu.vector_store %arg12[%44, %c128], %43 {strides = array<i32>} : memref<64x256xf32, #tpu.memory_space<vmem>>, vector<8x128xf32>,
    %c1_i32 = arith.constant 1 : i32
    %c8_i32_37 = arith.constant 8 : i32
    %46 = arith.muli %c1_i32, %c8_i32_37 : i32
    %47 = tpu.assume_multiple %46, 8 : i32
    %c7_i32_38 = arith.constant 7 : i32
    %48 = arith.subi %c7_i32_38, %c1_i32 : i32
    %c8_i32_39 = arith.constant 8 : i32
    %49 = arith.muli %48, %c8_i32_39 : i32
    %50 = tpu.assume_multiple %49, 8 : i32
    %51 = arith.index_cast %47 : i32 to index
    %c0_40 = arith.constant 0 : index
    %52 = vector.load %arg10[%51, %c0_40] : memref<64x128xf32, #tpu.memory_space<vmem>>, vector<8x128xf32>
    %53 = arith.index_cast %50 : i32 to index
    %c0_41 = arith.constant 0 : index
    %54 = vector.load %arg10[%53, %c0_41] : memref<64x128xf32, #tpu.memory_space<vmem>>, vector<8x128xf32>
    %55 = tpu.concatenate %52, %54 in 0 : vector<8x128xf32>, vector<8x128xf32> -> vector<16x128xf32>
    %c0_42 = arith.constant 0 : index
    %c0_43 = arith.constant 0 : index
    %56 = vector.load %arg4[%c0_42, %c0_43] : memref<128x128xf32, #tpu.memory_space<vmem>>, vector<128x128xf32>
    %cst_44 = arith.constant dense<0.000000e+00> : vector<16x128xf32>
    %57 = tpu.matmul %39, %56, %cst_44 {dimension_numbers = #tpu.dot_dimension_numbers<[1], [0], [0], [1], [0, 0, 1, 1], [], []>} : vector<16x128xf32>, vector<128x128xf32>, vector<16x128xf32> -> vector<16x128xf32>
    %58 = arith.addf %55, %57 : vector<16x128xf32>
    %59 = math.tanh %58 : vector<16x128xf32>
    %60 = vector.extract_strided_slice %59 {offsets = [0, 0], sizes = [8, 128], strides = [1, 1]} : vector<16x128xf32> to vector<8x128xf32>
    %61 = arith.index_cast %47 : i32 to index
    %c0_45 = arith.constant 0 : index
    %62 = vector.load %arg12[%61, %c0_45] : memref<64x256xf32, #tpu.memory_space<vmem>>, vector<8x128xf32>
    tpu.vector_store %arg12[%61, %c0_45], %60 {strides = array<i32>} : memref<64x256xf32, #tpu.memory_space<vmem>>, vector<8x128xf32>,
    %63 = vector.extract_strided_slice %59 {offsets = [8, 0], sizes = [8, 128], strides = [1, 1]} : vector<16x128xf32> to vector<8x128xf32>
    %64 = arith.index_cast %50 : i32 to index
    %c128_46 = arith.constant 128 : index
    %65 = vector.load %arg12[%64, %c128_46] : memref<64x256xf32, #tpu.memory_space<vmem>>, vector<8x128xf32>
    tpu.vector_store %arg12[%64, %c128_46], %63 {strides = array<i32>} : memref<64x256xf32, #tpu.memory_space<vmem>>, vector<8x128xf32>,
    %c2_i32 = arith.constant 2 : i32
    %c8_i32_47 = arith.constant 8 : i32
    %66 = arith.muli %c2_i32, %c8_i32_47 : i32
    %67 = tpu.assume_multiple %66, 8 : i32
    %c7_i32_48 = arith.constant 7 : i32
    %68 = arith.subi %c7_i32_48, %c2_i32 : i32
    %c8_i32_49 = arith.constant 8 : i32
    %69 = arith.muli %68, %c8_i32_49 : i32
    %70 = tpu.assume_multiple %69, 8 : i32
    %71 = arith.index_cast %67 : i32 to index
    %c0_50 = arith.constant 0 : index
    %72 = vector.load %arg10[%71, %c0_50] : memref<64x128xf32, #tpu.memory_space<vmem>>, vector<8x128xf32>
    %73 = arith.index_cast %70 : i32 to index
    %c0_51 = arith.constant 0 : index
    %74 = vector.load %arg10[%73, %c0_51] : memref<64x128xf32, #tpu.memory_space<vmem>>, vector<8x128xf32>
    %75 = tpu.concatenate %72, %74 in 0 : vector<8x128xf32>, vector<8x128xf32> -> vector<16x128xf32>
    %c0_52 = arith.constant 0 : index
    %c0_53 = arith.constant 0 : index
    %76 = vector.load %arg4[%c0_52, %c0_53] : memref<128x128xf32, #tpu.memory_space<vmem>>, vector<128x128xf32>
    %cst_54 = arith.constant dense<0.000000e+00> : vector<16x128xf32>
    %77 = tpu.matmul %59, %76, %cst_54 {dimension_numbers = #tpu.dot_dimension_numbers<[1], [0], [0], [1], [0, 0, 1, 1], [], []>} : vector<16x128xf32>, vector<128x128xf32>, vector<16x128xf32> -> vector<16x128xf32>
    %78 = arith.addf %75, %77 : vector<16x128xf32>
    %79 = math.tanh %78 : vector<16x128xf32>
    %80 = vector.extract_strided_slice %79 {offsets = [0, 0], sizes = [8, 128], strides = [1, 1]} : vector<16x128xf32> to vector<8x128xf32>
    %81 = arith.index_cast %67 : i32 to index
    %c0_55 = arith.constant 0 : index
    %82 = vector.load %arg12[%81, %c0_55] : memref<64x256xf32, #tpu.memory_space<vmem>>, vector<8x128xf32>
    tpu.vector_store %arg12[%81, %c0_55], %80 {strides = array<i32>} : memref<64x256xf32, #tpu.memory_space<vmem>>, vector<8x128xf32>,
    %83 = vector.extract_strided_slice %79 {offsets = [8, 0], sizes = [8, 128], strides = [1, 1]} : vector<16x128xf32> to vector<8x128xf32>
    %84 = arith.index_cast %70 : i32 to index
    %c128_56 = arith.constant 128 : index
    %85 = vector.load %arg12[%84, %c128_56] : memref<64x256xf32, #tpu.memory_space<vmem>>, vector<8x128xf32>
    tpu.vector_store %arg12[%84, %c128_56], %83 {strides = array<i32>} : memref<64x256xf32, #tpu.memory_space<vmem>>, vector<8x128xf32>,
    %c3_i32 = arith.constant 3 : i32
    %c8_i32_57 = arith.constant 8 : i32
    %86 = arith.muli %c3_i32, %c8_i32_57 : i32
    %87 = tpu.assume_multiple %86, 8 : i32
    %c7_i32_58 = arith.constant 7 : i32
    %88 = arith.subi %c7_i32_58, %c3_i32 : i32
    %c8_i32_59 = arith.constant 8 : i32
    %89 = arith.muli %88, %c8_i32_59 : i32
    %90 = tpu.assume_multiple %89, 8 : i32
    %91 = arith.index_cast %87 : i32 to index
    %c0_60 = arith.constant 0 : index
    %92 = vector.load %arg10[%91, %c0_60] : memref<64x128xf32, #tpu.memory_space<vmem>>, vector<8x128xf32>
    %93 = arith.index_cast %90 : i32 to index
    %c0_61 = arith.constant 0 : index
    %94 = vector.load %arg10[%93, %c0_61] : memref<64x128xf32, #tpu.memory_space<vmem>>, vector<8x128xf32>
    %95 = tpu.concatenate %92, %94 in 0 : vector<8x128xf32>, vector<8x128xf32> -> vector<16x128xf32>
    %c0_62 = arith.constant 0 : index
    %c0_63 = arith.constant 0 : index
    %96 = vector.load %arg4[%c0_62, %c0_63] : memref<128x128xf32, #tpu.memory_space<vmem>>, vector<128x128xf32>
    %cst_64 = arith.constant dense<0.000000e+00> : vector<16x128xf32>
    %97 = tpu.matmul %79, %96, %cst_64 {dimension_numbers = #tpu.dot_dimension_numbers<[1], [0], [0], [1], [0, 0, 1, 1], [], []>} : vector<16x128xf32>, vector<128x128xf32>, vector<16x128xf32> -> vector<16x128xf32>
    %98 = arith.addf %95, %97 : vector<16x128xf32>
    %99 = math.tanh %98 : vector<16x128xf32>
    %100 = vector.extract_strided_slice %99 {offsets = [0, 0], sizes = [8, 128], strides = [1, 1]} : vector<16x128xf32> to vector<8x128xf32>
    %101 = arith.index_cast %87 : i32 to index
    %c0_65 = arith.constant 0 : index
    %102 = vector.load %arg12[%101, %c0_65] : memref<64x256xf32, #tpu.memory_space<vmem>>, vector<8x128xf32>
    tpu.vector_store %arg12[%101, %c0_65], %100 {strides = array<i32>} : memref<64x256xf32, #tpu.memory_space<vmem>>, vector<8x128xf32>,
    %103 = vector.extract_strided_slice %99 {offsets = [8, 0], sizes = [8, 128], strides = [1, 1]} : vector<16x128xf32> to vector<8x128xf32>
    %104 = arith.index_cast %90 : i32 to index
    %c128_66 = arith.constant 128 : index
    %105 = vector.load %arg12[%104, %c128_66] : memref<64x256xf32, #tpu.memory_space<vmem>>, vector<8x128xf32>
    tpu.vector_store %arg12[%104, %c128_66], %103 {strides = array<i32>} : memref<64x256xf32, #tpu.memory_space<vmem>>, vector<8x128xf32>,
    %c4_i32 = arith.constant 4 : i32
    %c8_i32_67 = arith.constant 8 : i32
    %106 = arith.muli %c4_i32, %c8_i32_67 : i32
    %107 = tpu.assume_multiple %106, 8 : i32
    %c7_i32_68 = arith.constant 7 : i32
    %108 = arith.subi %c7_i32_68, %c4_i32 : i32
    %c8_i32_69 = arith.constant 8 : i32
    %109 = arith.muli %108, %c8_i32_69 : i32
    %110 = tpu.assume_multiple %109, 8 : i32
    %111 = arith.index_cast %107 : i32 to index
    %c0_70 = arith.constant 0 : index
    %112 = vector.load %arg10[%111, %c0_70] : memref<64x128xf32, #tpu.memory_space<vmem>>, vector<8x128xf32>
    %113 = arith.index_cast %110 : i32 to index
    %c0_71 = arith.constant 0 : index
    %114 = vector.load %arg10[%113, %c0_71] : memref<64x128xf32, #tpu.memory_space<vmem>>, vector<8x128xf32>
    %115 = tpu.concatenate %112, %114 in 0 : vector<8x128xf32>, vector<8x128xf32> -> vector<16x128xf32>
    %c0_72 = arith.constant 0 : index
    %c0_73 = arith.constant 0 : index
    %116 = vector.load %arg4[%c0_72, %c0_73] : memref<128x128xf32, #tpu.memory_space<vmem>>, vector<128x128xf32>
    %cst_74 = arith.constant dense<0.000000e+00> : vector<16x128xf32>
    %117 = tpu.matmul %99, %116, %cst_74 {dimension_numbers = #tpu.dot_dimension_numbers<[1], [0], [0], [1], [0, 0, 1, 1], [], []>} : vector<16x128xf32>, vector<128x128xf32>, vector<16x128xf32> -> vector<16x128xf32>
    %118 = arith.addf %115, %117 : vector<16x128xf32>
    %119 = math.tanh %118 : vector<16x128xf32>
    %120 = vector.extract_strided_slice %119 {offsets = [0, 0], sizes = [8, 128], strides = [1, 1]} : vector<16x128xf32> to vector<8x128xf32>
    %121 = arith.index_cast %107 : i32 to index
    %c0_75 = arith.constant 0 : index
    %122 = vector.load %arg12[%121, %c0_75] : memref<64x256xf32, #tpu.memory_space<vmem>>, vector<8x128xf32>
    tpu.vector_store %arg12[%121, %c0_75], %120 {strides = array<i32>} : memref<64x256xf32, #tpu.memory_space<vmem>>, vector<8x128xf32>,
    %123 = vector.extract_strided_slice %119 {offsets = [8, 0], sizes = [8, 128], strides = [1, 1]} : vector<16x128xf32> to vector<8x128xf32>
    %124 = arith.index_cast %110 : i32 to index
    %c128_76 = arith.constant 128 : index
    %125 = vector.load %arg12[%124, %c128_76] : memref<64x256xf32, #tpu.memory_space<vmem>>, vector<8x128xf32>
    tpu.vector_store %arg12[%124, %c128_76], %123 {strides = array<i32>} : memref<64x256xf32, #tpu.memory_space<vmem>>, vector<8x128xf32>,
    %c5_i32 = arith.constant 5 : i32
    %c8_i32_77 = arith.constant 8 : i32
    %126 = arith.muli %c5_i32, %c8_i32_77 : i32
    %127 = tpu.assume_multiple %126, 8 : i32
    %c7_i32_78 = arith.constant 7 : i32
    %128 = arith.subi %c7_i32_78, %c5_i32 : i32
    %c8_i32_79 = arith.constant 8 : i32
    %129 = arith.muli %128, %c8_i32_79 : i32
    %130 = tpu.assume_multiple %129, 8 : i32
    %131 = arith.index_cast %127 : i32 to index
    %c0_80 = arith.constant 0 : index
    %132 = vector.load %arg10[%131, %c0_80] : memref<64x128xf32, #tpu.memory_space<vmem>>, vector<8x128xf32>
    %133 = arith.index_cast %130 : i32 to index
    %c0_81 = arith.constant 0 : index
    %134 = vector.load %arg10[%133, %c0_81] : memref<64x128xf32, #tpu.memory_space<vmem>>, vector<8x128xf32>
    %135 = tpu.concatenate %132, %134 in 0 : vector<8x128xf32>, vector<8x128xf32> -> vector<16x128xf32>
    %c0_82 = arith.constant 0 : index
    %c0_83 = arith.constant 0 : index
    %136 = vector.load %arg4[%c0_82, %c0_83] : memref<128x128xf32, #tpu.memory_space<vmem>>, vector<128x128xf32>
    %cst_84 = arith.constant dense<0.000000e+00> : vector<16x128xf32>
    %137 = tpu.matmul %119, %136, %cst_84 {dimension_numbers = #tpu.dot_dimension_numbers<[1], [0], [0], [1], [0, 0, 1, 1], [], []>} : vector<16x128xf32>, vector<128x128xf32>, vector<16x128xf32> -> vector<16x128xf32>
    %138 = arith.addf %135, %137 : vector<16x128xf32>
    %139 = math.tanh %138 : vector<16x128xf32>
    %140 = vector.extract_strided_slice %139 {offsets = [0, 0], sizes = [8, 128], strides = [1, 1]} : vector<16x128xf32> to vector<8x128xf32>
    %141 = arith.index_cast %127 : i32 to index
    %c0_85 = arith.constant 0 : index
    %142 = vector.load %arg12[%141, %c0_85] : memref<64x256xf32, #tpu.memory_space<vmem>>, vector<8x128xf32>
    tpu.vector_store %arg12[%141, %c0_85], %140 {strides = array<i32>} : memref<64x256xf32, #tpu.memory_space<vmem>>, vector<8x128xf32>,
    %143 = vector.extract_strided_slice %139 {offsets = [8, 0], sizes = [8, 128], strides = [1, 1]} : vector<16x128xf32> to vector<8x128xf32>
    %144 = arith.index_cast %130 : i32 to index
    %c128_86 = arith.constant 128 : index
    %145 = vector.load %arg12[%144, %c128_86] : memref<64x256xf32, #tpu.memory_space<vmem>>, vector<8x128xf32>
    tpu.vector_store %arg12[%144, %c128_86], %143 {strides = array<i32>} : memref<64x256xf32, #tpu.memory_space<vmem>>, vector<8x128xf32>,
    %c6_i32 = arith.constant 6 : i32
    %c8_i32_87 = arith.constant 8 : i32
    %146 = arith.muli %c6_i32, %c8_i32_87 : i32
    %147 = tpu.assume_multiple %146, 8 : i32
    %c7_i32_88 = arith.constant 7 : i32
    %148 = arith.subi %c7_i32_88, %c6_i32 : i32
    %c8_i32_89 = arith.constant 8 : i32
    %149 = arith.muli %148, %c8_i32_89 : i32
    %150 = tpu.assume_multiple %149, 8 : i32
    %151 = arith.index_cast %147 : i32 to index
    %c0_90 = arith.constant 0 : index
    %152 = vector.load %arg10[%151, %c0_90] : memref<64x128xf32, #tpu.memory_space<vmem>>, vector<8x128xf32>
    %153 = arith.index_cast %150 : i32 to index
    %c0_91 = arith.constant 0 : index
    %154 = vector.load %arg10[%153, %c0_91] : memref<64x128xf32, #tpu.memory_space<vmem>>, vector<8x128xf32>
    %155 = tpu.concatenate %152, %154 in 0 : vector<8x128xf32>, vector<8x128xf32> -> vector<16x128xf32>
    %c0_92 = arith.constant 0 : index
    %c0_93 = arith.constant 0 : index
    %156 = vector.load %arg4[%c0_92, %c0_93] : memref<128x128xf32, #tpu.memory_space<vmem>>, vector<128x128xf32>
    %cst_94 = arith.constant dense<0.000000e+00> : vector<16x128xf32>
    %157 = tpu.matmul %139, %156, %cst_94 {dimension_numbers = #tpu.dot_dimension_numbers<[1], [0], [0], [1], [0, 0, 1, 1], [], []>} : vector<16x128xf32>, vector<128x128xf32>, vector<16x128xf32> -> vector<16x128xf32>
    %158 = arith.addf %155, %157 : vector<16x128xf32>
    %159 = math.tanh %158 : vector<16x128xf32>
    %160 = vector.extract_strided_slice %159 {offsets = [0, 0], sizes = [8, 128], strides = [1, 1]} : vector<16x128xf32> to vector<8x128xf32>
    %161 = arith.index_cast %147 : i32 to index
    %c0_95 = arith.constant 0 : index
    %162 = vector.load %arg12[%161, %c0_95] : memref<64x256xf32, #tpu.memory_space<vmem>>, vector<8x128xf32>
    tpu.vector_store %arg12[%161, %c0_95], %160 {strides = array<i32>} : memref<64x256xf32, #tpu.memory_space<vmem>>, vector<8x128xf32>,
    %163 = vector.extract_strided_slice %159 {offsets = [8, 0], sizes = [8, 128], strides = [1, 1]} : vector<16x128xf32> to vector<8x128xf32>
    %164 = arith.index_cast %150 : i32 to index
    %c128_96 = arith.constant 128 : index
    %165 = vector.load %arg12[%164, %c128_96] : memref<64x256xf32, #tpu.memory_space<vmem>>, vector<8x128xf32>
    tpu.vector_store %arg12[%164, %c128_96], %163 {strides = array<i32>} : memref<64x256xf32, #tpu.memory_space<vmem>>, vector<8x128xf32>,
    %c7_i32_97 = arith.constant 7 : i32
    %c8_i32_98 = arith.constant 8 : i32
    %166 = arith.muli %c7_i32_97, %c8_i32_98 : i32
    %167 = tpu.assume_multiple %166, 8 : i32
    %c7_i32_99 = arith.constant 7 : i32
    %168 = arith.subi %c7_i32_99, %c7_i32_97 : i32
    %c8_i32_100 = arith.constant 8 : i32
    %169 = arith.muli %168, %c8_i32_100 : i32
    %170 = tpu.assume_multiple %169, 8 : i32
    %171 = arith.index_cast %167 : i32 to index
    %c0_101 = arith.constant 0 : index
    %172 = vector.load %arg10[%171, %c0_101] : memref<64x128xf32, #tpu.memory_space<vmem>>, vector<8x128xf32>
    %173 = arith.index_cast %170 : i32 to index
    %c0_102 = arith.constant 0 : index
    %174 = vector.load %arg10[%173, %c0_102] : memref<64x128xf32, #tpu.memory_space<vmem>>, vector<8x128xf32>
    %175 = tpu.concatenate %172, %174 in 0 : vector<8x128xf32>, vector<8x128xf32> -> vector<16x128xf32>
    %c0_103 = arith.constant 0 : index
    %c0_104 = arith.constant 0 : index
    %176 = vector.load %arg4[%c0_103, %c0_104] : memref<128x128xf32, #tpu.memory_space<vmem>>, vector<128x128xf32>
    %cst_105 = arith.constant dense<0.000000e+00> : vector<16x128xf32>
    %177 = tpu.matmul %159, %176, %cst_105 {dimension_numbers = #tpu.dot_dimension_numbers<[1], [0], [0], [1], [0, 0, 1, 1], [], []>} : vector<16x128xf32>, vector<128x128xf32>, vector<16x128xf32> -> vector<16x128xf32>
    %178 = arith.addf %175, %177 : vector<16x128xf32>
    %179 = math.tanh %178 : vector<16x128xf32>
    %180 = vector.extract_strided_slice %179 {offsets = [0, 0], sizes = [8, 128], strides = [1, 1]} : vector<16x128xf32> to vector<8x128xf32>
    %181 = arith.index_cast %167 : i32 to index
    %c0_106 = arith.constant 0 : index
    %182 = vector.load %arg12[%181, %c0_106] : memref<64x256xf32, #tpu.memory_space<vmem>>, vector<8x128xf32>
    tpu.vector_store %arg12[%181, %c0_106], %180 {strides = array<i32>} : memref<64x256xf32, #tpu.memory_space<vmem>>, vector<8x128xf32>,
    %183 = vector.extract_strided_slice %179 {offsets = [8, 0], sizes = [8, 128], strides = [1, 1]} : vector<16x128xf32> to vector<8x128xf32>
    %184 = arith.index_cast %170 : i32 to index
    %c128_107 = arith.constant 128 : index
    %185 = vector.load %arg12[%184, %c128_107] : memref<64x256xf32, #tpu.memory_space<vmem>>, vector<8x128xf32>
    tpu.vector_store %arg12[%184, %c128_107], %183 {strides = array<i32>} : memref<64x256xf32, #tpu.memory_space<vmem>>, vector<8x128xf32>,
    %c8_i32_108 = arith.constant 8 : i32
    %c0_109 = arith.constant 0 : index
    %c0_110 = arith.constant 0 : index
    %186 = vector.load %arg12[%c0_109, %c0_110] : memref<64x256xf32, #tpu.memory_space<vmem>>, vector<64x128xf32>
    %c0_111 = arith.constant 0 : index
    %c128_112 = arith.constant 128 : index
    %187 = vector.load %arg12[%c0_111, %c128_112] : memref<64x256xf32, #tpu.memory_space<vmem>>, vector<64x128xf32>
    %c32_i32 = arith.constant 32 : i32
    %188 = tpu.dynamic_rotate %187 by %c32_i32 dim 1 : vector<64x128xf32>, i32 -> vector<64x128xf32>
    %189 = tpu.iota {dimensions = array<i32: 1>} : vector<64x128xi32>
    %c32_i32_113 = arith.constant 32 : i32
    %190 = vector.broadcast %c32_i32_113 : i32 to vector<64x128xi32>
    %191 = arith.cmpi slt, %189, %190 : vector<64x128xi32>
    %c64_i32 = arith.constant 64 : i32
    %192 = vector.broadcast %c64_i32 : i32 to vector<64x128xi32>
    %193 = arith.cmpi slt, %189, %192 : vector<64x128xi32>
    %cst_114 = arith.constant 0.000000e+00 : f32
    %194 = vector.broadcast %cst_114 : f32 to vector<64x128xf32>
    %195 = arith.select %193, %188, %194 : vector<64x128xi1>, vector<64x128xf32>
    %196 = arith.select %191, %186, %195 : vector<64x128xi1>, vector<64x128xf32>
    %c0_115 = arith.constant 0 : index
    %c0_116 = arith.constant 0 : index
    %197 = vector.load %arg14[%c0_115, %c0_116] : memref<64x128xf32, #tpu.memory_space<vmem>>, vector<64x128xf32>
    tpu.vector_store %arg14[%c0_115, %c0_116], %196 {strides = array<i32>} : memref<64x128xf32, #tpu.memory_space<vmem>>, vector<64x128xf32>,
    %c0_117 = arith.constant 0 : index
    %c0_118 = arith.constant 0 : index
    %198 = vector.load %arg14[%c0_117, %c0_118] : memref<64x128xf32, #tpu.memory_space<vmem>>, vector<64x128xf32>
    %c0_119 = arith.constant 0 : index
    %c0_120 = arith.constant 0 : index
    %199 = vector.load %arg5[%c0_119, %c0_120] : memref<128x128xf32, #tpu.memory_space<vmem>>, vector<128x128xf32>
    %cst_121 = arith.constant dense<0.000000e+00> : vector<64x128xf32>
    %200 = tpu.matmul %198, %199, %cst_121 {dimension_numbers = #tpu.dot_dimension_numbers<[1], [0], [0], [1], [0, 0, 1, 1], [], []>} : vector<64x128xf32>, vector<128x128xf32>, vector<64x128xf32> -> vector<64x128xf32>
    %c0_122 = arith.constant 0 : index
    %c0_123 = arith.constant 0 : index
    %201 = vector.load %arg6[%c0_122, %c0_123] : memref<1x128xf32, #tpu.memory_space<vmem>>, vector<1x128xf32>
    %202 = vector.broadcast %201 : vector<1x128xf32> to vector<64x128xf32>
    %203 = arith.addf %200, %202 : vector<64x128xf32>
    %c0_124 = arith.constant 0 : index
    %c0_125 = arith.constant 0 : index
    %204 = vector.load %arg11[%c0_124, %c0_125] : memref<64x128xf32, #tpu.memory_space<vmem>>, vector<64x128xf32>
    tpu.vector_store %arg11[%c0_124, %c0_125], %203 {strides = array<i32>} : memref<64x128xf32, #tpu.memory_space<vmem>>, vector<64x128xf32>,
    %cst_126 = arith.constant 0.000000e+00 : f32
    %205 = vector.broadcast %cst_126 : f32 to vector<16x128xf32>
    %c0_i32_127 = arith.constant 0 : i32
    %c8_i32_128 = arith.constant 8 : i32
    %206 = arith.muli %c0_i32_127, %c8_i32_128 : i32
    %207 = tpu.assume_multiple %206, 8 : i32
    %c7_i32_129 = arith.constant 7 : i32
    %208 = arith.subi %c7_i32_129, %c0_i32_127 : i32
    %c8_i32_130 = arith.constant 8 : i32
    %209 = arith.muli %208, %c8_i32_130 : i32
    %210 = tpu.assume_multiple %209, 8 : i32
    %211 = arith.index_cast %207 : i32 to index
    %c0_131 = arith.constant 0 : index
    %212 = vector.load %arg11[%211, %c0_131] : memref<64x128xf32, #tpu.memory_space<vmem>>, vector<8x128xf32>
    %213 = arith.index_cast %210 : i32 to index
    %c0_132 = arith.constant 0 : index
    %214 = vector.load %arg11[%213, %c0_132] : memref<64x128xf32, #tpu.memory_space<vmem>>, vector<8x128xf32>
    %215 = tpu.concatenate %212, %214 in 0 : vector<8x128xf32>, vector<8x128xf32> -> vector<16x128xf32>
    %c0_133 = arith.constant 0 : index
    %c0_134 = arith.constant 0 : index
    %216 = vector.load %arg7[%c0_133, %c0_134] : memref<128x128xf32, #tpu.memory_space<vmem>>, vector<128x128xf32>
    %cst_135 = arith.constant dense<0.000000e+00> : vector<16x128xf32>
    %217 = tpu.matmul %205, %216, %cst_135 {dimension_numbers = #tpu.dot_dimension_numbers<[1], [0], [0], [1], [0, 0, 1, 1], [], []>} : vector<16x128xf32>, vector<128x128xf32>, vector<16x128xf32> -> vector<16x128xf32>
    %218 = arith.addf %215, %217 : vector<16x128xf32>
    %219 = math.tanh %218 : vector<16x128xf32>
    %220 = vector.extract_strided_slice %219 {offsets = [0, 0], sizes = [8, 128], strides = [1, 1]} : vector<16x128xf32> to vector<8x128xf32>
    %221 = arith.index_cast %207 : i32 to index
    %c0_136 = arith.constant 0 : index
    %222 = vector.load %arg13[%221, %c0_136] : memref<64x256xf32, #tpu.memory_space<vmem>>, vector<8x128xf32>
    tpu.vector_store %arg13[%221, %c0_136], %220 {strides = array<i32>} : memref<64x256xf32, #tpu.memory_space<vmem>>, vector<8x128xf32>,
    %223 = vector.extract_strided_slice %219 {offsets = [8, 0], sizes = [8, 128], strides = [1, 1]} : vector<16x128xf32> to vector<8x128xf32>
    %224 = arith.index_cast %210 : i32 to index
    %c128_137 = arith.constant 128 : index
    %225 = vector.load %arg13[%224, %c128_137] : memref<64x256xf32, #tpu.memory_space<vmem>>, vector<8x128xf32>
    tpu.vector_store %arg13[%224, %c128_137], %223 {strides = array<i32>} : memref<64x256xf32, #tpu.memory_space<vmem>>, vector<8x128xf32>,
    %c1_i32_138 = arith.constant 1 : i32
    %c8_i32_139 = arith.constant 8 : i32
    %226 = arith.muli %c1_i32_138, %c8_i32_139 : i32
    %227 = tpu.assume_multiple %226, 8 : i32
    %c7_i32_140 = arith.constant 7 : i32
    %228 = arith.subi %c7_i32_140, %c1_i32_138 : i32
    %c8_i32_141 = arith.constant 8 : i32
    %229 = arith.muli %228, %c8_i32_141 : i32
    %230 = tpu.assume_multiple %229, 8 : i32
    %231 = arith.index_cast %227 : i32 to index
    %c0_142 = arith.constant 0 : index
    %232 = vector.load %arg11[%231, %c0_142] : memref<64x128xf32, #tpu.memory_space<vmem>>, vector<8x128xf32>
    %233 = arith.index_cast %230 : i32 to index
    %c0_143 = arith.constant 0 : index
    %234 = vector.load %arg11[%233, %c0_143] : memref<64x128xf32, #tpu.memory_space<vmem>>, vector<8x128xf32>
    %235 = tpu.concatenate %232, %234 in 0 : vector<8x128xf32>, vector<8x128xf32> -> vector<16x128xf32>
    %c0_144 = arith.constant 0 : index
    %c0_145 = arith.constant 0 : index
    %236 = vector.load %arg7[%c0_144, %c0_145] : memref<128x128xf32, #tpu.memory_space<vmem>>, vector<128x128xf32>
    %cst_146 = arith.constant dense<0.000000e+00> : vector<16x128xf32>
    %237 = tpu.matmul %219, %236, %cst_146 {dimension_numbers = #tpu.dot_dimension_numbers<[1], [0], [0], [1], [0, 0, 1, 1], [], []>} : vector<16x128xf32>, vector<128x128xf32>, vector<16x128xf32> -> vector<16x128xf32>
    %238 = arith.addf %235, %237 : vector<16x128xf32>
    %239 = math.tanh %238 : vector<16x128xf32>
    %240 = vector.extract_strided_slice %239 {offsets = [0, 0], sizes = [8, 128], strides = [1, 1]} : vector<16x128xf32> to vector<8x128xf32>
    %241 = arith.index_cast %227 : i32 to index
    %c0_147 = arith.constant 0 : index
    %242 = vector.load %arg13[%241, %c0_147] : memref<64x256xf32, #tpu.memory_space<vmem>>, vector<8x128xf32>
    tpu.vector_store %arg13[%241, %c0_147], %240 {strides = array<i32>} : memref<64x256xf32, #tpu.memory_space<vmem>>, vector<8x128xf32>,
    %243 = vector.extract_strided_slice %239 {offsets = [8, 0], sizes = [8, 128], strides = [1, 1]} : vector<16x128xf32> to vector<8x128xf32>
    %244 = arith.index_cast %230 : i32 to index
    %c128_148 = arith.constant 128 : index
    %245 = vector.load %arg13[%244, %c128_148] : memref<64x256xf32, #tpu.memory_space<vmem>>, vector<8x128xf32>
    tpu.vector_store %arg13[%244, %c128_148], %243 {strides = array<i32>} : memref<64x256xf32, #tpu.memory_space<vmem>>, vector<8x128xf32>,
    %c2_i32_149 = arith.constant 2 : i32
    %c8_i32_150 = arith.constant 8 : i32
    %246 = arith.muli %c2_i32_149, %c8_i32_150 : i32
    %247 = tpu.assume_multiple %246, 8 : i32
    %c7_i32_151 = arith.constant 7 : i32
    %248 = arith.subi %c7_i32_151, %c2_i32_149 : i32
    %c8_i32_152 = arith.constant 8 : i32
    %249 = arith.muli %248, %c8_i32_152 : i32
    %250 = tpu.assume_multiple %249, 8 : i32
    %251 = arith.index_cast %247 : i32 to index
    %c0_153 = arith.constant 0 : index
    %252 = vector.load %arg11[%251, %c0_153] : memref<64x128xf32, #tpu.memory_space<vmem>>, vector<8x128xf32>
    %253 = arith.index_cast %250 : i32 to index
    %c0_154 = arith.constant 0 : index
    %254 = vector.load %arg11[%253, %c0_154] : memref<64x128xf32, #tpu.memory_space<vmem>>, vector<8x128xf32>
    %255 = tpu.concatenate %252, %254 in 0 : vector<8x128xf32>, vector<8x128xf32> -> vector<16x128xf32>
    %c0_155 = arith.constant 0 : index
    %c0_156 = arith.constant 0 : index
    %256 = vector.load %arg7[%c0_155, %c0_156] : memref<128x128xf32, #tpu.memory_space<vmem>>, vector<128x128xf32>
    %cst_157 = arith.constant dense<0.000000e+00> : vector<16x128xf32>
    %257 = tpu.matmul %239, %256, %cst_157 {dimension_numbers = #tpu.dot_dimension_numbers<[1], [0], [0], [1], [0, 0, 1, 1], [], []>} : vector<16x128xf32>, vector<128x128xf32>, vector<16x128xf32> -> vector<16x128xf32>
    %258 = arith.addf %255, %257 : vector<16x128xf32>
    %259 = math.tanh %258 : vector<16x128xf32>
    %260 = vector.extract_strided_slice %259 {offsets = [0, 0], sizes = [8, 128], strides = [1, 1]} : vector<16x128xf32> to vector<8x128xf32>
    %261 = arith.index_cast %247 : i32 to index
    %c0_158 = arith.constant 0 : index
    %262 = vector.load %arg13[%261, %c0_158] : memref<64x256xf32, #tpu.memory_space<vmem>>, vector<8x128xf32>
    tpu.vector_store %arg13[%261, %c0_158], %260 {strides = array<i32>} : memref<64x256xf32, #tpu.memory_space<vmem>>, vector<8x128xf32>,
    %263 = vector.extract_strided_slice %259 {offsets = [8, 0], sizes = [8, 128], strides = [1, 1]} : vector<16x128xf32> to vector<8x128xf32>
    %264 = arith.index_cast %250 : i32 to index
    %c128_159 = arith.constant 128 : index
    %265 = vector.load %arg13[%264, %c128_159] : memref<64x256xf32, #tpu.memory_space<vmem>>, vector<8x128xf32>
    tpu.vector_store %arg13[%264, %c128_159], %263 {strides = array<i32>} : memref<64x256xf32, #tpu.memory_space<vmem>>, vector<8x128xf32>,
    %c3_i32_160 = arith.constant 3 : i32
    %c8_i32_161 = arith.constant 8 : i32
    %266 = arith.muli %c3_i32_160, %c8_i32_161 : i32
    %267 = tpu.assume_multiple %266, 8 : i32
    %c7_i32_162 = arith.constant 7 : i32
    %268 = arith.subi %c7_i32_162, %c3_i32_160 : i32
    %c8_i32_163 = arith.constant 8 : i32
    %269 = arith.muli %268, %c8_i32_163 : i32
    %270 = tpu.assume_multiple %269, 8 : i32
    %271 = arith.index_cast %267 : i32 to index
    %c0_164 = arith.constant 0 : index
    %272 = vector.load %arg11[%271, %c0_164] : memref<64x128xf32, #tpu.memory_space<vmem>>, vector<8x128xf32>
    %273 = arith.index_cast %270 : i32 to index
    %c0_165 = arith.constant 0 : index
    %274 = vector.load %arg11[%273, %c0_165] : memref<64x128xf32, #tpu.memory_space<vmem>>, vector<8x128xf32>
    %275 = tpu.concatenate %272, %274 in 0 : vector<8x128xf32>, vector<8x128xf32> -> vector<16x128xf32>
    %c0_166 = arith.constant 0 : index
    %c0_167 = arith.constant 0 : index
    %276 = vector.load %arg7[%c0_166, %c0_167] : memref<128x128xf32, #tpu.memory_space<vmem>>, vector<128x128xf32>
    %cst_168 = arith.constant dense<0.000000e+00> : vector<16x128xf32>
    %277 = tpu.matmul %259, %276, %cst_168 {dimension_numbers = #tpu.dot_dimension_numbers<[1], [0], [0], [1], [0, 0, 1, 1], [], []>} : vector<16x128xf32>, vector<128x128xf32>, vector<16x128xf32> -> vector<16x128xf32>
    %278 = arith.addf %275, %277 : vector<16x128xf32>
    %279 = math.tanh %278 : vector<16x128xf32>
    %280 = vector.extract_strided_slice %279 {offsets = [0, 0], sizes = [8, 128], strides = [1, 1]} : vector<16x128xf32> to vector<8x128xf32>
    %281 = arith.index_cast %267 : i32 to index
    %c0_169 = arith.constant 0 : index
    %282 = vector.load %arg13[%281, %c0_169] : memref<64x256xf32, #tpu.memory_space<vmem>>, vector<8x128xf32>
    tpu.vector_store %arg13[%281, %c0_169], %280 {strides = array<i32>} : memref<64x256xf32, #tpu.memory_space<vmem>>, vector<8x128xf32>,
    %283 = vector.extract_strided_slice %279 {offsets = [8, 0], sizes = [8, 128], strides = [1, 1]} : vector<16x128xf32> to vector<8x128xf32>
    %284 = arith.index_cast %270 : i32 to index
    %c128_170 = arith.constant 128 : index
    %285 = vector.load %arg13[%284, %c128_170] : memref<64x256xf32, #tpu.memory_space<vmem>>, vector<8x128xf32>
    tpu.vector_store %arg13[%284, %c128_170], %283 {strides = array<i32>} : memref<64x256xf32, #tpu.memory_space<vmem>>, vector<8x128xf32>,
    %c4_i32_171 = arith.constant 4 : i32
    %c8_i32_172 = arith.constant 8 : i32
    %286 = arith.muli %c4_i32_171, %c8_i32_172 : i32
    %287 = tpu.assume_multiple %286, 8 : i32
    %c7_i32_173 = arith.constant 7 : i32
    %288 = arith.subi %c7_i32_173, %c4_i32_171 : i32
    %c8_i32_174 = arith.constant 8 : i32
    %289 = arith.muli %288, %c8_i32_174 : i32
    %290 = tpu.assume_multiple %289, 8 : i32
    %291 = arith.index_cast %287 : i32 to index
    %c0_175 = arith.constant 0 : index
    %292 = vector.load %arg11[%291, %c0_175] : memref<64x128xf32, #tpu.memory_space<vmem>>, vector<8x128xf32>
    %293 = arith.index_cast %290 : i32 to index
    %c0_176 = arith.constant 0 : index
    %294 = vector.load %arg11[%293, %c0_176] : memref<64x128xf32, #tpu.memory_space<vmem>>, vector<8x128xf32>
    %295 = tpu.concatenate %292, %294 in 0 : vector<8x128xf32>, vector<8x128xf32> -> vector<16x128xf32>
    %c0_177 = arith.constant 0 : index
    %c0_178 = arith.constant 0 : index
    %296 = vector.load %arg7[%c0_177, %c0_178] : memref<128x128xf32, #tpu.memory_space<vmem>>, vector<128x128xf32>
    %cst_179 = arith.constant dense<0.000000e+00> : vector<16x128xf32>
    %297 = tpu.matmul %279, %296, %cst_179 {dimension_numbers = #tpu.dot_dimension_numbers<[1], [0], [0], [1], [0, 0, 1, 1], [], []>} : vector<16x128xf32>, vector<128x128xf32>, vector<16x128xf32> -> vector<16x128xf32>
    %298 = arith.addf %295, %297 : vector<16x128xf32>
    %299 = math.tanh %298 : vector<16x128xf32>
    %300 = vector.extract_strided_slice %299 {offsets = [0, 0], sizes = [8, 128], strides = [1, 1]} : vector<16x128xf32> to vector<8x128xf32>
    %301 = arith.index_cast %287 : i32 to index
    %c0_180 = arith.constant 0 : index
    %302 = vector.load %arg13[%301, %c0_180] : memref<64x256xf32, #tpu.memory_space<vmem>>, vector<8x128xf32>
    tpu.vector_store %arg13[%301, %c0_180], %300 {strides = array<i32>} : memref<64x256xf32, #tpu.memory_space<vmem>>, vector<8x128xf32>,
    %303 = vector.extract_strided_slice %299 {offsets = [8, 0], sizes = [8, 128], strides = [1, 1]} : vector<16x128xf32> to vector<8x128xf32>
    %304 = arith.index_cast %290 : i32 to index
    %c128_181 = arith.constant 128 : index
    %305 = vector.load %arg13[%304, %c128_181] : memref<64x256xf32, #tpu.memory_space<vmem>>, vector<8x128xf32>
    tpu.vector_store %arg13[%304, %c128_181], %303 {strides = array<i32>} : memref<64x256xf32, #tpu.memory_space<vmem>>, vector<8x128xf32>,
    %c5_i32_182 = arith.constant 5 : i32
    %c8_i32_183 = arith.constant 8 : i32
    %306 = arith.muli %c5_i32_182, %c8_i32_183 : i32
    %307 = tpu.assume_multiple %306, 8 : i32
    %c7_i32_184 = arith.constant 7 : i32
    %308 = arith.subi %c7_i32_184, %c5_i32_182 : i32
    %c8_i32_185 = arith.constant 8 : i32
    %309 = arith.muli %308, %c8_i32_185 : i32
    %310 = tpu.assume_multiple %309, 8 : i32
    %311 = arith.index_cast %307 : i32 to index
    %c0_186 = arith.constant 0 : index
    %312 = vector.load %arg11[%311, %c0_186] : memref<64x128xf32, #tpu.memory_space<vmem>>, vector<8x128xf32>
    %313 = arith.index_cast %310 : i32 to index
    %c0_187 = arith.constant 0 : index
    %314 = vector.load %arg11[%313, %c0_187] : memref<64x128xf32, #tpu.memory_space<vmem>>, vector<8x128xf32>
    %315 = tpu.concatenate %312, %314 in 0 : vector<8x128xf32>, vector<8x128xf32> -> vector<16x128xf32>
    %c0_188 = arith.constant 0 : index
    %c0_189 = arith.constant 0 : index
    %316 = vector.load %arg7[%c0_188, %c0_189] : memref<128x128xf32, #tpu.memory_space<vmem>>, vector<128x128xf32>
    %cst_190 = arith.constant dense<0.000000e+00> : vector<16x128xf32>
    %317 = tpu.matmul %299, %316, %cst_190 {dimension_numbers = #tpu.dot_dimension_numbers<[1], [0], [0], [1], [0, 0, 1, 1], [], []>} : vector<16x128xf32>, vector<128x128xf32>, vector<16x128xf32> -> vector<16x128xf32>
    %318 = arith.addf %315, %317 : vector<16x128xf32>
    %319 = math.tanh %318 : vector<16x128xf32>
    %320 = vector.extract_strided_slice %319 {offsets = [0, 0], sizes = [8, 128], strides = [1, 1]} : vector<16x128xf32> to vector<8x128xf32>
    %321 = arith.index_cast %307 : i32 to index
    %c0_191 = arith.constant 0 : index
    %322 = vector.load %arg13[%321, %c0_191] : memref<64x256xf32, #tpu.memory_space<vmem>>, vector<8x128xf32>
    tpu.vector_store %arg13[%321, %c0_191], %320 {strides = array<i32>} : memref<64x256xf32, #tpu.memory_space<vmem>>, vector<8x128xf32>,
    %323 = vector.extract_strided_slice %319 {offsets = [8, 0], sizes = [8, 128], strides = [1, 1]} : vector<16x128xf32> to vector<8x128xf32>
    %324 = arith.index_cast %310 : i32 to index
    %c128_192 = arith.constant 128 : index
    %325 = vector.load %arg13[%324, %c128_192] : memref<64x256xf32, #tpu.memory_space<vmem>>, vector<8x128xf32>
    tpu.vector_store %arg13[%324, %c128_192], %323 {strides = array<i32>} : memref<64x256xf32, #tpu.memory_space<vmem>>, vector<8x128xf32>,
    %c6_i32_193 = arith.constant 6 : i32
    %c8_i32_194 = arith.constant 8 : i32
    %326 = arith.muli %c6_i32_193, %c8_i32_194 : i32
    %327 = tpu.assume_multiple %326, 8 : i32
    %c7_i32_195 = arith.constant 7 : i32
    %328 = arith.subi %c7_i32_195, %c6_i32_193 : i32
    %c8_i32_196 = arith.constant 8 : i32
    %329 = arith.muli %328, %c8_i32_196 : i32
    %330 = tpu.assume_multiple %329, 8 : i32
    %331 = arith.index_cast %327 : i32 to index
    %c0_197 = arith.constant 0 : index
    %332 = vector.load %arg11[%331, %c0_197] : memref<64x128xf32, #tpu.memory_space<vmem>>, vector<8x128xf32>
    %333 = arith.index_cast %330 : i32 to index
    %c0_198 = arith.constant 0 : index
    %334 = vector.load %arg11[%333, %c0_198] : memref<64x128xf32, #tpu.memory_space<vmem>>, vector<8x128xf32>
    %335 = tpu.concatenate %332, %334 in 0 : vector<8x128xf32>, vector<8x128xf32> -> vector<16x128xf32>
    %c0_199 = arith.constant 0 : index
    %c0_200 = arith.constant 0 : index
    %336 = vector.load %arg7[%c0_199, %c0_200] : memref<128x128xf32, #tpu.memory_space<vmem>>, vector<128x128xf32>
    %cst_201 = arith.constant dense<0.000000e+00> : vector<16x128xf32>
    %337 = tpu.matmul %319, %336, %cst_201 {dimension_numbers = #tpu.dot_dimension_numbers<[1], [0], [0], [1], [0, 0, 1, 1], [], []>} : vector<16x128xf32>, vector<128x128xf32>, vector<16x128xf32> -> vector<16x128xf32>
    %338 = arith.addf %335, %337 : vector<16x128xf32>
    %339 = math.tanh %338 : vector<16x128xf32>
    %340 = vector.extract_strided_slice %339 {offsets = [0, 0], sizes = [8, 128], strides = [1, 1]} : vector<16x128xf32> to vector<8x128xf32>
    %341 = arith.index_cast %327 : i32 to index
    %c0_202 = arith.constant 0 : index
    %342 = vector.load %arg13[%341, %c0_202] : memref<64x256xf32, #tpu.memory_space<vmem>>, vector<8x128xf32>
    tpu.vector_store %arg13[%341, %c0_202], %340 {strides = array<i32>} : memref<64x256xf32, #tpu.memory_space<vmem>>, vector<8x128xf32>,
    %343 = vector.extract_strided_slice %339 {offsets = [8, 0], sizes = [8, 128], strides = [1, 1]} : vector<16x128xf32> to vector<8x128xf32>
    %344 = arith.index_cast %330 : i32 to index
    %c128_203 = arith.constant 128 : index
    %345 = vector.load %arg13[%344, %c128_203] : memref<64x256xf32, #tpu.memory_space<vmem>>, vector<8x128xf32>
    tpu.vector_store %arg13[%344, %c128_203], %343 {strides = array<i32>} : memref<64x256xf32, #tpu.memory_space<vmem>>, vector<8x128xf32>,
    %c7_i32_204 = arith.constant 7 : i32
    %c8_i32_205 = arith.constant 8 : i32
    %346 = arith.muli %c7_i32_204, %c8_i32_205 : i32
    %347 = tpu.assume_multiple %346, 8 : i32
    %c7_i32_206 = arith.constant 7 : i32
    %348 = arith.subi %c7_i32_206, %c7_i32_204 : i32
    %c8_i32_207 = arith.constant 8 : i32
    %349 = arith.muli %348, %c8_i32_207 : i32
    %350 = tpu.assume_multiple %349, 8 : i32
    %351 = arith.index_cast %347 : i32 to index
    %c0_208 = arith.constant 0 : index
    %352 = vector.load %arg11[%351, %c0_208] : memref<64x128xf32, #tpu.memory_space<vmem>>, vector<8x128xf32>
    %353 = arith.index_cast %350 : i32 to index
    %c0_209 = arith.constant 0 : index
    %354 = vector.load %arg11[%353, %c0_209] : memref<64x128xf32, #tpu.memory_space<vmem>>, vector<8x128xf32>
    %355 = tpu.concatenate %352, %354 in 0 : vector<8x128xf32>, vector<8x128xf32> -> vector<16x128xf32>
    %c0_210 = arith.constant 0 : index
    %c0_211 = arith.constant 0 : index
    %356 = vector.load %arg7[%c0_210, %c0_211] : memref<128x128xf32, #tpu.memory_space<vmem>>, vector<128x128xf32>
    %cst_212 = arith.constant dense<0.000000e+00> : vector<16x128xf32>
    %357 = tpu.matmul %339, %356, %cst_212 {dimension_numbers = #tpu.dot_dimension_numbers<[1], [0], [0], [1], [0, 0, 1, 1], [], []>} : vector<16x128xf32>, vector<128x128xf32>, vector<16x128xf32> -> vector<16x128xf32>
    %358 = arith.addf %355, %357 : vector<16x128xf32>
    %359 = math.tanh %358 : vector<16x128xf32>
    %360 = vector.extract_strided_slice %359 {offsets = [0, 0], sizes = [8, 128], strides = [1, 1]} : vector<16x128xf32> to vector<8x128xf32>
    %361 = arith.index_cast %347 : i32 to index
    %c0_213 = arith.constant 0 : index
    %362 = vector.load %arg13[%361, %c0_213] : memref<64x256xf32, #tpu.memory_space<vmem>>, vector<8x128xf32>
    tpu.vector_store %arg13[%361, %c0_213], %360 {strides = array<i32>} : memref<64x256xf32, #tpu.memory_space<vmem>>, vector<8x128xf32>,
    %363 = vector.extract_strided_slice %359 {offsets = [8, 0], sizes = [8, 128], strides = [1, 1]} : vector<16x128xf32> to vector<8x128xf32>
    %364 = arith.index_cast %350 : i32 to index
    %c128_214 = arith.constant 128 : index
    %365 = vector.load %arg13[%364, %c128_214] : memref<64x256xf32, #tpu.memory_space<vmem>>, vector<8x128xf32>
    tpu.vector_store %arg13[%364, %c128_214], %363 {strides = array<i32>} : memref<64x256xf32, #tpu.memory_space<vmem>>, vector<8x128xf32>,
    %c8_i32_215 = arith.constant 8 : i32
    %c0_216 = arith.constant 0 : index
    %c0_217 = arith.constant 0 : index
    %366 = vector.load %arg13[%c0_216, %c0_217] : memref<64x256xf32, #tpu.memory_space<vmem>>, vector<64x128xf32>
    %c0_218 = arith.constant 0 : index
    %c128_219 = arith.constant 128 : index
    %367 = vector.load %arg13[%c0_218, %c128_219] : memref<64x256xf32, #tpu.memory_space<vmem>>, vector<64x128xf32>
    %c32_i32_220 = arith.constant 32 : i32
    %368 = tpu.dynamic_rotate %367 by %c32_i32_220 dim 1 : vector<64x128xf32>, i32 -> vector<64x128xf32>
    %369 = tpu.iota {dimensions = array<i32: 1>} : vector<64x128xi32>
    %c32_i32_221 = arith.constant 32 : i32
    %370 = vector.broadcast %c32_i32_221 : i32 to vector<64x128xi32>
    %371 = arith.cmpi slt, %369, %370 : vector<64x128xi32>
    %c64_i32_222 = arith.constant 64 : i32
    %372 = vector.broadcast %c64_i32_222 : i32 to vector<64x128xi32>
    %373 = arith.cmpi slt, %369, %372 : vector<64x128xi32>
    %cst_223 = arith.constant 0.000000e+00 : f32
    %374 = vector.broadcast %cst_223 : f32 to vector<64x128xf32>
    %375 = arith.select %373, %368, %374 : vector<64x128xi1>, vector<64x128xf32>
    %376 = arith.select %371, %366, %375 : vector<64x128xi1>, vector<64x128xf32>
    %c0_224 = arith.constant 0 : index
    %c0_225 = arith.constant 0 : index
    %377 = vector.load %arg8[%c0_224, %c0_225] : memref<64x128xf32, #tpu.memory_space<vmem>>, vector<64x128xf32>
    tpu.vector_store %arg8[%c0_224, %c0_225], %376 {strides = array<i32>} : memref<64x128xf32, #tpu.memory_space<vmem>>, vector<64x128xf32>,
    return
  }
  func.func @transform_0(%arg0: i32) -> (i32, i32) {
    %c0_i32 = arith.constant 0 : i32
    %c0_i32_0 = arith.constant 0 : i32
    %c0_i32_1 = arith.constant 0 : i32
    return %c0_i32, %c0_i32_0 : i32, i32
  }
  func.func @transform_1(%arg0: i32) -> (i32, i32) {
    %c0_i32 = arith.constant 0 : i32
    %c0_i32_0 = arith.constant 0 : i32
    %c0_i32_1 = arith.constant 0 : i32
    return %c0_i32, %c0_i32_0 : i32, i32
  }
  func.func @transform_2(%arg0: i32) -> (i32, i32) {
    %c0_i32 = arith.constant 0 : i32
    %c0_i32_0 = arith.constant 0 : i32
    %c0_i32_1 = arith.constant 0 : i32
    return %c0_i32, %c0_i32_0 : i32, i32
  }
  func.func @transform_3(%arg0: i32) -> (i32, i32) {
    %c0_i32 = arith.constant 0 : i32
    %c0_i32_0 = arith.constant 0 : i32
    %c0_i32_1 = arith.constant 0 : i32
    return %c0_i32, %c0_i32_0 : i32, i32
  }
  func.func @transform_4(%arg0: i32) -> (i32, i32) {
    %c0_i32 = arith.constant 0 : i32
    %c0_i32_0 = arith.constant 0 : i32
    %c0_i32_1 = arith.constant 0 : i32
    return %c0_i32, %c0_i32_0 : i32, i32
  }
  func.func @transform_5(%arg0: i32) -> (i32, i32) {
    %c0_i32 = arith.constant 0 : i32
    %c0_i32_0 = arith.constant 0 : i32
    %c0_i32_1 = arith.constant 0 : i32
    return %c0_i32, %c0_i32_0 : i32, i32
  }
  func.func @transform_6(%arg0: i32) -> (i32, i32) {
    %c0_i32 = arith.constant 0 : i32
    %c0_i32_0 = arith.constant 0 : i32
    %c0_i32_1 = arith.constant 0 : i32
    return %c0_i32, %c0_i32_0 : i32, i32
  }
  func.func @transform_7(%arg0: i32) -> (i32, i32) {
    %c0_i32 = arith.constant 0 : i32
    %c0_i32_0 = arith.constant 0 : i32
    %c0_i32_1 = arith.constant 0 : i32
    return %c0_i32, %c0_i32_0 : i32, i32
  }
}

</mosaic_0001>

<llo_original>
// kernel: _lambda_.1
$region0: #{_lambda_.1}
  #allocation0 [shape = 'u32[]', space=smem, size = 0x4, offset = 0x4, fixed_abs, tag = 'smem constant byte address 0x4 - core index']
  #allocation1 [shape = 'u32[144,128]{1,0:T(1,128)}', space=vmem, size = 0x12000, scoped, tag = 'internal scratch']
  #allocation2 [shape = 'f32[64,128]{1,0:T(8,128)}', space=vmem, size = 0x8000, scoped, tag = 'scratch operand']
  #allocation3 [shape = 'f32[64,128]{1,0:T(8,128)}', space=vmem, size = 0x8000, scoped, tag = 'scratch operand']
  #allocation4 [shape = 'f32[64,128]{1,0:T(8,128)}', space=vmem, size = 0x8000, scoped, tag = 'scratch operand']
  #allocation5 [shape = 'f32[64,256]{1,0:T(8,128)}', space=vmem, size = 0x10000, scoped, tag = 'scratch operand']
  #allocation6 [shape = 'f32[64,256]{1,0:T(8,128)}', space=vmem, size = 0x10000, scoped, tag = 'scratch operand']
  #allocation7 [shape = 'f32[64,128]{1,0:T(8,128)}', space=vmem, size = 0x8000, scoped, tag = 'scratch operand']
  %s0 = inlined_call_operand.vmem [shape: f32[16,16], index: 0, kind: input, shape index: {}]
  %s1 = inlined_call_operand.vmem [shape: f32[128,128], index: 1, kind: input, shape index: {}]
  %s2 = inlined_call_operand.vmem [shape: f32[1,128], index: 2, kind: input, shape index: {}]
  %s3 = inlined_call_operand.vmem [shape: f32[128,128], index: 3, kind: input, shape index: {}]
  %s4 = inlined_call_operand.vmem [shape: f32[128,128], index: 4, kind: input, shape index: {}]
  %s5 = inlined_call_operand.vmem [shape: f32[1,128], index: 5, kind: input, shape index: {}]
  %s6 = inlined_call_operand.vmem [shape: f32[128,128], index: 6, kind: input, shape index: {}]
  %s7 = inlined_call_operand.vmem [shape: f32[64,128], index: 7, kind: output, shape index: {}]
  %s8 = sld [smem:[#allocation0]]
  $region38: #{_lambda_.1} parent=0
    _
  %s10 = ssub.s32 1, %s8
  %s11 = scalar_select 0, %s10, %s8
  // Predicated region
  $region2: #{_lambda_.1} parent=0 // pred_check
    _
  $region3: #{_lambda_.1} parent=0 // pred_check_branch
    %13 = sbr.rel (0) target = $region5
  $region4: #{_lambda_.1} parent=0 // pred_region
    _
  $region5: #{_lambda_.1} parent=0 // pred_fallthru
    _
  // Predicated region
  $region6: #{_lambda_.1} parent=0 // pred_check
    _
  $region7: #{_lambda_.1} parent=0 // pred_check_branch
    %15 = sbr.rel (0) target = $region9
  $region8: #{_lambda_.1} parent=0 // pred_region
    _
  $region9: #{_lambda_.1} parent=0 // pred_fallthru
    _
  // Predicated region
  $region10: #{_lambda_.1} parent=0 // pred_check
    _
  $region11: #{_lambda_.1} parent=0 // pred_check_branch
    %17 = sbr.rel (0) target = $region13
  $region12: #{_lambda_.1} parent=0 // pred_region
    _
  $region13: #{_lambda_.1} parent=0 // pred_fallthru
    _
  // Predicated region
  $region14: #{_lambda_.1} parent=0 // pred_check
    _
  $region15: #{_lambda_.1} parent=0 // pred_check_branch
    %19 = sbr.rel (0) target = $region17
  $region16: #{_lambda_.1} parent=0 // pred_region
    _
  $region17: #{_lambda_.1} parent=0 // pred_fallthru
    _
  // Predicated region
  $region18: #{_lambda_.1} parent=0 // pred_check
    _
  $region19: #{_lambda_.1} parent=0 // pred_check_branch
    %21 = sbr.rel (0) target = $region21
  $region20: #{_lambda_.1} parent=0 // pred_region
    _
  $region21: #{_lambda_.1} parent=0 // pred_fallthru
    _
  // Predicated region
  $region22: #{_lambda_.1} parent=0 // pred_check
    _
  $region23: #{_lambda_.1} parent=0 // pred_check_branch
    %23 = sbr.rel (0) target = $region25
  $region24: #{_lambda_.1} parent=0 // pred_region
    _
  $region25: #{_lambda_.1} parent=0 // pred_fallthru
    _
  // Predicated region
  $region26: #{_lambda_.1} parent=0 // pred_check
    _
  $region27: #{_lambda_.1} parent=0 // pred_check_branch
    %25 = sbr.rel (0) target = $region29
  $region28: #{_lambda_.1} parent=0 // pred_region
    _
  $region29: #{_lambda_.1} parent=0 // pred_fallthru
    _
  %26 = vst [vmem:[#allocation2] sm:$0xff] 0.0
  %27 = vst [vmem:[#allocation2 + $0x8] sm:$0xff] 0.0
  %28 = vst [vmem:[#allocation2 + $0x10] sm:$0xff] 0.0
  %29 = vst [vmem:[#allocation2 + $0x18] sm:$0xff] 0.0
  %30 = vst [vmem:[#allocation2 + $0x20] sm:$0xff] 0.0
  %31 = vst [vmem:[#allocation2 + $0x28] sm:$0xff] 0.0
  %32 = vst [vmem:[#allocation2 + $0x30] sm:$0xff] 0.0
  %33 = vst [vmem:[#allocation2 + $0x38] sm:$0xff] 0.0
  %v34 = vld [vmem:[%s0] sm:$0x3]
  %vm35 = vcmask 123904
  %36 = vst.msk [vmem:[#allocation2] sm:$0x3] %vm35, %v34
  %v37 = vld [vmem:[%s0 + $0x2] sm:$0x3]
  %38 = vst.msk [vmem:[#allocation2 + $0x8] sm:$0x3] %vm35, %v37
  %v39 = vld [vmem:[%s0 + $0x4] sm:$0x3]
  %40 = vst.msk [vmem:[#allocation2 + $0x10] sm:$0x3] %vm35, %v39
  %v41 = vld [vmem:[%s0 + $0x6] sm:$0x3]
  %42 = vst.msk [vmem:[#allocation2 + $0x18] sm:$0x3] %vm35, %v41
  %v43 = vld [vmem:[%s0 + $0x8] sm:$0x3]
  %44 = vst.msk [vmem:[#allocation2 + $0x20] sm:$0x3] %vm35, %v43
  %v45 = vld [vmem:[%s0 + $0xa] sm:$0x3]
  %46 = vst.msk [vmem:[#allocation2 + $0x28] sm:$0x3] %vm35, %v45
  %v47 = vld [vmem:[%s0 + $0xc] sm:$0x3]
  %48 = vst.msk [vmem:[#allocation2 + $0x30] sm:$0x3] %vm35, %v47
  %v49 = vld [vmem:[%s0 + $0xe] sm:$0x3]
  %50 = vst.msk [vmem:[#allocation2 + $0x38] sm:$0x3] %vm35, %v49
  %v51 = vld [vmem:[#allocation2] sm:$0xff]
  %v52 = vld [vmem:[#allocation2 + $0x8] sm:$0xff]
  %v53 = vld [vmem:[#allocation2 + $0x10] sm:$0xff]
  %v54 = vld [vmem:[#allocation2 + $0x18] sm:$0xff]
  %v55 = vld [vmem:[#allocation2 + $0x20] sm:$0xff]
  %v56 = vld [vmem:[#allocation2 + $0x28] sm:$0xff]
  %v57 = vld [vmem:[#allocation2 + $0x30] sm:$0xff]
  %v58 = vld [vmem:[#allocation2 + $0x38] sm:$0xff]
  %v59 = vld [vmem:[%s1] sm:$0xff]
  %v60 = vld [vmem:[%s1 + $0x8] sm:$0xff]
  %v61 = vld [vmem:[%s1 + $0x10] sm:$0xff]
  %v62 = vld [vmem:[%s1 + $0x18] sm:$0xff]
  %v63 = vld [vmem:[%s1 + $0x20] sm:$0xff]
  %v64 = vld [vmem:[%s1 + $0x28] sm:$0xff]
  %v65 = vld [vmem:[%s1 + $0x30] sm:$0xff]
  %v66 = vld [vmem:[%s1 + $0x38] sm:$0xff]
  %v67 = vld [vmem:[%s1 + $0x40] sm:$0xff]
  %v68 = vld [vmem:[%s1 + $0x48] sm:$0xff]
  %v69 = vld [vmem:[%s1 + $0x50] sm:$0xff]
  %v70 = vld [vmem:[%s1 + $0x58] sm:$0xff]
  %v71 = vld [vmem:[%s1 + $0x60] sm:$0xff]
  %v72 = vld [vmem:[%s1 + $0x68] sm:$0xff]
  %v73 = vld [vmem:[%s1 + $0x70] sm:$0xff]
  %v74 = vld [vmem:[%s1 + $0x78] sm:$0xff]
  %v75 = vld [vmem:[%s2] sm:$0x1]
  %v77 = vlaneseq
  %v78 = vshrl.u32 %v77, 7
  %v79 = vsub.s32 0, %v78
  %v80 = vrot.slane %v75, %v79
  %82 = vmatprep.subr.mxu0 0.0
  %83 = vmatpush1.msra.mxu0 %v74
  %84 = vmatprep.subr.mxu0 0.0
  %85 = vmatpush1.msra.mxu0 %v73
  %86 = vmatprep.subr.mxu0 0.0
  %87 = vmatpush1.msra.mxu0 %v72
  %88 = vmatprep.subr.mxu0 0.0
  %89 = vmatpush1.msra.mxu0 %v71
  %90 = vmatprep.subr.mxu0 0.0
  %91 = vmatpush1.msra.mxu0 %v70
  %92 = vmatprep.subr.mxu0 0.0
  %93 = vmatpush1.msra.mxu0 %v69
  %94 = vmatprep.subr.mxu0 0.0
  %95 = vmatpush1.msra.mxu0 %v68
  %96 = vmatprep.subr.mxu0 0.0
  %97 = vmatpush1.msra.mxu0 %v67
  %98 = vmatprep.subr.mxu0 0.0
  %99 = vmatpush1.msra.mxu0 %v66
  %100 = vmatprep.subr.mxu0 0.0
  %101 = vmatpush1.msra.mxu0 %v65
  %102 = vmatprep.subr.mxu0 0.0
  %103 = vmatpush1.msra.mxu0 %v64
  %104 = vmatprep.subr.mxu0 0.0
  %105 = vmatpush1.msra.mxu0 %v63
  %106 = vmatprep.subr.mxu0 0.0
  %107 = vmatpush1.msra.mxu0 %v62
  %108 = vmatprep.subr.mxu0 0.0
  %109 = vmatpush1.msra.mxu0 %v61
  %110 = vmatprep.subr.mxu0 0.0
  %111 = vmatpush1.msra.mxu0 %v60
  %112 = vmatprep.subr.mxu0 0.0
  %113 = vmatpush1.msra.mxu0 %v59
  %114 = vmatprep.subr.mxu0 0.0
  %115 = vmatpush2.msra.mxu0 0.0
  %116 = vmatprep.subr.mxu0 0.0
  %117 = vmatpush2.msra.mxu0 0.0
  %118 = vmatprep.subr.mxu0 0.0
  %119 = vmatpush2.msra.mxu0 0.0
  %120 = vmatprep.subr.mxu0 0.0
  %121 = vmatpush2.msra.mxu0 0.0
  %122 = vmatprep.subr.mxu0 0.0
  %123 = vmatpush2.msra.mxu0 0.0
  %124 = vmatprep.subr.mxu0 0.0
  %125 = vmatpush2.msra.mxu0 0.0
  %126 = vmatprep.subr.mxu0 0.0
  %127 = vmatpush2.msra.mxu0 0.0
  %128 = vmatprep.subr.mxu0 0.0
  %129 = vmatpush2.msra.mxu0 0.0
  %130 = vmatprep.subr.mxu0 0.0
  %131 = vmatpush2.msra.mxu0 0.0
  %132 = vmatprep.subr.mxu0 0.0
  %133 = vmatpush2.msra.mxu0 0.0
  %134 = vmatprep.subr.mxu0 0.0
  %135 = vmatpush2.msra.mxu0 0.0
  %136 = vmatprep.subr.mxu0 0.0
  %137 = vmatpush2.msra.mxu0 0.0
  %138 = vmatprep.subr.mxu0 0.0
  %139 = vmatpush2.msra.mxu0 0.0
  %140 = vmatprep.subr.mxu0 0.0
  %141 = vmatpush2.msra.mxu0 0.0
  %142 = vmatprep.subr.mxu0 0.0
  %143 = vmatpush2.msra.mxu0 0.0
  %144 = vmatprep.subr.mxu0 0.0
  %145 = vmatpush2.msra.mxu0 0.0
  %146 = vmatprep.mubr.f32.mxu0 0.0
  %147 = vmatmul.mubr.f32.gmra.mxu0 %v51
  %v148 = vpop.f32.mrf.mxu0
  %v149 = vadd.f32 %v80, %v148
  %v150 = vpop.f32.mrf.mxu0
  %151 = vmatprep.mubr.f32.mxu0 0.0
  %152 = vmatmul.mubr.f32.gmra.mxu0 %v52
  %v153 = vpop.f32.mrf.mxu0
  %v154 = vadd.f32 %v80, %v153
  %v155 = vpop.f32.mrf.mxu0
  %156 = vmatprep.mubr.f32.mxu0 0.0
  %157 = vmatmul.mubr.f32.gmra.mxu0 %v53
  %v158 = vpop.f32.mrf.mxu0
  %v159 = vadd.f32 %v80, %v158
  %v160 = vpop.f32.mrf.mxu0
  %161 = vmatprep.mubr.f32.mxu0 0.0
  %162 = vmatmul.mubr.f32.gmra.mxu0 %v54
  %v163 = vpop.f32.mrf.mxu0
  %v164 = vadd.f32 %v80, %v163
  %v165 = vpop.f32.mrf.mxu0
  %166 = vmatprep.mubr.f32.mxu0 0.0
  %167 = vmatmul.mubr.f32.gmra.mxu0 %v55
  %v168 = vpop.f32.mrf.mxu0
  %v169 = vadd.f32 %v80, %v168
  %v170 = vpop.f32.mrf.mxu0
  %171 = vmatprep.mubr.f32.mxu0 0.0
  %172 = vmatmul.mubr.f32.gmra.mxu0 %v56
  %v173 = vpop.f32.mrf.mxu0
  %v174 = vadd.f32 %v80, %v173
  %v175 = vpop.f32.mrf.mxu0
  %176 = vmatprep.mubr.f32.mxu0 0.0
  %177 = vmatmul.mubr.f32.gmra.mxu0 %v57
  %v178 = vpop.f32.mrf.mxu0
  %v179 = vadd.f32 %v80, %v178
  %v180 = vpop.f32.mrf.mxu0
  %181 = vmatprep.mubr.f32.mxu0 0.0
  %182 = vmatmul.mubr.f32.gmra.mxu0 %v58
  %v183 = vpop.f32.mrf.mxu0
  %v184 = vadd.f32 %v80, %v183
  %v185 = vpop.f32.mrf.mxu0
  %186 = vdwg.mxu0
  %187 = vst [vmem:[#allocation3] sm:$0xff] %v149
  %188 = vst [vmem:[#allocation3 + $0x8] sm:$0xff] %v154
  %189 = vst [vmem:[#allocation3 + $0x10] sm:$0xff] %v159
  %190 = vst [vmem:[#allocation3 + $0x18] sm:$0xff] %v164
  %191 = vst [vmem:[#allocation3 + $0x20] sm:$0xff] %v169
  %192 = vst [vmem:[#allocation3 + $0x28] sm:$0xff] %v174
  %193 = vst [vmem:[#allocation3 + $0x30] sm:$0xff] %v179
  %194 = vst [vmem:[#allocation3 + $0x38] sm:$0xff] %v184
  %v195 = vld [vmem:[#allocation3] sm:$0xff]
  %s196 = scalar_lea.vmem [#allocation3], 56
  %v197 = vld [vmem:[%s196] sm:$0xff]
  %v198 = vld [vmem:[%s3] sm:$0xff]
  %v199 = vld [vmem:[%s3 + $0x8] sm:$0xff]
  %v200 = vld [vmem:[%s3 + $0x10] sm:$0xff]
  %v201 = vld [vmem:[%s3 + $0x18] sm:$0xff]
  %v202 = vld [vmem:[%s3 + $0x20] sm:$0xff]
  %v203 = vld [vmem:[%s3 + $0x28] sm:$0xff]
  %v204 = vld [vmem:[%s3 + $0x30] sm:$0xff]
  %v205 = vld [vmem:[%s3 + $0x38] sm:$0xff]
  %v206 = vld [vmem:[%s3 + $0x40] sm:$0xff]
  %v207 = vld [vmem:[%s3 + $0x48] sm:$0xff]
  %v208 = vld [vmem:[%s3 + $0x50] sm:$0xff]
  %v209 = vld [vmem:[%s3 + $0x58] sm:$0xff]
  %v210 = vld [vmem:[%s3 + $0x60] sm:$0xff]
  %v211 = vld [vmem:[%s3 + $0x68] sm:$0xff]
  %v212 = vld [vmem:[%s3 + $0x70] sm:$0xff]
  %v213 = vld [vmem:[%s3 + $0x78] sm:$0xff]
  %214 = vmatprep.subr.mxu0 0.0
  %215 = vmatpush1.msra.mxu0 %v213
  %216 = vmatprep.subr.mxu0 0.0
  %217 = vmatpush1.msra.mxu0 %v212
  %218 = vmatprep.subr.mxu0 0.0
  %219 = vmatpush1.msra.mxu0 %v211
  %220 = vmatprep.subr.mxu0 0.0
  %221 = vmatpush1.msra.mxu0 %v210
  %222 = vmatprep.subr.mxu0 0.0
  %223 = vmatpush1.msra.mxu0 %v209
  %224 = vmatprep.subr.mxu0 0.0
  %225 = vmatpush1.msra.mxu0 %v208
  %226 = vmatprep.subr.mxu0 0.0
  %227 = vmatpush1.msra.mxu0 %v207
  %228 = vmatprep.subr.mxu0 0.0
  %229 = vmatpush1.msra.mxu0 %v206
  %230 = vmatprep.subr.mxu0 0.0
  %231 = vmatpush1.msra.mxu0 %v205
  %232 = vmatprep.subr.mxu0 0.0
  %233 = vmatpush1.msra.mxu0 %v204
  %234 = vmatprep.subr.mxu0 0.0
  %235 = vmatpush1.msra.mxu0 %v203
  %236 = vmatprep.subr.mxu0 0.0
  %237 = vmatpush1.msra.mxu0 %v202
  %238 = vmatprep.subr.mxu0 0.0
  %239 = vmatpush1.msra.mxu0 %v201
  %240 = vmatprep.subr.mxu0 0.0
  %241 = vmatpush1.msra.mxu0 %v200
  %242 = vmatprep.subr.mxu0 0.0
  %243 = vmatpush1.msra.mxu0 %v199
  %244 = vmatprep.subr.mxu0 0.0
  %245 = vmatpush1.msra.mxu0 %v198
  %246 = vmatprep.subr.mxu0 0.0
  %247 = vmatpush2.msra.mxu0 0.0
  %248 = vmatprep.subr.mxu0 0.0
  %249 = vmatpush2.msra.mxu0 0.0
  %250 = vmatprep.subr.mxu0 0.0
  %251 = vmatpush2.msra.mxu0 0.0
  %252 = vmatprep.subr.mxu0 0.0
  %253 = vmatpush2.msra.mxu0 0.0
  %254 = vmatprep.subr.mxu0 0.0
  %255 = vmatpush2.msra.mxu0 0.0
  %256 = vmatprep.subr.mxu0 0.0
  %257 = vmatpush2.msra.mxu0 0.0
  %258 = vmatprep.subr.mxu0 0.0
  %259 = vmatpush2.msra.mxu0 0.0
  %260 = vmatprep.subr.mxu0 0.0
  %261 = vmatpush2.msra.mxu0 0.0
  %262 = vmatprep.subr.mxu0 0.0
  %263 = vmatpush2.msra.mxu0 0.0
  %264 = vmatprep.subr.mxu0 0.0
  %265 = vmatpush2.msra.mxu0 0.0
  %266 = vmatprep.subr.mxu0 0.0
  %267 = vmatpush2.msra.mxu0 0.0
  %268 = vmatprep.subr.mxu0 0.0
  %269 = vmatpush2.msra.mxu0 0.0
  %270 = vmatprep.subr.mxu0 0.0
  %271 = vmatpush2.msra.mxu0 0.0
  %272 = vmatprep.subr.mxu0 0.0
  %273 = vmatpush2.msra.mxu0 0.0
  %274 = vmatprep.subr.mxu0 0.0
  %275 = vmatpush2.msra.mxu0 0.0
  %276 = vmatprep.subr.mxu0 0.0
  %277 = vmatpush2.msra.mxu0 0.0
  %278 = vmatprep.mubr.f32.mxu0 0.0
  %279 = vmatmul.mubr.f32.gmra.mxu0 0.0
  %v280 = vpop.f32.mrf.mxu0
  %v281 = vadd.f32 0.0, %v280
  %v282 = vpop.f32.mrf.mxu0
  %283 = vmatprep.mubr.f32.mxu0 0.0
  %284 = vmatmul.mubr.f32.gmra.mxu0 0.0
  %v285 = vpop.f32.mrf.mxu0
  %v286 = vadd.f32 0.0, %v285
  %v287 = vpop.f32.mrf.mxu0
  %288 = vdwg.mxu0
  %v289 = vadd.f32 %v195, %v281
  %v290 = vadd.f32 %v197, %v286
  %v291 = vtanh.pop %v289
  %v292 = vtanh.pop %v290
  %s293 = smul.u32 0, 2
  %s294 = smul.addr %s293, 8
  %s295 = scalar_lea.vmem [#allocation5], %s294
  %296 = vst [vmem:[%s295] sm:$0xff] %v291
  %s297 = smul.u32 7, 2
  %s298 = smul.addr %s297, 8
  %s299 = scalar_lea.vmem [#allocation5], %s298
  %300 = vst [vmem:[%s299 + $0x8] sm:$0xff] %v292
  %s301 = scalar_lea.vmem [#allocation3], 8
  %v302 = vld [vmem:[%s301] sm:$0xff]
  %s303 = scalar_lea.vmem [#allocation3], 48
  %v304 = vld [vmem:[%s303] sm:$0xff]
  %v305 = vld [vmem:[%s3] sm:$0xff]
  %v306 = vld [vmem:[%s3 + $0x8] sm:$0xff]
  %v307 = vld [vmem:[%s3 + $0x10] sm:$0xff]
  %v308 = vld [vmem:[%s3 + $0x18] sm:$0xff]
  %v309 = vld [vmem:[%s3 + $0x20] sm:$0xff]
  %v310 = vld [vmem:[%s3 + $0x28] sm:$0xff]
  %v311 = vld [vmem:[%s3 + $0x30] sm:$0xff]
  %v312 = vld [vmem:[%s3 + $0x38] sm:$0xff]
  %v313 = vld [vmem:[%s3 + $0x40] sm:$0xff]
  %v314 = vld [vmem:[%s3 + $0x48] sm:$0xff]
  %v315 = vld [vmem:[%s3 + $0x50] sm:$0xff]
  %v316 = vld [vmem:[%s3 + $0x58] sm:$0xff]
  %v317 = vld [vmem:[%s3 + $0x60] sm:$0xff]
  %v318 = vld [vmem:[%s3 + $0x68] sm:$0xff]
  %v319 = vld [vmem:[%s3 + $0x70] sm:$0xff]
  %v320 = vld [vmem:[%s3 + $0x78] sm:$0xff]
  %321 = vmatprep.subr.mxu0 0.0
  %322 = vmatpush1.msra.mxu0 %v320
  %323 = vmatprep.subr.mxu0 0.0
  %324 = vmatpush1.msra.mxu0 %v319
  %325 = vmatprep.subr.mxu0 0.0
  %326 = vmatpush1.msra.mxu0 %v318
  %327 = vmatprep.subr.mxu0 0.0
  %328 = vmatpush1.msra.mxu0 %v317
  %329 = vmatprep.subr.mxu0 0.0
  %330 = vmatpush1.msra.mxu0 %v316
  %331 = vmatprep.subr.mxu0 0.0
  %332 = vmatpush1.msra.mxu0 %v315
  %333 = vmatprep.subr.mxu0 0.0
  %334 = vmatpush1.msra.mxu0 %v314
  %335 = vmatprep.subr.mxu0 0.0
  %336 = vmatpush1.msra.mxu0 %v313
  %337 = vmatprep.subr.mxu0 0.0
  %338 = vmatpush1.msra.mxu0 %v312
  %339 = vmatprep.subr.mxu0 0.0
  %340 = vmatpush1.msra.mxu0 %v311
  %341 = vmatprep.subr.mxu0 0.0
  %342 = vmatpush1.msra.mxu0 %v310
  %343 = vmatprep.subr.mxu0 0.0
  %344 = vmatpush1.msra.mxu0 %v309
  %345 = vmatprep.subr.mxu0 0.0
  %346 = vmatpush1.msra.mxu0 %v308
  %347 = vmatprep.subr.mxu0 0.0
  %348 = vmatpush1.msra.mxu0 %v307
  %349 = vmatprep.subr.mxu0 0.0
  %350 = vmatpush1.msra.mxu0 %v306
  %351 = vmatprep.subr.mxu0 0.0
  %352 = vmatpush1.msra.mxu0 %v305
  %353 = vmatprep.subr.mxu0 0.0
  %354 = vmatpush2.msra.mxu0 0.0
  %355 = vmatprep.subr.mxu0 0.0
  %356 = vmatpush2.msra.mxu0 0.0
  %357 = vmatprep.subr.mxu0 0.0
  %358 = vmatpush2.msra.mxu0 0.0
  %359 = vmatprep.subr.mxu0 0.0
  %360 = vmatpush2.msra.mxu0 0.0
  %361 = vmatprep.subr.mxu0 0.0
  %362 = vmatpush2.msra.mxu0 0.0
  %363 = vmatprep.subr.mxu0 0.0
  %364 = vmatpush2.msra.mxu0 0.0
  %365 = vmatprep.subr.mxu0 0.0
  %366 = vmatpush2.msra.mxu0 0.0
  %367 = vmatprep.subr.mxu0 0.0
  %368 = vmatpush2.msra.mxu0 0.0
  %369 = vmatprep.subr.mxu0 0.0
  %370 = vmatpush2.msra.mxu0 0.0
  %371 = vmatprep.subr.mxu0 0.0
  %372 = vmatpush2.msra.mxu0 0.0
  %373 = vmatprep.subr.mxu0 0.0
  %374 = vmatpush2.msra.mxu0 0.0
  %375 = vmatprep.subr.mxu0 0.0
  %376 = vmatpush2.msra.mxu0 0.0
  %377 = vmatprep.subr.mxu0 0.0
  %378 = vmatpush2.msra.mxu0 0.0
  %379 = vmatprep.subr.mxu0 0.0
  %380 = vmatpush2.msra.mxu0 0.0
  %381 = vmatprep.subr.mxu0 0.0
  %382 = vmatpush2.msra.mxu0 0.0
  %383 = vmatprep.subr.mxu0 0.0
  %384 = vmatpush2.msra.mxu0 0.0
  %385 = vmatprep.mubr.f32.mxu0 0.0
  %386 = vmatmul.mubr.f32.gmra.mxu0 %v291
  %v387 = vpop.f32.mrf.mxu0
  %v388 = vadd.f32 0.0, %v387
  %v389 = vpop.f32.mrf.mxu0
  %390 = vmatprep.mubr.f32.mxu0 0.0
  %391 = vmatmul.mubr.f32.gmra.mxu0 %v292
  %v392 = vpop.f32.mrf.mxu0
  %v393 = vadd.f32 0.0, %v392
  %v394 = vpop.f32.mrf.mxu0
  %395 = vdwg.mxu0
  %v396 = vadd.f32 %v302, %v388
  %v397 = vadd.f32 %v304, %v393
  %v398 = vtanh.pop %v396
  %v399 = vtanh.pop %v397
  %s400 = smul.u32 1, 2
  %s401 = smul.addr %s400, 8
  %s402 = scalar_lea.vmem [#allocation5], %s401
  %403 = vst [vmem:[%s402] sm:$0xff] %v398
  %s404 = smul.u32 6, 2
  %s405 = smul.addr %s404, 8
  %s406 = scalar_lea.vmem [#allocation5], %s405
  %407 = vst [vmem:[%s406 + $0x8] sm:$0xff] %v399
  %s408 = scalar_lea.vmem [#allocation3], 16
  %v409 = vld [vmem:[%s408] sm:$0xff]
  %s410 = scalar_lea.vmem [#allocation3], 40
  %v411 = vld [vmem:[%s410] sm:$0xff]
  %v412 = vld [vmem:[%s3] sm:$0xff]
  %v413 = vld [vmem:[%s3 + $0x8] sm:$0xff]
  %v414 = vld [vmem:[%s3 + $0x10] sm:$0xff]
  %v415 = vld [vmem:[%s3 + $0x18] sm:$0xff]
  %v416 = vld [vmem:[%s3 + $0x20] sm:$0xff]
  %v417 = vld [vmem:[%s3 + $0x28] sm:$0xff]
  %v418 = vld [vmem:[%s3 + $0x30] sm:$0xff]
  %v419 = vld [vmem:[%s3 + $0x38] sm:$0xff]
  %v420 = vld [vmem:[%s3 + $0x40] sm:$0xff]
  %v421 = vld [vmem:[%s3 + $0x48] sm:$0xff]
  %v422 = vld [vmem:[%s3 + $0x50] sm:$0xff]
  %v423 = vld [vmem:[%s3 + $0x58] sm:$0xff]
  %v424 = vld [vmem:[%s3 + $0x60] sm:$0xff]
  %v425 = vld [vmem:[%s3 + $0x68] sm:$0xff]
  %v426 = vld [vmem:[%s3 + $0x70] sm:$0xff]
  %v427 = vld [vmem:[%s3 + $0x78] sm:$0xff]
  %428 = vmatprep.subr.mxu0 0.0
  %429 = vmatpush1.msra.mxu0 %v427
  %430 = vmatprep.subr.mxu0 0.0
  %431 = vmatpush1.msra.mxu0 %v426
  %432 = vmatprep.subr.mxu0 0.0
  %433 = vmatpush1.msra.mxu0 %v425
  %434 = vmatprep.subr.mxu0 0.0
  %435 = vmatpush1.msra.mxu0 %v424
  %436 = vmatprep.subr.mxu0 0.0
  %437 = vmatpush1.msra.mxu0 %v423
  %438 = vmatprep.subr.mxu0 0.0
  %439 = vmatpush1.msra.mxu0 %v422
  %440 = vmatprep.subr.mxu0 0.0
  %441 = vmatpush1.msra.mxu0 %v421
  %442 = vmatprep.subr.mxu0 0.0
  %443 = vmatpush1.msra.mxu0 %v420
  %444 = vmatprep.subr.mxu0 0.0
  %445 = vmatpush1.msra.mxu0 %v419
  %446 = vmatprep.subr.mxu0 0.0
  %447 = vmatpush1.msra.mxu0 %v418
  %448 = vmatprep.subr.mxu0 0.0
  %449 = vmatpush1.msra.mxu0 %v417
  %450 = vmatprep.subr.mxu0 0.0
  %451 = vmatpush1.msra.mxu0 %v416
  %452 = vmatprep.subr.mxu0 0.0
  %453 = vmatpush1.msra.mxu0 %v415
  %454 = vmatprep.subr.mxu0 0.0
  %455 = vmatpush1.msra.mxu0 %v414
  %456 = vmatprep.subr.mxu0 0.0
  %457 = vmatpush1.msra.mxu0 %v413
  %458 = vmatprep.subr.mxu0 0.0
  %459 = vmatpush1.msra.mxu0 %v412
  %460 = vmatprep.subr.mxu0 0.0
  %461 = vmatpush2.msra.mxu0 0.0
  %462 = vmatprep.subr.mxu0 0.0
  %463 = vmatpush2.msra.mxu0 0.0
  %464 = vmatprep.subr.mxu0 0.0
  %465 = vmatpush2.msra.mxu0 0.0
  %466 = vmatprep.subr.mxu0 0.0
  %467 = vmatpush2.msra.mxu0 0.0
  %468 = vmatprep.subr.mxu0 0.0
  %469 = vmatpush2.msra.mxu0 0.0
  %470 = vmatprep.subr.mxu0 0.0
  %471 = vmatpush2.msra.mxu0 0.0
  %472 = vmatprep.subr.mxu0 0.0
  %473 = vmatpush2.msra.mxu0 0.0
  %474 = vmatprep.subr.mxu0 0.0
  %475 = vmatpush2.msra.mxu0 0.0
  %476 = vmatprep.subr.mxu0 0.0
  %477 = vmatpush2.msra.mxu0 0.0
  %478 = vmatprep.subr.mxu0 0.0
  %479 = vmatpush2.msra.mxu0 0.0
  %480 = vmatprep.subr.mxu0 0.0
  %481 = vmatpush2.msra.mxu0 0.0
  %482 = vmatprep.subr.mxu0 0.0
  %483 = vmatpush2.msra.mxu0 0.0
  %484 = vmatprep.subr.mxu0 0.0
  %485 = vmatpush2.msra.mxu0 0.0
  %486 = vmatprep.subr.mxu0 0.0
  %487 = vmatpush2.msra.mxu0 0.0
  %488 = vmatprep.subr.mxu0 0.0
  %489 = vmatpush2.msra.mxu0 0.0
  %490 = vmatprep.subr.mxu0 0.0
  %491 = vmatpush2.msra.mxu0 0.0
  %492 = vmatprep.mubr.f32.mxu0 0.0
  %493 = vmatmul.mubr.f32.gmra.mxu0 %v398
  %v494 = vpop.f32.mrf.mxu0
  %v495 = vadd.f32 0.0, %v494
  %v496 = vpop.f32.mrf.mxu0
  %497 = vmatprep.mubr.f32.mxu0 0.0
  %498 = vmatmul.mubr.f32.gmra.mxu0 %v399
  %v499 = vpop.f32.mrf.mxu0
  %v500 = vadd.f32 0.0, %v499
  %v501 = vpop.f32.mrf.mxu0
  %502 = vdwg.mxu0
  %v503 = vadd.f32 %v409, %v495
  %v504 = vadd.f32 %v411, %v500
  %v505 = vtanh.pop %v503
  %v506 = vtanh.pop %v504
  %s507 = smul.u32 2, 2
  %s508 = smul.addr %s507, 8
  %s509 = scalar_lea.vmem [#allocation5], %s508
  %510 = vst [vmem:[%s509] sm:$0xff] %v505
  %s511 = smul.u32 5, 2
  %s512 = smul.addr %s511, 8
  %s513 = scalar_lea.vmem [#allocation5], %s512
  %514 = vst [vmem:[%s513 + $0x8] sm:$0xff] %v506
  %s515 = scalar_lea.vmem [#allocation3], 24
  %v516 = vld [vmem:[%s515] sm:$0xff]
  %s517 = scalar_lea.vmem [#allocation3], 32
  %v518 = vld [vmem:[%s517] sm:$0xff]
  %v519 = vld [vmem:[%s3] sm:$0xff]
  %v520 = vld [vmem:[%s3 + $0x8] sm:$0xff]
  %v521 = vld [vmem:[%s3 + $0x10] sm:$0xff]
  %v522 = vld [vmem:[%s3 + $0x18] sm:$0xff]
  %v523 = vld [vmem:[%s3 + $0x20] sm:$0xff]
  %v524 = vld [vmem:[%s3 + $0x28] sm:$0xff]
  %v525 = vld [vmem:[%s3 + $0x30] sm:$0xff]
  %v526 = vld [vmem:[%s3 + $0x38] sm:$0xff]
  %v527 = vld [vmem:[%s3 + $0x40] sm:$0xff]
  %v528 = vld [vmem:[%s3 + $0x48] sm:$0xff]
  %v529 = vld [vmem:[%s3 + $0x50] sm:$0xff]
  %v530 = vld [vmem:[%s3 + $0x58] sm:$0xff]
  %v531 = vld [vmem:[%s3 + $0x60] sm:$0xff]
  %v532 = vld [vmem:[%s3 + $0x68] sm:$0xff]
  %v533 = vld [vmem:[%s3 + $0x70] sm:$0xff]
  %v534 = vld [vmem:[%s3 + $0x78] sm:$0xff]
  %535 = vmatprep.subr.mxu0 0.0
  %536 = vmatpush1.msra.mxu0 %v534
  %537 = vmatprep.subr.mxu0 0.0
  %538 = vmatpush1.msra.mxu0 %v533
  %539 = vmatprep.subr.mxu0 0.0
  %540 = vmatpush1.msra.mxu0 %v532
  %541 = vmatprep.subr.mxu0 0.0
  %542 = vmatpush1.msra.mxu0 %v531
  %543 = vmatprep.subr.mxu0 0.0
  %544 = vmatpush1.msra.mxu0 %v530
  %545 = vmatprep.subr.mxu0 0.0
  %546 = vmatpush1.msra.mxu0 %v529
  %547 = vmatprep.subr.mxu0 0.0
  %548 = vmatpush1.msra.mxu0 %v528
  %549 = vmatprep.subr.mxu0 0.0
  %550 = vmatpush1.msra.mxu0 %v527
  %551 = vmatprep.subr.mxu0 0.0
  %552 = vmatpush1.msra.mxu0 %v526
  %553 = vmatprep.subr.mxu0 0.0
  %554 = vmatpush1.msra.mxu0 %v525
  %555 = vmatprep.subr.mxu0 0.0
  %556 = vmatpush1.msra.mxu0 %v524
  %557 = vmatprep.subr.mxu0 0.0
  %558 = vmatpush1.msra.mxu0 %v523
  %559 = vmatprep.subr.mxu0 0.0
  %560 = vmatpush1.msra.mxu0 %v522
  %561 = vmatprep.subr.mxu0 0.0
  %562 = vmatpush1.msra.mxu0 %v521
  %563 = vmatprep.subr.mxu0 0.0
  %564 = vmatpush1.msra.mxu0 %v520
  %565 = vmatprep.subr.mxu0 0.0
  %566 = vmatpush1.msra.mxu0 %v519
  %567 = vmatprep.subr.mxu0 0.0
  %568 = vmatpush2.msra.mxu0 0.0
  %569 = vmatprep.subr.mxu0 0.0
  %570 = vmatpush2.msra.mxu0 0.0
  %571 = vmatprep.subr.mxu0 0.0
  %572 = vmatpush2.msra.mxu0 0.0
  %573 = vmatprep.subr.mxu0 0.0
  %574 = vmatpush2.msra.mxu0 0.0
  %575 = vmatprep.subr.mxu0 0.0
  %576 = vmatpush2.msra.mxu0 0.0
  %577 = vmatprep.subr.mxu0 0.0
  %578 = vmatpush2.msra.mxu0 0.0
  %579 = vmatprep.subr.mxu0 0.0
  %580 = vmatpush2.msra.mxu0 0.0
  %581 = vmatprep.subr.mxu0 0.0
  %582 = vmatpush2.msra.mxu0 0.0
  %583 = vmatprep.subr.mxu0 0.0
  %584 = vmatpush2.msra.mxu0 0.0
  %585 = vmatprep.subr.mxu0 0.0
  %586 = vmatpush2.msra.mxu0 0.0
  %587 = vmatprep.subr.mxu0 0.0
  %588 = vmatpush2.msra.mxu0 0.0
  %589 = vmatprep.subr.mxu0 0.0
  %590 = vmatpush2.msra.mxu0 0.0
  %591 = vmatprep.subr.mxu0 0.0
  %592 = vmatpush2.msra.mxu0 0.0
  %593 = vmatprep.subr.mxu0 0.0
  %594 = vmatpush2.msra.mxu0 0.0
  %595 = vmatprep.subr.mxu0 0.0
  %596 = vmatpush2.msra.mxu0 0.0
  %597 = vmatprep.subr.mxu0 0.0
  %598 = vmatpush2.msra.mxu0 0.0
  %599 = vmatprep.mubr.f32.mxu0 0.0
  %600 = vmatmul.mubr.f32.gmra.mxu0 %v505
  %v601 = vpop.f32.mrf.mxu0
  %v602 = vadd.f32 0.0, %v601
  %v603 = vpop.f32.mrf.mxu0
  %604 = vmatprep.mubr.f32.mxu0 0.0
  %605 = vmatmul.mubr.f32.gmra.mxu0 %v506
  %v606 = vpop.f32.mrf.mxu0
  %v607 = vadd.f32 0.0, %v606
  %v608 = vpop.f32.mrf.mxu0
  %609 = vdwg.mxu0
  %v610 = vadd.f32 %v516, %v602
  %v611 = vadd.f32 %v518, %v607
  %v612 = vtanh.pop %v610
  %v613 = vtanh.pop %v611
  %s614 = smul.u32 3, 2
  %s615 = smul.addr %s614, 8
  %s616 = scalar_lea.vmem [#allocation5], %s615
  %617 = vst [vmem:[%s616] sm:$0xff] %v612
  %s618 = smul.u32 4, 2
  %s619 = smul.addr %s618, 8
  %s620 = scalar_lea.vmem [#allocation5], %s619
  %621 = vst [vmem:[%s620 + $0x8] sm:$0xff] %v613
  %v622 = vld [vmem:[%s517] sm:$0xff]
  %v623 = vld [vmem:[%s515] sm:$0xff]
  %v624 = vld [vmem:[%s3] sm:$0xff]
  %v625 = vld [vmem:[%s3 + $0x8] sm:$0xff]
  %v626 = vld [vmem:[%s3 + $0x10] sm:$0xff]
  %v627 = vld [vmem:[%s3 + $0x18] sm:$0xff]
  %v628 = vld [vmem:[%s3 + $0x20] sm:$0xff]
  %v629 = vld [vmem:[%s3 + $0x28] sm:$0xff]
  %v630 = vld [vmem:[%s3 + $0x30] sm:$0xff]
  %v631 = vld [vmem:[%s3 + $0x38] sm:$0xff]
  %v632 = vld [vmem:[%s3 + $0x40] sm:$0xff]
  %v633 = vld [vmem:[%s3 + $0x48] sm:$0xff]
  %v634 = vld [vmem:[%s3 + $0x50] sm:$0xff]
  %v635 = vld [vmem:[%s3 + $0x58] sm:$0xff]
  %v636 = vld [vmem:[%s3 + $0x60] sm:$0xff]
  %v637 = vld [vmem:[%s3 + $0x68] sm:$0xff]
  %v638 = vld [vmem:[%s3 + $0x70] sm:$0xff]
  %v639 = vld [vmem:[%s3 + $0x78] sm:$0xff]
  %640 = vmatprep.subr.mxu0 0.0
  %641 = vmatpush1.msra.mxu0 %v639
  %642 = vmatprep.subr.mxu0 0.0
  %643 = vmatpush1.msra.mxu0 %v638
  %644 = vmatprep.subr.mxu0 0.0
  %645 = vmatpush1.msra.mxu0 %v637
  %646 = vmatprep.subr.mxu0 0.0
  %647 = vmatpush1.msra.mxu0 %v636
  %648 = vmatprep.subr.mxu0 0.0
  %649 = vmatpush1.msra.mxu0 %v635
  %650 = vmatprep.subr.mxu0 0.0
  %651 = vmatpush1.msra.mxu0 %v634
  %652 = vmatprep.subr.mxu0 0.0
  %653 = vmatpush1.msra.mxu0 %v633
  %654 = vmatprep.subr.mxu0 0.0
  %655 = vmatpush1.msra.mxu0 %v632
  %656 = vmatprep.subr.mxu0 0.0
  %657 = vmatpush1.msra.mxu0 %v631
  %658 = vmatprep.subr.mxu0 0.0
  %659 = vmatpush1.msra.mxu0 %v630
  %660 = vmatprep.subr.mxu0 0.0
  %661 = vmatpush1.msra.mxu0 %v629
  %662 = vmatprep.subr.mxu0 0.0
  %663 = vmatpush1.msra.mxu0 %v628
  %664 = vmatprep.subr.mxu0 0.0
  %665 = vmatpush1.msra.mxu0 %v627
  %666 = vmatprep.subr.mxu0 0.0
  %667 = vmatpush1.msra.mxu0 %v626
  %668 = vmatprep.subr.mxu0 0.0
  %669 = vmatpush1.msra.mxu0 %v625
  %670 = vmatprep.subr.mxu0 0.0
  %671 = vmatpush1.msra.mxu0 %v624
  %672 = vmatprep.subr.mxu0 0.0
  %673 = vmatpush2.msra.mxu0 0.0
  %674 = vmatprep.subr.mxu0 0.0
  %675 = vmatpush2.msra.mxu0 0.0
  %676 = vmatprep.subr.mxu0 0.0
  %677 = vmatpush2.msra.mxu0 0.0
  %678 = vmatprep.subr.mxu0 0.0
  %679 = vmatpush2.msra.mxu0 0.0
  %680 = vmatprep.subr.mxu0 0.0
  %681 = vmatpush2.msra.mxu0 0.0
  %682 = vmatprep.subr.mxu0 0.0
  %683 = vmatpush2.msra.mxu0 0.0
  %684 = vmatprep.subr.mxu0 0.0
  %685 = vmatpush2.msra.mxu0 0.0
  %686 = vmatprep.subr.mxu0 0.0
  %687 = vmatpush2.msra.mxu0 0.0
  %688 = vmatprep.subr.mxu0 0.0
  %689 = vmatpush2.msra.mxu0 0.0
  %690 = vmatprep.subr.mxu0 0.0
  %691 = vmatpush2.msra.mxu0 0.0
  %692 = vmatprep.subr.mxu0 0.0
  %693 = vmatpush2.msra.mxu0 0.0
  %694 = vmatprep.subr.mxu0 0.0
  %695 = vmatpush2.msra.mxu0 0.0
  %696 = vmatprep.subr.mxu0 0.0
  %697 = vmatpush2.msra.mxu0 0.0
  %698 = vmatprep.subr.mxu0 0.0
  %699 = vmatpush2.msra.mxu0 0.0
  %700 = vmatprep.subr.mxu0 0.0
  %701 = vmatpush2.msra.mxu0 0.0
  %702 = vmatprep.subr.mxu0 0.0
  %703 = vmatpush2.msra.mxu0 0.0
  %704 = vmatprep.mubr.f32.mxu0 0.0
  %705 = vmatmul.mubr.f32.gmra.mxu0 %v612
  %v706 = vpop.f32.mrf.mxu0
  %v707 = vadd.f32 0.0, %v706
  %v708 = vpop.f32.mrf.mxu0
  %709 = vmatprep.mubr.f32.mxu0 0.0
  %710 = vmatmul.mubr.f32.gmra.mxu0 %v613
  %v711 = vpop.f32.mrf.mxu0
  %v712 = vadd.f32 0.0, %v711
  %v713 = vpop.f32.mrf.mxu0
  %714 = vdwg.mxu0
  %v715 = vadd.f32 %v622, %v707
  %v716 = vadd.f32 %v623, %v712
  %v717 = vtanh.pop %v715
  %v718 = vtanh.pop %v716
  %719 = vst [vmem:[%s620] sm:$0xff] %v717
  %720 = vst [vmem:[%s616 + $0x8] sm:$0xff] %v718
  %v721 = vld [vmem:[%s410] sm:$0xff]
  %v722 = vld [vmem:[%s408] sm:$0xff]
  %v723 = vld [vmem:[%s3] sm:$0xff]
  %v724 = vld [vmem:[%s3 + $0x8] sm:$0xff]
  %v725 = vld [vmem:[%s3 + $0x10] sm:$0xff]
  %v726 = vld [vmem:[%s3 + $0x18] sm:$0xff]
  %v727 = vld [vmem:[%s3 + $0x20] sm:$0xff]
  %v728 = vld [vmem:[%s3 + $0x28] sm:$0xff]
  %v729 = vld [vmem:[%s3 + $0x30] sm:$0xff]
  %v730 = vld [vmem:[%s3 + $0x38] sm:$0xff]
  %v731 = vld [vmem:[%s3 + $0x40] sm:$0xff]
  %v732 = vld [vmem:[%s3 + $0x48] sm:$0xff]
  %v733 = vld [vmem:[%s3 + $0x50] sm:$0xff]
  %v734 = vld [vmem:[%s3 + $0x58] sm:$0xff]
  %v735 = vld [vmem:[%s3 + $0x60] sm:$0xff]
  %v736 = vld [vmem:[%s3 + $0x68] sm:$0xff]
  %v737 = vld [vmem:[%s3 + $0x70] sm:$0xff]
  %v738 = vld [vmem:[%s3 + $0x78] sm:$0xff]
  %739 = vmatprep.subr.mxu0 0.0
  %740 = vmatpush1.msra.mxu0 %v738
  %741 = vmatprep.subr.mxu0 0.0
  %742 = vmatpush1.msra.mxu0 %v737
  %743 = vmatprep.subr.mxu0 0.0
  %744 = vmatpush1.msra.mxu0 %v736
  %745 = vmatprep.subr.mxu0 0.0
  %746 = vmatpush1.msra.mxu0 %v735
  %747 = vmatprep.subr.mxu0 0.0
  %748 = vmatpush1.msra.mxu0 %v734
  %749 = vmatprep.subr.mxu0 0.0
  %750 = vmatpush1.msra.mxu0 %v733
  %751 = vmatprep.subr.mxu0 0.0
  %752 = vmatpush1.msra.mxu0 %v732
  %753 = vmatprep.subr.mxu0 0.0
  %754 = vmatpush1.msra.mxu0 %v731
  %755 = vmatprep.subr.mxu0 0.0
  %756 = vmatpush1.msra.mxu0 %v730
  %757 = vmatprep.subr.mxu0 0.0
  %758 = vmatpush1.msra.mxu0 %v729
  %759 = vmatprep.subr.mxu0 0.0
  %760 = vmatpush1.msra.mxu0 %v728
  %761 = vmatprep.subr.mxu0 0.0
  %762 = vmatpush1.msra.mxu0 %v727
  %763 = vmatprep.subr.mxu0 0.0
  %764 = vmatpush1.msra.mxu0 %v726
  %765 = vmatprep.subr.mxu0 0.0
  %766 = vmatpush1.msra.mxu0 %v725
  %767 = vmatprep.subr.mxu0 0.0
  %768 = vmatpush1.msra.mxu0 %v724
  %769 = vmatprep.subr.mxu0 0.0
  %770 = vmatpush1.msra.mxu0 %v723
  %771 = vmatprep.subr.mxu0 0.0
  %772 = vmatpush2.msra.mxu0 0.0
  %773 = vmatprep.subr.mxu0 0.0
  %774 = vmatpush2.msra.mxu0 0.0
  %775 = vmatprep.subr.mxu0 0.0
  %776 = vmatpush2.msra.mxu0 0.0
  %777 = vmatprep.subr.mxu0 0.0
  %778 = vmatpush2.msra.mxu0 0.0
  %779 = vmatprep.subr.mxu0 0.0
  %780 = vmatpush2.msra.mxu0 0.0
  %781 = vmatprep.subr.mxu0 0.0
  %782 = vmatpush2.msra.mxu0 0.0
  %783 = vmatprep.subr.mxu0 0.0
  %784 = vmatpush2.msra.mxu0 0.0
  %785 = vmatprep.subr.mxu0 0.0
  %786 = vmatpush2.msra.mxu0 0.0
  %787 = vmatprep.subr.mxu0 0.0
  %788 = vmatpush2.msra.mxu0 0.0
  %789 = vmatprep.subr.mxu0 0.0
  %790 = vmatpush2.msra.mxu0 0.0
  %791 = vmatprep.subr.mxu0 0.0
  %792 = vmatpush2.msra.mxu0 0.0
  %793 = vmatprep.subr.mxu0 0.0
  %794 = vmatpush2.msra.mxu0 0.0
  %795 = vmatprep.subr.mxu0 0.0
  %796 = vmatpush2.msra.mxu0 0.0
  %797 = vmatprep.subr.mxu0 0.0
  %798 = vmatpush2.msra.mxu0 0.0
  %799 = vmatprep.subr.mxu0 0.0
  %800 = vmatpush2.msra.mxu0 0.0
  %801 = vmatprep.subr.mxu0 0.0
  %802 = vmatpush2.msra.mxu0 0.0
  %803 = vmatprep.mubr.f32.mxu0 0.0
  %804 = vmatmul.mubr.f32.gmra.mxu0 %v717
  %v805 = vpop.f32.mrf.mxu0
  %v806 = vadd.f32 0.0, %v805
  %v807 = vpop.f32.mrf.mxu0
  %808 = vmatprep.mubr.f32.mxu0 0.0
  %809 = vmatmul.mubr.f32.gmra.mxu0 %v718
  %v810 = vpop.f32.mrf.mxu0
  %v811 = vadd.f32 0.0, %v810
  %v812 = vpop.f32.mrf.mxu0
  %813 = vdwg.mxu0
  %v814 = vadd.f32 %v721, %v806
  %v815 = vadd.f32 %v722, %v811
  %v816 = vtanh.pop %v814
  %v817 = vtanh.pop %v815
  %818 = vst [vmem:[%s513] sm:$0xff] %v816
  %819 = vst [vmem:[%s509 + $0x8] sm:$0xff] %v817
  %v820 = vld [vmem:[%s303] sm:$0xff]
  %v821 = vld [vmem:[%s301] sm:$0xff]
  %v822 = vld [vmem:[%s3] sm:$0xff]
  %v823 = vld [vmem:[%s3 + $0x8] sm:$0xff]
  %v824 = vld [vmem:[%s3 + $0x10] sm:$0xff]
  %v825 = vld [vmem:[%s3 + $0x18] sm:$0xff]
  %v826 = vld [vmem:[%s3 + $0x20] sm:$0xff]
  %v827 = vld [vmem:[%s3 + $0x28] sm:$0xff]
  %v828 = vld [vmem:[%s3 + $0x30] sm:$0xff]
  %v829 = vld [vmem:[%s3 + $0x38] sm:$0xff]
  %v830 = vld [vmem:[%s3 + $0x40] sm:$0xff]
  %v831 = vld [vmem:[%s3 + $0x48] sm:$0xff]
  %v832 = vld [vmem:[%s3 + $0x50] sm:$0xff]
  %v833 = vld [vmem:[%s3 + $0x58] sm:$0xff]
  %v834 = vld [vmem:[%s3 + $0x60] sm:$0xff]
  %v835 = vld [vmem:[%s3 + $0x68] sm:$0xff]
  %v836 = vld [vmem:[%s3 + $0x70] sm:$0xff]
  %v837 = vld [vmem:[%s3 + $0x78] sm:$0xff]
  %838 = vmatprep.subr.mxu0 0.0
  %839 = vmatpush1.msra.mxu0 %v837
  %840 = vmatprep.subr.mxu0 0.0
  %841 = vmatpush1.msra.mxu0 %v836
  %842 = vmatprep.subr.mxu0 0.0
  %843 = vmatpush1.msra.mxu0 %v835
  %844 = vmatprep.subr.mxu0 0.0
  %845 = vmatpush1.msra.mxu0 %v834
  %846 = vmatprep.subr.mxu0 0.0
  %847 = vmatpush1.msra.mxu0 %v833
  %848 = vmatprep.subr.mxu0 0.0
  %849 = vmatpush1.msra.mxu0 %v832
  %850 = vmatprep.subr.mxu0 0.0
  %851 = vmatpush1.msra.mxu0 %v831
  %852 = vmatprep.subr.mxu0 0.0
  %853 = vmatpush1.msra.mxu0 %v830
  %854 = vmatprep.subr.mxu0 0.0
  %855 = vmatpush1.msra.mxu0 %v829
  %856 = vmatprep.subr.mxu0 0.0
  %857 = vmatpush1.msra.mxu0 %v828
  %858 = vmatprep.subr.mxu0 0.0
  %859 = vmatpush1.msra.mxu0 %v827
  %860 = vmatprep.subr.mxu0 0.0
  %861 = vmatpush1.msra.mxu0 %v826
  %862 = vmatprep.subr.mxu0 0.0
  %863 = vmatpush1.msra.mxu0 %v825
  %864 = vmatprep.subr.mxu0 0.0
  %865 = vmatpush1.msra.mxu0 %v824
  %866 = vmatprep.subr.mxu0 0.0
  %867 = vmatpush1.msra.mxu0 %v823
  %868 = vmatprep.subr.mxu0 0.0
  %869 = vmatpush1.msra.mxu0 %v822
  %870 = vmatprep.subr.mxu0 0.0
  %871 = vmatpush2.msra.mxu0 0.0
  %872 = vmatprep.subr.mxu0 0.0
  %873 = vmatpush2.msra.mxu0 0.0
  %874 = vmatprep.subr.mxu0 0.0
  %875 = vmatpush2.msra.mxu0 0.0
  %876 = vmatprep.subr.mxu0 0.0
  %877 = vmatpush2.msra.mxu0 0.0
  %878 = vmatprep.subr.mxu0 0.0
  %879 = vmatpush2.msra.mxu0 0.0
  %880 = vmatprep.subr.mxu0 0.0
  %881 = vmatpush2.msra.mxu0 0.0
  %882 = vmatprep.subr.mxu0 0.0
  %883 = vmatpush2.msra.mxu0 0.0
  %884 = vmatprep.subr.mxu0 0.0
  %885 = vmatpush2.msra.mxu0 0.0
  %886 = vmatprep.subr.mxu0 0.0
  %887 = vmatpush2.msra.mxu0 0.0
  %888 = vmatprep.subr.mxu0 0.0
  %889 = vmatpush2.msra.mxu0 0.0
  %890 = vmatprep.subr.mxu0 0.0
  %891 = vmatpush2.msra.mxu0 0.0
  %892 = vmatprep.subr.mxu0 0.0
  %893 = vmatpush2.msra.mxu0 0.0
  %894 = vmatprep.subr.mxu0 0.0
  %895 = vmatpush2.msra.mxu0 0.0
  %896 = vmatprep.subr.mxu0 0.0
  %897 = vmatpush2.msra.mxu0 0.0
  %898 = vmatprep.subr.mxu0 0.0
  %899 = vmatpush2.msra.mxu0 0.0
  %900 = vmatprep.subr.mxu0 0.0
  %901 = vmatpush2.msra.mxu0 0.0
  %902 = vmatprep.mubr.f32.mxu0 0.0
  %903 = vmatmul.mubr.f32.gmra.mxu0 %v816
  %v904 = vpop.f32.mrf.mxu0
  %v905 = vadd.f32 0.0, %v904
  %v906 = vpop.f32.mrf.mxu0
  %907 = vmatprep.mubr.f32.mxu0 0.0
  %908 = vmatmul.mubr.f32.gmra.mxu0 %v817
  %v909 = vpop.f32.mrf.mxu0
  %v910 = vadd.f32 0.0, %v909
  %v911 = vpop.f32.mrf.mxu0
  %912 = vdwg.mxu0
  %v913 = vadd.f32 %v820, %v905
  %v914 = vadd.f32 %v821, %v910
  %v915 = vtanh.pop %v913
  %v916 = vtanh.pop %v914
  %917 = vst [vmem:[%s406] sm:$0xff] %v915
  %918 = vst [vmem:[%s402 + $0x8] sm:$0xff] %v916
  %v919 = vld [vmem:[%s196] sm:$0xff]
  %v920 = vld [vmem:[#allocation3] sm:$0xff]
  %v921 = vld [vmem:[%s3] sm:$0xff]
  %v922 = vld [vmem:[%s3 + $0x8] sm:$0xff]
  %v923 = vld [vmem:[%s3 + $0x10] sm:$0xff]
  %v924 = vld [vmem:[%s3 + $0x18] sm:$0xff]
  %v925 = vld [vmem:[%s3 + $0x20] sm:$0xff]
  %v926 = vld [vmem:[%s3 + $0x28] sm:$0xff]
  %v927 = vld [vmem:[%s3 + $0x30] sm:$0xff]
  %v928 = vld [vmem:[%s3 + $0x38] sm:$0xff]
  %v929 = vld [vmem:[%s3 + $0x40] sm:$0xff]
  %v930 = vld [vmem:[%s3 + $0x48] sm:$0xff]
  %v931 = vld [vmem:[%s3 + $0x50] sm:$0xff]
  %v932 = vld [vmem:[%s3 + $0x58] sm:$0xff]
  %v933 = vld [vmem:[%s3 + $0x60] sm:$0xff]
  %v934 = vld [vmem:[%s3 + $0x68] sm:$0xff]
  %v935 = vld [vmem:[%s3 + $0x70] sm:$0xff]
  %v936 = vld [vmem:[%s3 + $0x78] sm:$0xff]
  %937 = vmatprep.subr.mxu0 0.0
  %938 = vmatpush1.msra.mxu0 %v936
  %939 = vmatprep.subr.mxu0 0.0
  %940 = vmatpush1.msra.mxu0 %v935
  %941 = vmatprep.subr.mxu0 0.0
  %942 = vmatpush1.msra.mxu0 %v934
  %943 = vmatprep.subr.mxu0 0.0
  %944 = vmatpush1.msra.mxu0 %v933
  %945 = vmatprep.subr.mxu0 0.0
  %946 = vmatpush1.msra.mxu0 %v932
  %947 = vmatprep.subr.mxu0 0.0
  %948 = vmatpush1.msra.mxu0 %v931
  %949 = vmatprep.subr.mxu0 0.0
  %950 = vmatpush1.msra.mxu0 %v930
  %951 = vmatprep.subr.mxu0 0.0
  %952 = vmatpush1.msra.mxu0 %v929
  %953 = vmatprep.subr.mxu0 0.0
  %954 = vmatpush1.msra.mxu0 %v928
  %955 = vmatprep.subr.mxu0 0.0
  %956 = vmatpush1.msra.mxu0 %v927
  %957 = vmatprep.subr.mxu0 0.0
  %958 = vmatpush1.msra.mxu0 %v926
  %959 = vmatprep.subr.mxu0 0.0
  %960 = vmatpush1.msra.mxu0 %v925
  %961 = vmatprep.subr.mxu0 0.0
  %962 = vmatpush1.msra.mxu0 %v924
  %963 = vmatprep.subr.mxu0 0.0
  %964 = vmatpush1.msra.mxu0 %v923
  %965 = vmatprep.subr.mxu0 0.0
  %966 = vmatpush1.msra.mxu0 %v922
  %967 = vmatprep.subr.mxu0 0.0
  %968 = vmatpush1.msra.mxu0 %v921
  %969 = vmatprep.subr.mxu0 0.0
  %970 = vmatpush2.msra.mxu0 0.0
  %971 = vmatprep.subr.mxu0 0.0
  %972 = vmatpush2.msra.mxu0 0.0
  %973 = vmatprep.subr.mxu0 0.0
  %974 = vmatpush2.msra.mxu0 0.0
  %975 = vmatprep.subr.mxu0 0.0
  %976 = vmatpush2.msra.mxu0 0.0
  %977 = vmatprep.subr.mxu0 0.0
  %978 = vmatpush2.msra.mxu0 0.0
  %979 = vmatprep.subr.mxu0 0.0
  %980 = vmatpush2.msra.mxu0 0.0
  %981 = vmatprep.subr.mxu0 0.0
  %982 = vmatpush2.msra.mxu0 0.0
  %983 = vmatprep.subr.mxu0 0.0
  %984 = vmatpush2.msra.mxu0 0.0
  %985 = vmatprep.subr.mxu0 0.0
  %986 = vmatpush2.msra.mxu0 0.0
  %987 = vmatprep.subr.mxu0 0.0
  %988 = vmatpush2.msra.mxu0 0.0
  %989 = vmatprep.subr.mxu0 0.0
  %990 = vmatpush2.msra.mxu0 0.0
  %991 = vmatprep.subr.mxu0 0.0
  %992 = vmatpush2.msra.mxu0 0.0
  %993 = vmatprep.subr.mxu0 0.0
  %994 = vmatpush2.msra.mxu0 0.0
  %995 = vmatprep.subr.mxu0 0.0
  %996 = vmatpush2.msra.mxu0 0.0
  %997 = vmatprep.subr.mxu0 0.0
  %998 = vmatpush2.msra.mxu0 0.0
  %999 = vmatprep.subr.mxu0 0.0
  %1000 = vmatpush2.msra.mxu0 0.0
  %1001 = vmatprep.mubr.f32.mxu0 0.0
  %1002 = vmatmul.mubr.f32.gmra.mxu0 %v915
  %v1003 = vpop.f32.mrf.mxu0
  %v1004 = vadd.f32 0.0, %v1003
  %v1005 = vpop.f32.mrf.mxu0
  %1006 = vmatprep.mubr.f32.mxu0 0.0
  %1007 = vmatmul.mubr.f32.gmra.mxu0 %v916
  %v1008 = vpop.f32.mrf.mxu0
  %v1009 = vadd.f32 0.0, %v1008
  %v1010 = vpop.f32.mrf.mxu0
  %1011 = vdwg.mxu0
  %v1012 = vadd.f32 %v919, %v1004
  %v1013 = vadd.f32 %v920, %v1009
  %v1014 = vtanh.pop %v1012
  %v1015 = vtanh.pop %v1013
  %1016 = vst [vmem:[%s299] sm:$0xff] %v1014
  %1017 = vst [vmem:[%s295 + $0x8] sm:$0xff] %v1015
  %v1018 = vld [vmem:[#allocation5] sm:$0xff]
  %v1019 = vld [vmem:[#allocation5 + $0x10] sm:$0xff]
  %v1020 = vld [vmem:[#allocation5 + $0x20] sm:$0xff]
  %v1021 = vld [vmem:[#allocation5 + $0x30] sm:$0xff]
  %v1022 = vld [vmem:[#allocation5 + $0x40] sm:$0xff]
  %v1023 = vld [vmem:[#allocation5 + $0x50] sm:$0xff]
  %v1024 = vld [vmem:[#allocation5 + $0x60] sm:$0xff]
  %v1025 = vld [vmem:[#allocation5 + $0x70] sm:$0xff]
  %v1026 = vld [vmem:[#allocation5 + $0x8] sm:$0xff]
  %v1027 = vld [vmem:[#allocation5 + $0x18] sm:$0xff]
  %v1028 = vld [vmem:[#allocation5 + $0x28] sm:$0xff]
  %v1029 = vld [vmem:[#allocation5 + $0x38] sm:$0xff]
  %v1030 = vld [vmem:[#allocation5 + $0x48] sm:$0xff]
  %v1031 = vld [vmem:[#allocation5 + $0x58] sm:$0xff]
  %v1032 = vld [vmem:[#allocation5 + $0x68] sm:$0xff]
  %v1033 = vld [vmem:[#allocation5 + $0x78] sm:$0xff]
  %1034 = vrot.lane.b32.xlu0 %v1026, 32
  %v1035 = vpop.permute.xlu0 %1034
  %1036 = vrot.lane.b32.xlu0 %v1027, 32
  %v1037 = vpop.permute.xlu0 %1036
  %1038 = vrot.lane.b32.xlu0 %v1028, 32
  %v1039 = vpop.permute.xlu0 %1038
  %1040 = vrot.lane.b32.xlu0 %v1029, 32
  %v1041 = vpop.permute.xlu0 %1040
  %1042 = vrot.lane.b32.xlu0 %v1030, 32
  %v1043 = vpop.permute.xlu0 %1042
  %1044 = vrot.lane.b32.xlu0 %v1031, 32
  %v1045 = vpop.permute.xlu0 %1044
  %1046 = vrot.lane.b32.xlu0 %v1032, 32
  %v1047 = vpop.permute.xlu0 %1046
  %1048 = vrot.lane.b32.xlu0 %v1033, 32
  %v1049 = vpop.permute.xlu0 %1048
  %v1050 = vlaneseq
  %v1051 = vand.u32 %v1050, 127
  %vm1052 = vcmp.lt.s32.totalorder %v1051, 32
  %vm1053 = vcmp.lt.s32.totalorder %v1051, 64
  %v1054 = vsel %vm1053, %v1035, 0.0
  %v1055 = vsel %vm1053, %v1037, 0.0
  %v1056 = vsel %vm1053, %v1039, 0.0
  %v1057 = vsel %vm1053, %v1041, 0.0
  %v1058 = vsel %vm1053, %v1043, 0.0
  %v1059 = vsel %vm1053, %v1045, 0.0
  %v1060 = vsel %vm1053, %v1047, 0.0
  %v1061 = vsel %vm1053, %v1049, 0.0
  %v1062 = vsel %vm1052, %v1018, %v1054
  %v1063 = vsel %vm1052, %v1019, %v1055
  %v1064 = vsel %vm1052, %v1020, %v1056
  %v1065 = vsel %vm1052, %v1021, %v1057
  %v1066 = vsel %vm1052, %v1022, %v1058
  %v1067 = vsel %vm1052, %v1023, %v1059
  %v1068 = vsel %vm1052, %v1024, %v1060
  %v1069 = vsel %vm1052, %v1025, %v1061
  %1070 = vst [vmem:[#allocation7] sm:$0xff] %v1062
  %1071 = vst [vmem:[#allocation7 + $0x8] sm:$0xff] %v1063
  %1072 = vst [vmem:[#allocation7 + $0x10] sm:$0xff] %v1064
  %1073 = vst [vmem:[#allocation7 + $0x18] sm:$0xff] %v1065
  %1074 = vst [vmem:[#allocation7 + $0x20] sm:$0xff] %v1066
  %1075 = vst [vmem:[#allocation7 + $0x28] sm:$0xff] %v1067
  %1076 = vst [vmem:[#allocation7 + $0x30] sm:$0xff] %v1068
  %1077 = vst [vmem:[#allocation7 + $0x38] sm:$0xff] %v1069
  %v1078 = vld [vmem:[#allocation7] sm:$0xff]
  %v1079 = vld [vmem:[#allocation7 + $0x8] sm:$0xff]
  %v1080 = vld [vmem:[#allocation7 + $0x10] sm:$0xff]
  %v1081 = vld [vmem:[#allocation7 + $0x18] sm:$0xff]
  %v1082 = vld [vmem:[#allocation7 + $0x20] sm:$0xff]
  %v1083 = vld [vmem:[#allocation7 + $0x28] sm:$0xff]
  %v1084 = vld [vmem:[#allocation7 + $0x30] sm:$0xff]
  %v1085 = vld [vmem:[#allocation7 + $0x38] sm:$0xff]
  %v1086 = vld [vmem:[%s4] sm:$0xff]
  %v1087 = vld [vmem:[%s4 + $0x8] sm:$0xff]
  %v1088 = vld [vmem:[%s4 + $0x10] sm:$0xff]
  %v1089 = vld [vmem:[%s4 + $0x18] sm:$0xff]
  %v1090 = vld [vmem:[%s4 + $0x20] sm:$0xff]
  %v1091 = vld [vmem:[%s4 + $0x28] sm:$0xff]
  %v1092 = vld [vmem:[%s4 + $0x30] sm:$0xff]
  %v1093 = vld [vmem:[%s4 + $0x38] sm:$0xff]
  %v1094 = vld [vmem:[%s4 + $0x40] sm:$0xff]
  %v1095 = vld [vmem:[%s4 + $0x48] sm:$0xff]
  %v1096 = vld [vmem:[%s4 + $0x50] sm:$0xff]
  %v1097 = vld [vmem:[%s4 + $0x58] sm:$0xff]
  %v1098 = vld [vmem:[%s4 + $0x60] sm:$0xff]
  %v1099 = vld [vmem:[%s4 + $0x68] sm:$0xff]
  %v1100 = vld [vmem:[%s4 + $0x70] sm:$0xff]
  %v1101 = vld [vmem:[%s4 + $0x78] sm:$0xff]
  %v1102 = vld [vmem:[%s5] sm:$0x1]
  %v1104 = vlaneseq
  %v1105 = vshrl.u32 %v1104, 7
  %v1106 = vsub.s32 0, %v1105
  %v1107 = vrot.slane %v1102, %v1106
  %1109 = vmatprep.subr.mxu0 0.0
  %1110 = vmatpush1.msra.mxu0 %v1101
  %1111 = vmatprep.subr.mxu0 0.0
  %1112 = vmatpush1.msra.mxu0 %v1100
  %1113 = vmatprep.subr.mxu0 0.0
  %1114 = vmatpush1.msra.mxu0 %v1099
  %1115 = vmatprep.subr.mxu0 0.0
  %1116 = vmatpush1.msra.mxu0 %v1098
  %1117 = vmatprep.subr.mxu0 0.0
  %1118 = vmatpush1.msra.mxu0 %v1097
  %1119 = vmatprep.subr.mxu0 0.0
  %1120 = vmatpush1.msra.mxu0 %v1096
  %1121 = vmatprep.subr.mxu0 0.0
  %1122 = vmatpush1.msra.mxu0 %v1095
  %1123 = vmatprep.subr.mxu0 0.0
  %1124 = vmatpush1.msra.mxu0 %v1094
  %1125 = vmatprep.subr.mxu0 0.0
  %1126 = vmatpush1.msra.mxu0 %v1093
  %1127 = vmatprep.subr.mxu0 0.0
  %1128 = vmatpush1.msra.mxu0 %v1092
  %1129 = vmatprep.subr.mxu0 0.0
  %1130 = vmatpush1.msra.mxu0 %v1091
  %1131 = vmatprep.subr.mxu0 0.0
  %1132 = vmatpush1.msra.mxu0 %v1090
  %1133 = vmatprep.subr.mxu0 0.0
  %1134 = vmatpush1.msra.mxu0 %v1089
  %1135 = vmatprep.subr.mxu0 0.0
  %1136 = vmatpush1.msra.mxu0 %v1088
  %1137 = vmatprep.subr.mxu0 0.0
  %1138 = vmatpush1.msra.mxu0 %v1087
  %1139 = vmatprep.subr.mxu0 0.0
  %1140 = vmatpush1.msra.mxu0 %v1086
  %1141 = vmatprep.subr.mxu0 0.0
  %1142 = vmatpush2.msra.mxu0 0.0
  %1143 = vmatprep.subr.mxu0 0.0
  %1144 = vmatpush2.msra.mxu0 0.0
  %1145 = vmatprep.subr.mxu0 0.0
  %1146 = vmatpush2.msra.mxu0 0.0
  %1147 = vmatprep.subr.mxu0 0.0
  %1148 = vmatpush2.msra.mxu0 0.0
  %1149 = vmatprep.subr.mxu0 0.0
  %1150 = vmatpush2.msra.mxu0 0.0
  %1151 = vmatprep.subr.mxu0 0.0
  %1152 = vmatpush2.msra.mxu0 0.0
  %1153 = vmatprep.subr.mxu0 0.0
  %1154 = vmatpush2.msra.mxu0 0.0
  %1155 = vmatprep.subr.mxu0 0.0
  %1156 = vmatpush2.msra.mxu0 0.0
  %1157 = vmatprep.subr.mxu0 0.0
  %1158 = vmatpush2.msra.mxu0 0.0
  %1159 = vmatprep.subr.mxu0 0.0
  %1160 = vmatpush2.msra.mxu0 0.0
  %1161 = vmatprep.subr.mxu0 0.0
  %1162 = vmatpush2.msra.mxu0 0.0
  %1163 = vmatprep.subr.mxu0 0.0
  %1164 = vmatpush2.msra.mxu0 0.0
  %1165 = vmatprep.subr.mxu0 0.0
  %1166 = vmatpush2.msra.mxu0 0.0
  %1167 = vmatprep.subr.mxu0 0.0
  %1168 = vmatpush2.msra.mxu0 0.0
  %1169 = vmatprep.subr.mxu0 0.0
  %1170 = vmatpush2.msra.mxu0 0.0
  %1171 = vmatprep.subr.mxu0 0.0
  %1172 = vmatpush2.msra.mxu0 0.0
  %1173 = vmatprep.mubr.f32.mxu0 0.0
  %1174 = vmatmul.mubr.f32.gmra.mxu0 %v1078
  %v1175 = vpop.f32.mrf.mxu0
  %v1176 = vadd.f32 %v1107, %v1175
  %v1177 = vpop.f32.mrf.mxu0
  %1178 = vmatprep.mubr.f32.mxu0 0.0
  %1179 = vmatmul.mubr.f32.gmra.mxu0 %v1079
  %v1180 = vpop.f32.mrf.mxu0
  %v1181 = vadd.f32 %v1107, %v1180
  %v1182 = vpop.f32.mrf.mxu0
  %1183 = vmatprep.mubr.f32.mxu0 0.0
  %1184 = vmatmul.mubr.f32.gmra.mxu0 %v1080
  %v1185 = vpop.f32.mrf.mxu0
  %v1186 = vadd.f32 %v1107, %v1185
  %v1187 = vpop.f32.mrf.mxu0
  %1188 = vmatprep.mubr.f32.mxu0 0.0
  %1189 = vmatmul.mubr.f32.gmra.mxu0 %v1081
  %v1190 = vpop.f32.mrf.mxu0
  %v1191 = vadd.f32 %v1107, %v1190
  %v1192 = vpop.f32.mrf.mxu0
  %1193 = vmatprep.mubr.f32.mxu0 0.0
  %1194 = vmatmul.mubr.f32.gmra.mxu0 %v1082
  %v1195 = vpop.f32.mrf.mxu0
  %v1196 = vadd.f32 %v1107, %v1195
  %v1197 = vpop.f32.mrf.mxu0
  %1198 = vmatprep.mubr.f32.mxu0 0.0
  %1199 = vmatmul.mubr.f32.gmra.mxu0 %v1083
  %v1200 = vpop.f32.mrf.mxu0
  %v1201 = vadd.f32 %v1107, %v1200
  %v1202 = vpop.f32.mrf.mxu0
  %1203 = vmatprep.mubr.f32.mxu0 0.0
  %1204 = vmatmul.mubr.f32.gmra.mxu0 %v1084
  %v1205 = vpop.f32.mrf.mxu0
  %v1206 = vadd.f32 %v1107, %v1205
  %v1207 = vpop.f32.mrf.mxu0
  %1208 = vmatprep.mubr.f32.mxu0 0.0
  %1209 = vmatmul.mubr.f32.gmra.mxu0 %v1085
  %v1210 = vpop.f32.mrf.mxu0
  %v1211 = vadd.f32 %v1107, %v1210
  %v1212 = vpop.f32.mrf.mxu0
  %1213 = vdwg.mxu0
  %1214 = vst [vmem:[#allocation4] sm:$0xff] %v1176
  %1215 = vst [vmem:[#allocation4 + $0x8] sm:$0xff] %v1181
  %1216 = vst [vmem:[#allocation4 + $0x10] sm:$0xff] %v1186
  %1217 = vst [vmem:[#allocation4 + $0x18] sm:$0xff] %v1191
  %1218 = vst [vmem:[#allocation4 + $0x20] sm:$0xff] %v1196
  %1219 = vst [vmem:[#allocation4 + $0x28] sm:$0xff] %v1201
  %1220 = vst [vmem:[#allocation4 + $0x30] sm:$0xff] %v1206
  %1221 = vst [vmem:[#allocation4 + $0x38] sm:$0xff] %v1211
  %v1222 = vld [vmem:[#allocation4] sm:$0xff]
  %s1223 = scalar_lea.vmem [#allocation4], 56
  %v1224 = vld [vmem:[%s1223] sm:$0xff]
  %v1225 = vld [vmem:[%s6] sm:$0xff]
  %v1226 = vld [vmem:[%s6 + $0x8] sm:$0xff]
  %v1227 = vld [vmem:[%s6 + $0x10] sm:$0xff]
  %v1228 = vld [vmem:[%s6 + $0x18] sm:$0xff]
  %v1229 = vld [vmem:[%s6 + $0x20] sm:$0xff]
  %v1230 = vld [vmem:[%s6 + $0x28] sm:$0xff]
  %v1231 = vld [vmem:[%s6 + $0x30] sm:$0xff]
  %v1232 = vld [vmem:[%s6 + $0x38] sm:$0xff]
  %v1233 = vld [vmem:[%s6 + $0x40] sm:$0xff]
  %v1234 = vld [vmem:[%s6 + $0x48] sm:$0xff]
  %v1235 = vld [vmem:[%s6 + $0x50] sm:$0xff]
  %v1236 = vld [vmem:[%s6 + $0x58] sm:$0xff]
  %v1237 = vld [vmem:[%s6 + $0x60] sm:$0xff]
  %v1238 = vld [vmem:[%s6 + $0x68] sm:$0xff]
  %v1239 = vld [vmem:[%s6 + $0x70] sm:$0xff]
  %v1240 = vld [vmem:[%s6 + $0x78] sm:$0xff]
  %1241 = vmatprep.subr.mxu0 0.0
  %1242 = vmatpush1.msra.mxu0 %v1240
  %1243 = vmatprep.subr.mxu0 0.0
  %1244 = vmatpush1.msra.mxu0 %v1239
  %1245 = vmatprep.subr.mxu0 0.0
  %1246 = vmatpush1.msra.mxu0 %v1238
  %1247 = vmatprep.subr.mxu0 0.0
  %1248 = vmatpush1.msra.mxu0 %v1237
  %1249 = vmatprep.subr.mxu0 0.0
  %1250 = vmatpush1.msra.mxu0 %v1236
  %1251 = vmatprep.subr.mxu0 0.0
  %1252 = vmatpush1.msra.mxu0 %v1235
  %1253 = vmatprep.subr.mxu0 0.0
  %1254 = vmatpush1.msra.mxu0 %v1234
  %1255 = vmatprep.subr.mxu0 0.0
  %1256 = vmatpush1.msra.mxu0 %v1233
  %1257 = vmatprep.subr.mxu0 0.0
  %1258 = vmatpush1.msra.mxu0 %v1232
  %1259 = vmatprep.subr.mxu0 0.0
  %1260 = vmatpush1.msra.mxu0 %v1231
  %1261 = vmatprep.subr.mxu0 0.0
  %1262 = vmatpush1.msra.mxu0 %v1230
  %1263 = vmatprep.subr.mxu0 0.0
  %1264 = vmatpush1.msra.mxu0 %v1229
  %1265 = vmatprep.subr.mxu0 0.0
  %1266 = vmatpush1.msra.mxu0 %v1228
  %1267 = vmatprep.subr.mxu0 0.0
  %1268 = vmatpush1.msra.mxu0 %v1227
  %1269 = vmatprep.subr.mxu0 0.0
  %1270 = vmatpush1.msra.mxu0 %v1226
  %1271 = vmatprep.subr.mxu0 0.0
  %1272 = vmatpush1.msra.mxu0 %v1225
  %1273 = vmatprep.subr.mxu0 0.0
  %1274 = vmatpush2.msra.mxu0 0.0
  %1275 = vmatprep.subr.mxu0 0.0
  %1276 = vmatpush2.msra.mxu0 0.0
  %1277 = vmatprep.subr.mxu0 0.0
  %1278 = vmatpush2.msra.mxu0 0.0
  %1279 = vmatprep.subr.mxu0 0.0
  %1280 = vmatpush2.msra.mxu0 0.0
  %1281 = vmatprep.subr.mxu0 0.0
  %1282 = vmatpush2.msra.mxu0 0.0
  %1283 = vmatprep.subr.mxu0 0.0
  %1284 = vmatpush2.msra.mxu0 0.0
  %1285 = vmatprep.subr.mxu0 0.0
  %1286 = vmatpush2.msra.mxu0 0.0
  %1287 = vmatprep.subr.mxu0 0.0
  %1288 = vmatpush2.msra.mxu0 0.0
  %1289 = vmatprep.subr.mxu0 0.0
  %1290 = vmatpush2.msra.mxu0 0.0
  %1291 = vmatprep.subr.mxu0 0.0
  %1292 = vmatpush2.msra.mxu0 0.0
  %1293 = vmatprep.subr.mxu0 0.0
  %1294 = vmatpush2.msra.mxu0 0.0
  %1295 = vmatprep.subr.mxu0 0.0
  %1296 = vmatpush2.msra.mxu0 0.0
  %1297 = vmatprep.subr.mxu0 0.0
  %1298 = vmatpush2.msra.mxu0 0.0
  %1299 = vmatprep.subr.mxu0 0.0
  %1300 = vmatpush2.msra.mxu0 0.0
  %1301 = vmatprep.subr.mxu0 0.0
  %1302 = vmatpush2.msra.mxu0 0.0
  %1303 = vmatprep.subr.mxu0 0.0
  %1304 = vmatpush2.msra.mxu0 0.0
  %1305 = vmatprep.mubr.f32.mxu0 0.0
  %1306 = vmatmul.mubr.f32.gmra.mxu0 0.0
  %v1307 = vpop.f32.mrf.mxu0
  %v1308 = vadd.f32 0.0, %v1307
  %v1309 = vpop.f32.mrf.mxu0
  %1310 = vmatprep.mubr.f32.mxu0 0.0
  %1311 = vmatmul.mubr.f32.gmra.mxu0 0.0
  %v1312 = vpop.f32.mrf.mxu0
  %v1313 = vadd.f32 0.0, %v1312
  %v1314 = vpop.f32.mrf.mxu0
  %1315 = vdwg.mxu0
  %v1316 = vadd.f32 %v1222, %v1308
  %v1317 = vadd.f32 %v1224, %v1313
  %v1318 = vtanh.pop %v1316
  %v1319 = vtanh.pop %v1317
  %s1320 = smul.addr %s293, 8
  %s1321 = scalar_lea.vmem [#allocation6], %s1320
  %1322 = vst [vmem:[%s1321] sm:$0xff] %v1318
  %s1323 = smul.addr %s297, 8
  %s1324 = scalar_lea.vmem [#allocation6], %s1323
  %1325 = vst [vmem:[%s1324 + $0x8] sm:$0xff] %v1319
  %s1326 = scalar_lea.vmem [#allocation4], 8
  %v1327 = vld [vmem:[%s1326] sm:$0xff]
  %s1328 = scalar_lea.vmem [#allocation4], 48
  %v1329 = vld [vmem:[%s1328] sm:$0xff]
  %v1330 = vld [vmem:[%s6] sm:$0xff]
  %v1331 = vld [vmem:[%s6 + $0x8] sm:$0xff]
  %v1332 = vld [vmem:[%s6 + $0x10] sm:$0xff]
  %v1333 = vld [vmem:[%s6 + $0x18] sm:$0xff]
  %v1334 = vld [vmem:[%s6 + $0x20] sm:$0xff]
  %v1335 = vld [vmem:[%s6 + $0x28] sm:$0xff]
  %v1336 = vld [vmem:[%s6 + $0x30] sm:$0xff]
  %v1337 = vld [vmem:[%s6 + $0x38] sm:$0xff]
  %v1338 = vld [vmem:[%s6 + $0x40] sm:$0xff]
  %v1339 = vld [vmem:[%s6 + $0x48] sm:$0xff]
  %v1340 = vld [vmem:[%s6 + $0x50] sm:$0xff]
  %v1341 = vld [vmem:[%s6 + $0x58] sm:$0xff]
  %v1342 = vld [vmem:[%s6 + $0x60] sm:$0xff]
  %v1343 = vld [vmem:[%s6 + $0x68] sm:$0xff]
  %v1344 = vld [vmem:[%s6 + $0x70] sm:$0xff]
  %v1345 = vld [vmem:[%s6 + $0x78] sm:$0xff]
  %1346 = vmatprep.subr.mxu0 0.0
  %1347 = vmatpush1.msra.mxu0 %v1345
  %1348 = vmatprep.subr.mxu0 0.0
  %1349 = vmatpush1.msra.mxu0 %v1344
  %1350 = vmatprep.subr.mxu0 0.0
  %1351 = vmatpush1.msra.mxu0 %v1343
  %1352 = vmatprep.subr.mxu0 0.0
  %1353 = vmatpush1.msra.mxu0 %v1342
  %1354 = vmatprep.subr.mxu0 0.0
  %1355 = vmatpush1.msra.mxu0 %v1341
  %1356 = vmatprep.subr.mxu0 0.0
  %1357 = vmatpush1.msra.mxu0 %v1340
  %1358 = vmatprep.subr.mxu0 0.0
  %1359 = vmatpush1.msra.mxu0 %v1339
  %1360 = vmatprep.subr.mxu0 0.0
  %1361 = vmatpush1.msra.mxu0 %v1338
  %1362 = vmatprep.subr.mxu0 0.0
  %1363 = vmatpush1.msra.mxu0 %v1337
  %1364 = vmatprep.subr.mxu0 0.0
  %1365 = vmatpush1.msra.mxu0 %v1336
  %1366 = vmatprep.subr.mxu0 0.0
  %1367 = vmatpush1.msra.mxu0 %v1335
  %1368 = vmatprep.subr.mxu0 0.0
  %1369 = vmatpush1.msra.mxu0 %v1334
  %1370 = vmatprep.subr.mxu0 0.0
  %1371 = vmatpush1.msra.mxu0 %v1333
  %1372 = vmatprep.subr.mxu0 0.0
  %1373 = vmatpush1.msra.mxu0 %v1332
  %1374 = vmatprep.subr.mxu0 0.0
  %1375 = vmatpush1.msra.mxu0 %v1331
  %1376 = vmatprep.subr.mxu0 0.0
  %1377 = vmatpush1.msra.mxu0 %v1330
  %1378 = vmatprep.subr.mxu0 0.0
  %1379 = vmatpush2.msra.mxu0 0.0
  %1380 = vmatprep.subr.mxu0 0.0
  %1381 = vmatpush2.msra.mxu0 0.0
  %1382 = vmatprep.subr.mxu0 0.0
  %1383 = vmatpush2.msra.mxu0 0.0
  %1384 = vmatprep.subr.mxu0 0.0
  %1385 = vmatpush2.msra.mxu0 0.0
  %1386 = vmatprep.subr.mxu0 0.0
  %1387 = vmatpush2.msra.mxu0 0.0
  %1388 = vmatprep.subr.mxu0 0.0
  %1389 = vmatpush2.msra.mxu0 0.0
  %1390 = vmatprep.subr.mxu0 0.0
  %1391 = vmatpush2.msra.mxu0 0.0
  %1392 = vmatprep.subr.mxu0 0.0
  %1393 = vmatpush2.msra.mxu0 0.0
  %1394 = vmatprep.subr.mxu0 0.0
  %1395 = vmatpush2.msra.mxu0 0.0
  %1396 = vmatprep.subr.mxu0 0.0
  %1397 = vmatpush2.msra.mxu0 0.0
  %1398 = vmatprep.subr.mxu0 0.0
  %1399 = vmatpush2.msra.mxu0 0.0
  %1400 = vmatprep.subr.mxu0 0.0
  %1401 = vmatpush2.msra.mxu0 0.0
  %1402 = vmatprep.subr.mxu0 0.0
  %1403 = vmatpush2.msra.mxu0 0.0
  %1404 = vmatprep.subr.mxu0 0.0
  %1405 = vmatpush2.msra.mxu0 0.0
  %1406 = vmatprep.subr.mxu0 0.0
  %1407 = vmatpush2.msra.mxu0 0.0
  %1408 = vmatprep.subr.mxu0 0.0
  %1409 = vmatpush2.msra.mxu0 0.0
  %1410 = vmatprep.mubr.f32.mxu0 0.0
  %1411 = vmatmul.mubr.f32.gmra.mxu0 %v1318
  %v1412 = vpop.f32.mrf.mxu0
  %v1413 = vadd.f32 0.0, %v1412
  %v1414 = vpop.f32.mrf.mxu0
  %1415 = vmatprep.mubr.f32.mxu0 0.0
  %1416 = vmatmul.mubr.f32.gmra.mxu0 %v1319
  %v1417 = vpop.f32.mrf.mxu0
  %v1418 = vadd.f32 0.0, %v1417
  %v1419 = vpop.f32.mrf.mxu0
  %1420 = vdwg.mxu0
  %v1421 = vadd.f32 %v1327, %v1413
  %v1422 = vadd.f32 %v1329, %v1418
  %v1423 = vtanh.pop %v1421
  %v1424 = vtanh.pop %v1422
  %s1425 = smul.addr %s400, 8
  %s1426 = scalar_lea.vmem [#allocation6], %s1425
  %1427 = vst [vmem:[%s1426] sm:$0xff] %v1423
  %s1428 = smul.addr %s404, 8
  %s1429 = scalar_lea.vmem [#allocation6], %s1428
  %1430 = vst [vmem:[%s1429 + $0x8] sm:$0xff] %v1424
  %s1431 = scalar_lea.vmem [#allocation4], 16
  %v1432 = vld [vmem:[%s1431] sm:$0xff]
  %s1433 = scalar_lea.vmem [#allocation4], 40
  %v1434 = vld [vmem:[%s1433] sm:$0xff]
  %v1435 = vld [vmem:[%s6] sm:$0xff]
  %v1436 = vld [vmem:[%s6 + $0x8] sm:$0xff]
  %v1437 = vld [vmem:[%s6 + $0x10] sm:$0xff]
  %v1438 = vld [vmem:[%s6 + $0x18] sm:$0xff]
  %v1439 = vld [vmem:[%s6 + $0x20] sm:$0xff]
  %v1440 = vld [vmem:[%s6 + $0x28] sm:$0xff]
  %v1441 = vld [vmem:[%s6 + $0x30] sm:$0xff]
  %v1442 = vld [vmem:[%s6 + $0x38] sm:$0xff]
  %v1443 = vld [vmem:[%s6 + $0x40] sm:$0xff]
  %v1444 = vld [vmem:[%s6 + $0x48] sm:$0xff]
  %v1445 = vld [vmem:[%s6 + $0x50] sm:$0xff]
  %v1446 = vld [vmem:[%s6 + $0x58] sm:$0xff]
  %v1447 = vld [vmem:[%s6 + $0x60] sm:$0xff]
  %v1448 = vld [vmem:[%s6 + $0x68] sm:$0xff]
  %v1449 = vld [vmem:[%s6 + $0x70] sm:$0xff]
  %v1450 = vld [vmem:[%s6 + $0x78] sm:$0xff]
  %1451 = vmatprep.subr.mxu0 0.0
  %1452 = vmatpush1.msra.mxu0 %v1450
  %1453 = vmatprep.subr.mxu0 0.0
  %1454 = vmatpush1.msra.mxu0 %v1449
  %1455 = vmatprep.subr.mxu0 0.0
  %1456 = vmatpush1.msra.mxu0 %v1448
  %1457 = vmatprep.subr.mxu0 0.0
  %1458 = vmatpush1.msra.mxu0 %v1447
  %1459 = vmatprep.subr.mxu0 0.0
  %1460 = vmatpush1.msra.mxu0 %v1446
  %1461 = vmatprep.subr.mxu0 0.0
  %1462 = vmatpush1.msra.mxu0 %v1445
  %1463 = vmatprep.subr.mxu0 0.0
  %1464 = vmatpush1.msra.mxu0 %v1444
  %1465 = vmatprep.subr.mxu0 0.0
  %1466 = vmatpush1.msra.mxu0 %v1443
  %1467 = vmatprep.subr.mxu0 0.0
  %1468 = vmatpush1.msra.mxu0 %v1442
  %1469 = vmatprep.subr.mxu0 0.0
  %1470 = vmatpush1.msra.mxu0 %v1441
  %1471 = vmatprep.subr.mxu0 0.0
  %1472 = vmatpush1.msra.mxu0 %v1440
  %1473 = vmatprep.subr.mxu0 0.0
  %1474 = vmatpush1.msra.mxu0 %v1439
  %1475 = vmatprep.subr.mxu0 0.0
  %1476 = vmatpush1.msra.mxu0 %v1438
  %1477 = vmatprep.subr.mxu0 0.0
  %1478 = vmatpush1.msra.mxu0 %v1437
  %1479 = vmatprep.subr.mxu0 0.0
  %1480 = vmatpush1.msra.mxu0 %v1436
  %1481 = vmatprep.subr.mxu0 0.0
  %1482 = vmatpush1.msra.mxu0 %v1435
  %1483 = vmatprep.subr.mxu0 0.0
  %1484 = vmatpush2.msra.mxu0 0.0
  %1485 = vmatprep.subr.mxu0 0.0
  %1486 = vmatpush2.msra.mxu0 0.0
  %1487 = vmatprep.subr.mxu0 0.0
  %1488 = vmatpush2.msra.mxu0 0.0
  %1489 = vmatprep.subr.mxu0 0.0
  %1490 = vmatpush2.msra.mxu0 0.0
  %1491 = vmatprep.subr.mxu0 0.0
  %1492 = vmatpush2.msra.mxu0 0.0
  %1493 = vmatprep.subr.mxu0 0.0
  %1494 = vmatpush2.msra.mxu0 0.0
  %1495 = vmatprep.subr.mxu0 0.0
  %1496 = vmatpush2.msra.mxu0 0.0
  %1497 = vmatprep.subr.mxu0 0.0
  %1498 = vmatpush2.msra.mxu0 0.0
  %1499 = vmatprep.subr.mxu0 0.0
  %1500 = vmatpush2.msra.mxu0 0.0
  %1501 = vmatprep.subr.mxu0 0.0
  %1502 = vmatpush2.msra.mxu0 0.0
  %1503 = vmatprep.subr.mxu0 0.0
  %1504 = vmatpush2.msra.mxu0 0.0
  %1505 = vmatprep.subr.mxu0 0.0
  %1506 = vmatpush2.msra.mxu0 0.0
  %1507 = vmatprep.subr.mxu0 0.0
  %1508 = vmatpush2.msra.mxu0 0.0
  %1509 = vmatprep.subr.mxu0 0.0
  %1510 = vmatpush2.msra.mxu0 0.0
  %1511 = vmatprep.subr.mxu0 0.0
  %1512 = vmatpush2.msra.mxu0 0.0
  %1513 = vmatprep.subr.mxu0 0.0
  %1514 = vmatpush2.msra.mxu0 0.0
  %1515 = vmatprep.mubr.f32.mxu0 0.0
  %1516 = vmatmul.mubr.f32.gmra.mxu0 %v1423
  %v1517 = vpop.f32.mrf.mxu0
  %v1518 = vadd.f32 0.0, %v1517
  %v1519 = vpop.f32.mrf.mxu0
  %1520 = vmatprep.mubr.f32.mxu0 0.0
  %1521 = vmatmul.mubr.f32.gmra.mxu0 %v1424
  %v1522 = vpop.f32.mrf.mxu0
  %v1523 = vadd.f32 0.0, %v1522
  %v1524 = vpop.f32.mrf.mxu0
  %1525 = vdwg.mxu0
  %v1526 = vadd.f32 %v1432, %v1518
  %v1527 = vadd.f32 %v1434, %v1523
  %v1528 = vtanh.pop %v1526
  %v1529 = vtanh.pop %v1527
  %s1530 = smul.addr %s507, 8
  %s1531 = scalar_lea.vmem [#allocation6], %s1530
  %1532 = vst [vmem:[%s1531] sm:$0xff] %v1528
  %s1533 = smul.addr %s511, 8
  %s1534 = scalar_lea.vmem [#allocation6], %s1533
  %1535 = vst [vmem:[%s1534 + $0x8] sm:$0xff] %v1529
  %s1536 = scalar_lea.vmem [#allocation4], 24
  %v1537 = vld [vmem:[%s1536] sm:$0xff]
  %s1538 = scalar_lea.vmem [#allocation4], 32
  %v1539 = vld [vmem:[%s1538] sm:$0xff]
  %v1540 = vld [vmem:[%s6] sm:$0xff]
  %v1541 = vld [vmem:[%s6 + $0x8] sm:$0xff]
  %v1542 = vld [vmem:[%s6 + $0x10] sm:$0xff]
  %v1543 = vld [vmem:[%s6 + $0x18] sm:$0xff]
  %v1544 = vld [vmem:[%s6 + $0x20] sm:$0xff]
  %v1545 = vld [vmem:[%s6 + $0x28] sm:$0xff]
  %v1546 = vld [vmem:[%s6 + $0x30] sm:$0xff]
  %v1547 = vld [vmem:[%s6 + $0x38] sm:$0xff]
  %v1548 = vld [vmem:[%s6 + $0x40] sm:$0xff]
  %v1549 = vld [vmem:[%s6 + $0x48] sm:$0xff]
  %v1550 = vld [vmem:[%s6 + $0x50] sm:$0xff]
  %v1551 = vld [vmem:[%s6 + $0x58] sm:$0xff]
  %v1552 = vld [vmem:[%s6 + $0x60] sm:$0xff]
  %v1553 = vld [vmem:[%s6 + $0x68] sm:$0xff]
  %v1554 = vld [vmem:[%s6 + $0x70] sm:$0xff]
  %v1555 = vld [vmem:[%s6 + $0x78] sm:$0xff]
  %1556 = vmatprep.subr.mxu0 0.0
  %1557 = vmatpush1.msra.mxu0 %v1555
  %1558 = vmatprep.subr.mxu0 0.0
  %1559 = vmatpush1.msra.mxu0 %v1554
  %1560 = vmatprep.subr.mxu0 0.0
  %1561 = vmatpush1.msra.mxu0 %v1553
  %1562 = vmatprep.subr.mxu0 0.0
  %1563 = vmatpush1.msra.mxu0 %v1552
  %1564 = vmatprep.subr.mxu0 0.0
  %1565 = vmatpush1.msra.mxu0 %v1551
  %1566 = vmatprep.subr.mxu0 0.0
  %1567 = vmatpush1.msra.mxu0 %v1550
  %1568 = vmatprep.subr.mxu0 0.0
  %1569 = vmatpush1.msra.mxu0 %v1549
  %1570 = vmatprep.subr.mxu0 0.0
  %1571 = vmatpush1.msra.mxu0 %v1548
  %1572 = vmatprep.subr.mxu0 0.0
  %1573 = vmatpush1.msra.mxu0 %v1547
  %1574 = vmatprep.subr.mxu0 0.0
  %1575 = vmatpush1.msra.mxu0 %v1546
  %1576 = vmatprep.subr.mxu0 0.0
  %1577 = vmatpush1.msra.mxu0 %v1545
  %1578 = vmatprep.subr.mxu0 0.0
  %1579 = vmatpush1.msra.mxu0 %v1544
  %1580 = vmatprep.subr.mxu0 0.0
  %1581 = vmatpush1.msra.mxu0 %v1543
  %1582 = vmatprep.subr.mxu0 0.0
  %1583 = vmatpush1.msra.mxu0 %v1542
  %1584 = vmatprep.subr.mxu0 0.0
  %1585 = vmatpush1.msra.mxu0 %v1541
  %1586 = vmatprep.subr.mxu0 0.0
  %1587 = vmatpush1.msra.mxu0 %v1540
  %1588 = vmatprep.subr.mxu0 0.0
  %1589 = vmatpush2.msra.mxu0 0.0
  %1590 = vmatprep.subr.mxu0 0.0
  %1591 = vmatpush2.msra.mxu0 0.0
  %1592 = vmatprep.subr.mxu0 0.0
  %1593 = vmatpush2.msra.mxu0 0.0
  %1594 = vmatprep.subr.mxu0 0.0
  %1595 = vmatpush2.msra.mxu0 0.0
  %1596 = vmatprep.subr.mxu0 0.0
  %1597 = vmatpush2.msra.mxu0 0.0
  %1598 = vmatprep.subr.mxu0 0.0
  %1599 = vmatpush2.msra.mxu0 0.0
  %1600 = vmatprep.subr.mxu0 0.0
  %1601 = vmatpush2.msra.mxu0 0.0
  %1602 = vmatprep.subr.mxu0 0.0
  %1603 = vmatpush2.msra.mxu0 0.0
  %1604 = vmatprep.subr.mxu0 0.0
  %1605 = vmatpush2.msra.mxu0 0.0
  %1606 = vmatprep.subr.mxu0 0.0
  %1607 = vmatpush2.msra.mxu0 0.0
  %1608 = vmatprep.subr.mxu0 0.0
  %1609 = vmatpush2.msra.mxu0 0.0
  %1610 = vmatprep.subr.mxu0 0.0
  %1611 = vmatpush2.msra.mxu0 0.0
  %1612 = vmatprep.subr.mxu0 0.0
  %1613 = vmatpush2.msra.mxu0 0.0
  %1614 = vmatprep.subr.mxu0 0.0
  %1615 = vmatpush2.msra.mxu0 0.0
  %1616 = vmatprep.subr.mxu0 0.0
  %1617 = vmatpush2.msra.mxu0 0.0
  %1618 = vmatprep.subr.mxu0 0.0
  %1619 = vmatpush2.msra.mxu0 0.0
  %1620 = vmatprep.mubr.f32.mxu0 0.0
  %1621 = vmatmul.mubr.f32.gmra.mxu0 %v1528
  %v1622 = vpop.f32.mrf.mxu0
  %v1623 = vadd.f32 0.0, %v1622
  %v1624 = vpop.f32.mrf.mxu0
  %1625 = vmatprep.mubr.f32.mxu0 0.0
  %1626 = vmatmul.mubr.f32.gmra.mxu0 %v1529
  %v1627 = vpop.f32.mrf.mxu0
  %v1628 = vadd.f32 0.0, %v1627
  %v1629 = vpop.f32.mrf.mxu0
  %1630 = vdwg.mxu0
  %v1631 = vadd.f32 %v1537, %v1623
  %v1632 = vadd.f32 %v1539, %v1628
  %v1633 = vtanh.pop %v1631
  %v1634 = vtanh.pop %v1632
  %s1635 = smul.addr %s614, 8
  %s1636 = scalar_lea.vmem [#allocation6], %s1635
  %1637 = vst [vmem:[%s1636] sm:$0xff] %v1633
  %s1638 = smul.addr %s618, 8
  %s1639 = scalar_lea.vmem [#allocation6], %s1638
  %1640 = vst [vmem:[%s1639 + $0x8] sm:$0xff] %v1634
  %v1641 = vld [vmem:[%s1538] sm:$0xff]
  %v1642 = vld [vmem:[%s1536] sm:$0xff]
  %v1643 = vld [vmem:[%s6] sm:$0xff]
  %v1644 = vld [vmem:[%s6 + $0x8] sm:$0xff]
  %v1645 = vld [vmem:[%s6 + $0x10] sm:$0xff]
  %v1646 = vld [vmem:[%s6 + $0x18] sm:$0xff]
  %v1647 = vld [vmem:[%s6 + $0x20] sm:$0xff]
  %v1648 = vld [vmem:[%s6 + $0x28] sm:$0xff]
  %v1649 = vld [vmem:[%s6 + $0x30] sm:$0xff]
  %v1650 = vld [vmem:[%s6 + $0x38] sm:$0xff]
  %v1651 = vld [vmem:[%s6 + $0x40] sm:$0xff]
  %v1652 = vld [vmem:[%s6 + $0x48] sm:$0xff]
  %v1653 = vld [vmem:[%s6 + $0x50] sm:$0xff]
  %v1654 = vld [vmem:[%s6 + $0x58] sm:$0xff]
  %v1655 = vld [vmem:[%s6 + $0x60] sm:$0xff]
  %v1656 = vld [vmem:[%s6 + $0x68] sm:$0xff]
  %v1657 = vld [vmem:[%s6 + $0x70] sm:$0xff]
  %v1658 = vld [vmem:[%s6 + $0x78] sm:$0xff]
  %1659 = vmatprep.subr.mxu0 0.0
  %1660 = vmatpush1.msra.mxu0 %v1658
  %1661 = vmatprep.subr.mxu0 0.0
  %1662 = vmatpush1.msra.mxu0 %v1657
  %1663 = vmatprep.subr.mxu0 0.0
  %1664 = vmatpush1.msra.mxu0 %v1656
  %1665 = vmatprep.subr.mxu0 0.0
  %1666 = vmatpush1.msra.mxu0 %v1655
  %1667 = vmatprep.subr.mxu0 0.0
  %1668 = vmatpush1.msra.mxu0 %v1654
  %1669 = vmatprep.subr.mxu0 0.0
  %1670 = vmatpush1.msra.mxu0 %v1653
  %1671 = vmatprep.subr.mxu0 0.0
  %1672 = vmatpush1.msra.mxu0 %v1652
  %1673 = vmatprep.subr.mxu0 0.0
  %1674 = vmatpush1.msra.mxu0 %v1651
  %1675 = vmatprep.subr.mxu0 0.0
  %1676 = vmatpush1.msra.mxu0 %v1650
  %1677 = vmatprep.subr.mxu0 0.0
  %1678 = vmatpush1.msra.mxu0 %v1649
  %1679 = vmatprep.subr.mxu0 0.0
  %1680 = vmatpush1.msra.mxu0 %v1648
  %1681 = vmatprep.subr.mxu0 0.0
  %1682 = vmatpush1.msra.mxu0 %v1647
  %1683 = vmatprep.subr.mxu0 0.0
  %1684 = vmatpush1.msra.mxu0 %v1646
  %1685 = vmatprep.subr.mxu0 0.0
  %1686 = vmatpush1.msra.mxu0 %v1645
  %1687 = vmatprep.subr.mxu0 0.0
  %1688 = vmatpush1.msra.mxu0 %v1644
  %1689 = vmatprep.subr.mxu0 0.0
  %1690 = vmatpush1.msra.mxu0 %v1643
  %1691 = vmatprep.subr.mxu0 0.0
  %1692 = vmatpush2.msra.mxu0 0.0
  %1693 = vmatprep.subr.mxu0 0.0
  %1694 = vmatpush2.msra.mxu0 0.0
  %1695 = vmatprep.subr.mxu0 0.0
  %1696 = vmatpush2.msra.mxu0 0.0
  %1697 = vmatprep.subr.mxu0 0.0
  %1698 = vmatpush2.msra.mxu0 0.0
  %1699 = vmatprep.subr.mxu0 0.0
  %1700 = vmatpush2.msra.mxu0 0.0
  %1701 = vmatprep.subr.mxu0 0.0
  %1702 = vmatpush2.msra.mxu0 0.0
  %1703 = vmatprep.subr.mxu0 0.0
  %1704 = vmatpush2.msra.mxu0 0.0
  %1705 = vmatprep.subr.mxu0 0.0
  %1706 = vmatpush2.msra.mxu0 0.0
  %1707 = vmatprep.subr.mxu0 0.0
  %1708 = vmatpush2.msra.mxu0 0.0
  %1709 = vmatprep.subr.mxu0 0.0
  %1710 = vmatpush2.msra.mxu0 0.0
  %1711 = vmatprep.subr.mxu0 0.0
  %1712 = vmatpush2.msra.mxu0 0.0
  %1713 = vmatprep.subr.mxu0 0.0
  %1714 = vmatpush2.msra.mxu0 0.0
  %1715 = vmatprep.subr.mxu0 0.0
  %1716 = vmatpush2.msra.mxu0 0.0
  %1717 = vmatprep.subr.mxu0 0.0
  %1718 = vmatpush2.msra.mxu0 0.0
  %1719 = vmatprep.subr.mxu0 0.0
  %1720 = vmatpush2.msra.mxu0 0.0
  %1721 = vmatprep.subr.mxu0 0.0
  %1722 = vmatpush2.msra.mxu0 0.0
  %1723 = vmatprep.mubr.f32.mxu0 0.0
  %1724 = vmatmul.mubr.f32.gmra.mxu0 %v1633
  %v1725 = vpop.f32.mrf.mxu0
  %v1726 = vadd.f32 0.0, %v1725
  %v1727 = vpop.f32.mrf.mxu0
  %1728 = vmatprep.mubr.f32.mxu0 0.0
  %1729 = vmatmul.mubr.f32.gmra.mxu0 %v1634
  %v1730 = vpop.f32.mrf.mxu0
  %v1731 = vadd.f32 0.0, %v1730
  %v1732 = vpop.f32.mrf.mxu0
  %1733 = vdwg.mxu0
  %v1734 = vadd.f32 %v1641, %v1726
  %v1735 = vadd.f32 %v1642, %v1731
  %v1736 = vtanh.pop %v1734
  %v1737 = vtanh.pop %v1735
  %1738 = vst [vmem:[%s1639] sm:$0xff] %v1736
  %1739 = vst [vmem:[%s1636 + $0x8] sm:$0xff] %v1737
  %v1740 = vld [vmem:[%s1433] sm:$0xff]
  %v1741 = vld [vmem:[%s1431] sm:$0xff]
  %v1742 = vld [vmem:[%s6] sm:$0xff]
  %v1743 = vld [vmem:[%s6 + $0x8] sm:$0xff]
  %v1744 = vld [vmem:[%s6 + $0x10] sm:$0xff]
  %v1745 = vld [vmem:[%s6 + $0x18] sm:$0xff]
  %v1746 = vld [vmem:[%s6 + $0x20] sm:$0xff]
  %v1747 = vld [vmem:[%s6 + $0x28] sm:$0xff]
  %v1748 = vld [vmem:[%s6 + $0x30] sm:$0xff]
  %v1749 = vld [vmem:[%s6 + $0x38] sm:$0xff]
  %v1750 = vld [vmem:[%s6 + $0x40] sm:$0xff]
  %v1751 = vld [vmem:[%s6 + $0x48] sm:$0xff]
  %v1752 = vld [vmem:[%s6 + $0x50] sm:$0xff]
  %v1753 = vld [vmem:[%s6 + $0x58] sm:$0xff]
  %v1754 = vld [vmem:[%s6 + $0x60] sm:$0xff]
  %v1755 = vld [vmem:[%s6 + $0x68] sm:$0xff]
  %v1756 = vld [vmem:[%s6 + $0x70] sm:$0xff]
  %v1757 = vld [vmem:[%s6 + $0x78] sm:$0xff]
  %1758 = vmatprep.subr.mxu0 0.0
  %1759 = vmatpush1.msra.mxu0 %v1757
  %1760 = vmatprep.subr.mxu0 0.0
  %1761 = vmatpush1.msra.mxu0 %v1756
  %1762 = vmatprep.subr.mxu0 0.0
  %1763 = vmatpush1.msra.mxu0 %v1755
  %1764 = vmatprep.subr.mxu0 0.0
  %1765 = vmatpush1.msra.mxu0 %v1754
  %1766 = vmatprep.subr.mxu0 0.0
  %1767 = vmatpush1.msra.mxu0 %v1753
  %1768 = vmatprep.subr.mxu0 0.0
  %1769 = vmatpush1.msra.mxu0 %v1752
  %1770 = vmatprep.subr.mxu0 0.0
  %1771 = vmatpush1.msra.mxu0 %v1751
  %1772 = vmatprep.subr.mxu0 0.0
  %1773 = vmatpush1.msra.mxu0 %v1750
  %1774 = vmatprep.subr.mxu0 0.0
  %1775 = vmatpush1.msra.mxu0 %v1749
  %1776 = vmatprep.subr.mxu0 0.0
  %1777 = vmatpush1.msra.mxu0 %v1748
  %1778 = vmatprep.subr.mxu0 0.0
  %1779 = vmatpush1.msra.mxu0 %v1747
  %1780 = vmatprep.subr.mxu0 0.0
  %1781 = vmatpush1.msra.mxu0 %v1746
  %1782 = vmatprep.subr.mxu0 0.0
  %1783 = vmatpush1.msra.mxu0 %v1745
  %1784 = vmatprep.subr.mxu0 0.0
  %1785 = vmatpush1.msra.mxu0 %v1744
  %1786 = vmatprep.subr.mxu0 0.0
  %1787 = vmatpush1.msra.mxu0 %v1743
  %1788 = vmatprep.subr.mxu0 0.0
  %1789 = vmatpush1.msra.mxu0 %v1742
  %1790 = vmatprep.subr.mxu0 0.0
  %1791 = vmatpush2.msra.mxu0 0.0
  %1792 = vmatprep.subr.mxu0 0.0
  %1793 = vmatpush2.msra.mxu0 0.0
  %1794 = vmatprep.subr.mxu0 0.0
  %1795 = vmatpush2.msra.mxu0 0.0
  %1796 = vmatprep.subr.mxu0 0.0
  %1797 = vmatpush2.msra.mxu0 0.0
  %1798 = vmatprep.subr.mxu0 0.0
  %1799 = vmatpush2.msra.mxu0 0.0
  %1800 = vmatprep.subr.mxu0 0.0
  %1801 = vmatpush2.msra.mxu0 0.0
  %1802 = vmatprep.subr.mxu0 0.0
  %1803 = vmatpush2.msra.mxu0 0.0
  %1804 = vmatprep.subr.mxu0 0.0
  %1805 = vmatpush2.msra.mxu0 0.0
  %1806 = vmatprep.subr.mxu0 0.0
  %1807 = vmatpush2.msra.mxu0 0.0
  %1808 = vmatprep.subr.mxu0 0.0
  %1809 = vmatpush2.msra.mxu0 0.0
  %1810 = vmatprep.subr.mxu0 0.0
  %1811 = vmatpush2.msra.mxu0 0.0
  %1812 = vmatprep.subr.mxu0 0.0
  %1813 = vmatpush2.msra.mxu0 0.0
  %1814 = vmatprep.subr.mxu0 0.0
  %1815 = vmatpush2.msra.mxu0 0.0
  %1816 = vmatprep.subr.mxu0 0.0
  %1817 = vmatpush2.msra.mxu0 0.0
  %1818 = vmatprep.subr.mxu0 0.0
  %1819 = vmatpush2.msra.mxu0 0.0
  %1820 = vmatprep.subr.mxu0 0.0
  %1821 = vmatpush2.msra.mxu0 0.0
  %1822 = vmatprep.mubr.f32.mxu0 0.0
  %1823 = vmatmul.mubr.f32.gmra.mxu0 %v1736
  %v1824 = vpop.f32.mrf.mxu0
  %v1825 = vadd.f32 0.0, %v1824
  %v1826 = vpop.f32.mrf.mxu0
  %1827 = vmatprep.mubr.f32.mxu0 0.0
  %1828 = vmatmul.mubr.f32.gmra.mxu0 %v1737
  %v1829 = vpop.f32.mrf.mxu0
  %v1830 = vadd.f32 0.0, %v1829
  %v1831 = vpop.f32.mrf.mxu0
  %1832 = vdwg.mxu0
  %v1833 = vadd.f32 %v1740, %v1825
  %v1834 = vadd.f32 %v1741, %v1830
  %v1835 = vtanh.pop %v1833
  %v1836 = vtanh.pop %v1834
  %1837 = vst [vmem:[%s1534] sm:$0xff] %v1835
  %1838 = vst [vmem:[%s1531 + $0x8] sm:$0xff] %v1836
  %v1839 = vld [vmem:[%s1328] sm:$0xff]
  %v1840 = vld [vmem:[%s1326] sm:$0xff]
  %v1841 = vld [vmem:[%s6] sm:$0xff]
  %v1842 = vld [vmem:[%s6 + $0x8] sm:$0xff]
  %v1843 = vld [vmem:[%s6 + $0x10] sm:$0xff]
  %v1844 = vld [vmem:[%s6 + $0x18] sm:$0xff]
  %v1845 = vld [vmem:[%s6 + $0x20] sm:$0xff]
  %v1846 = vld [vmem:[%s6 + $0x28] sm:$0xff]
  %v1847 = vld [vmem:[%s6 + $0x30] sm:$0xff]
  %v1848 = vld [vmem:[%s6 + $0x38] sm:$0xff]
  %v1849 = vld [vmem:[%s6 + $0x40] sm:$0xff]
  %v1850 = vld [vmem:[%s6 + $0x48] sm:$0xff]
  %v1851 = vld [vmem:[%s6 + $0x50] sm:$0xff]
  %v1852 = vld [vmem:[%s6 + $0x58] sm:$0xff]
  %v1853 = vld [vmem:[%s6 + $0x60] sm:$0xff]
  %v1854 = vld [vmem:[%s6 + $0x68] sm:$0xff]
  %v1855 = vld [vmem:[%s6 + $0x70] sm:$0xff]
  %v1856 = vld [vmem:[%s6 + $0x78] sm:$0xff]
  %1857 = vmatprep.subr.mxu0 0.0
  %1858 = vmatpush1.msra.mxu0 %v1856
  %1859 = vmatprep.subr.mxu0 0.0
  %1860 = vmatpush1.msra.mxu0 %v1855
  %1861 = vmatprep.subr.mxu0 0.0
  %1862 = vmatpush1.msra.mxu0 %v1854
  %1863 = vmatprep.subr.mxu0 0.0
  %1864 = vmatpush1.msra.mxu0 %v1853
  %1865 = vmatprep.subr.mxu0 0.0
  %1866 = vmatpush1.msra.mxu0 %v1852
  %1867 = vmatprep.subr.mxu0 0.0
  %1868 = vmatpush1.msra.mxu0 %v1851
  %1869 = vmatprep.subr.mxu0 0.0
  %1870 = vmatpush1.msra.mxu0 %v1850
  %1871 = vmatprep.subr.mxu0 0.0
  %1872 = vmatpush1.msra.mxu0 %v1849
  %1873 = vmatprep.subr.mxu0 0.0
  %1874 = vmatpush1.msra.mxu0 %v1848
  %1875 = vmatprep.subr.mxu0 0.0
  %1876 = vmatpush1.msra.mxu0 %v1847
  %1877 = vmatprep.subr.mxu0 0.0
  %1878 = vmatpush1.msra.mxu0 %v1846
  %1879 = vmatprep.subr.mxu0 0.0
  %1880 = vmatpush1.msra.mxu0 %v1845
  %1881 = vmatprep.subr.mxu0 0.0
  %1882 = vmatpush1.msra.mxu0 %v1844
  %1883 = vmatprep.subr.mxu0 0.0
  %1884 = vmatpush1.msra.mxu0 %v1843
  %1885 = vmatprep.subr.mxu0 0.0
  %1886 = vmatpush1.msra.mxu0 %v1842
  %1887 = vmatprep.subr.mxu0 0.0
  %1888 = vmatpush1.msra.mxu0 %v1841
  %1889 = vmatprep.subr.mxu0 0.0
  %1890 = vmatpush2.msra.mxu0 0.0
  %1891 = vmatprep.subr.mxu0 0.0
  %1892 = vmatpush2.msra.mxu0 0.0
  %1893 = vmatprep.subr.mxu0 0.0
  %1894 = vmatpush2.msra.mxu0 0.0
  %1895 = vmatprep.subr.mxu0 0.0
  %1896 = vmatpush2.msra.mxu0 0.0
  %1897 = vmatprep.subr.mxu0 0.0
  %1898 = vmatpush2.msra.mxu0 0.0
  %1899 = vmatprep.subr.mxu0 0.0
  %1900 = vmatpush2.msra.mxu0 0.0
  %1901 = vmatprep.subr.mxu0 0.0
  %1902 = vmatpush2.msra.mxu0 0.0
  %1903 = vmatprep.subr.mxu0 0.0
  %1904 = vmatpush2.msra.mxu0 0.0
  %1905 = vmatprep.subr.mxu0 0.0
  %1906 = vmatpush2.msra.mxu0 0.0
  %1907 = vmatprep.subr.mxu0 0.0
  %1908 = vmatpush2.msra.mxu0 0.0
  %1909 = vmatprep.subr.mxu0 0.0
  %1910 = vmatpush2.msra.mxu0 0.0
  %1911 = vmatprep.subr.mxu0 0.0
  %1912 = vmatpush2.msra.mxu0 0.0
  %1913 = vmatprep.subr.mxu0 0.0
  %1914 = vmatpush2.msra.mxu0 0.0
  %1915 = vmatprep.subr.mxu0 0.0
  %1916 = vmatpush2.msra.mxu0 0.0
  %1917 = vmatprep.subr.mxu0 0.0
  %1918 = vmatpush2.msra.mxu0 0.0
  %1919 = vmatprep.subr.mxu0 0.0
  %1920 = vmatpush2.msra.mxu0 0.0
  %1921 = vmatprep.mubr.f32.mxu0 0.0
  %1922 = vmatmul.mubr.f32.gmra.mxu0 %v1835
  %v1923 = vpop.f32.mrf.mxu0
  %v1924 = vadd.f32 0.0, %v1923
  %v1925 = vpop.f32.mrf.mxu0
  %1926 = vmatprep.mubr.f32.mxu0 0.0
  %1927 = vmatmul.mubr.f32.gmra.mxu0 %v1836
  %v1928 = vpop.f32.mrf.mxu0
  %v1929 = vadd.f32 0.0, %v1928
  %v1930 = vpop.f32.mrf.mxu0
  %1931 = vdwg.mxu0
  %v1932 = vadd.f32 %v1839, %v1924
  %v1933 = vadd.f32 %v1840, %v1929
  %v1934 = vtanh.pop %v1932
  %v1935 = vtanh.pop %v1933
  %1936 = vst [vmem:[%s1429] sm:$0xff] %v1934
  %1937 = vst [vmem:[%s1426 + $0x8] sm:$0xff] %v1935
  %v1938 = vld [vmem:[%s1223] sm:$0xff]
  %v1939 = vld [vmem:[#allocation4] sm:$0xff]
  %v1940 = vld [vmem:[%s6] sm:$0xff]
  %v1941 = vld [vmem:[%s6 + $0x8] sm:$0xff]
  %v1942 = vld [vmem:[%s6 + $0x10] sm:$0xff]
  %v1943 = vld [vmem:[%s6 + $0x18] sm:$0xff]
  %v1944 = vld [vmem:[%s6 + $0x20] sm:$0xff]
  %v1945 = vld [vmem:[%s6 + $0x28] sm:$0xff]
  %v1946 = vld [vmem:[%s6 + $0x30] sm:$0xff]
  %v1947 = vld [vmem:[%s6 + $0x38] sm:$0xff]
  %v1948 = vld [vmem:[%s6 + $0x40] sm:$0xff]
  %v1949 = vld [vmem:[%s6 + $0x48] sm:$0xff]
  %v1950 = vld [vmem:[%s6 + $0x50] sm:$0xff]
  %v1951 = vld [vmem:[%s6 + $0x58] sm:$0xff]
  %v1952 = vld [vmem:[%s6 + $0x60] sm:$0xff]
  %v1953 = vld [vmem:[%s6 + $0x68] sm:$0xff]
  %v1954 = vld [vmem:[%s6 + $0x70] sm:$0xff]
  %v1955 = vld [vmem:[%s6 + $0x78] sm:$0xff]
  %1956 = vmatprep.subr.mxu0 0.0
  %1957 = vmatpush1.msra.mxu0 %v1955
  %1958 = vmatprep.subr.mxu0 0.0
  %1959 = vmatpush1.msra.mxu0 %v1954
  %1960 = vmatprep.subr.mxu0 0.0
  %1961 = vmatpush1.msra.mxu0 %v1953
  %1962 = vmatprep.subr.mxu0 0.0
  %1963 = vmatpush1.msra.mxu0 %v1952
  %1964 = vmatprep.subr.mxu0 0.0
  %1965 = vmatpush1.msra.mxu0 %v1951
  %1966 = vmatprep.subr.mxu0 0.0
  %1967 = vmatpush1.msra.mxu0 %v1950
  %1968 = vmatprep.subr.mxu0 0.0
  %1969 = vmatpush1.msra.mxu0 %v1949
  %1970 = vmatprep.subr.mxu0 0.0
  %1971 = vmatpush1.msra.mxu0 %v1948
  %1972 = vmatprep.subr.mxu0 0.0
  %1973 = vmatpush1.msra.mxu0 %v1947
  %1974 = vmatprep.subr.mxu0 0.0
  %1975 = vmatpush1.msra.mxu0 %v1946
  %1976 = vmatprep.subr.mxu0 0.0
  %1977 = vmatpush1.msra.mxu0 %v1945
  %1978 = vmatprep.subr.mxu0 0.0
  %1979 = vmatpush1.msra.mxu0 %v1944
  %1980 = vmatprep.subr.mxu0 0.0
  %1981 = vmatpush1.msra.mxu0 %v1943
  %1982 = vmatprep.subr.mxu0 0.0
  %1983 = vmatpush1.msra.mxu0 %v1942
  %1984 = vmatprep.subr.mxu0 0.0
  %1985 = vmatpush1.msra.mxu0 %v1941
  %1986 = vmatprep.subr.mxu0 0.0
  %1987 = vmatpush1.msra.mxu0 %v1940
  %1988 = vmatprep.subr.mxu0 0.0
  %1989 = vmatpush2.msra.mxu0 0.0
  %1990 = vmatprep.subr.mxu0 0.0
  %1991 = vmatpush2.msra.mxu0 0.0
  %1992 = vmatprep.subr.mxu0 0.0
  %1993 = vmatpush2.msra.mxu0 0.0
  %1994 = vmatprep.subr.mxu0 0.0
  %1995 = vmatpush2.msra.mxu0 0.0
  %1996 = vmatprep.subr.mxu0 0.0
  %1997 = vmatpush2.msra.mxu0 0.0
  %1998 = vmatprep.subr.mxu0 0.0
  %1999 = vmatpush2.msra.mxu0 0.0
  %2000 = vmatprep.subr.mxu0 0.0
  %2001 = vmatpush2.msra.mxu0 0.0
  %2002 = vmatprep.subr.mxu0 0.0
  %2003 = vmatpush2.msra.mxu0 0.0
  %2004 = vmatprep.subr.mxu0 0.0
  %2005 = vmatpush2.msra.mxu0 0.0
  %2006 = vmatprep.subr.mxu0 0.0
  %2007 = vmatpush2.msra.mxu0 0.0
  %2008 = vmatprep.subr.mxu0 0.0
  %2009 = vmatpush2.msra.mxu0 0.0
  %2010 = vmatprep.subr.mxu0 0.0
  %2011 = vmatpush2.msra.mxu0 0.0
  %2012 = vmatprep.subr.mxu0 0.0
  %2013 = vmatpush2.msra.mxu0 0.0
  %2014 = vmatprep.subr.mxu0 0.0
  %2015 = vmatpush2.msra.mxu0 0.0
  %2016 = vmatprep.subr.mxu0 0.0
  %2017 = vmatpush2.msra.mxu0 0.0
  %2018 = vmatprep.subr.mxu0 0.0
  %2019 = vmatpush2.msra.mxu0 0.0
  %2020 = vmatprep.mubr.f32.mxu0 0.0
  %2021 = vmatmul.mubr.f32.gmra.mxu0 %v1934
  %v2022 = vpop.f32.mrf.mxu0
  %v2023 = vadd.f32 0.0, %v2022
  %v2024 = vpop.f32.mrf.mxu0
  %2025 = vmatprep.mubr.f32.mxu0 0.0
  %2026 = vmatmul.mubr.f32.gmra.mxu0 %v1935
  %v2027 = vpop.f32.mrf.mxu0
  %v2028 = vadd.f32 0.0, %v2027
  %v2029 = vpop.f32.mrf.mxu0
  %2030 = vdwg.mxu0
  %v2031 = vadd.f32 %v1938, %v2023
  %v2032 = vadd.f32 %v1939, %v2028
  %v2033 = vtanh.pop %v2031
  %v2034 = vtanh.pop %v2032
  %2035 = vst [vmem:[%s1324] sm:$0xff] %v2033
  %2036 = vst [vmem:[%s1321 + $0x8] sm:$0xff] %v2034
  %v2037 = vld [vmem:[#allocation6] sm:$0xff]
  %v2038 = vld [vmem:[#allocation6 + $0x10] sm:$0xff]
  %v2039 = vld [vmem:[#allocation6 + $0x20] sm:$0xff]
  %v2040 = vld [vmem:[#allocation6 + $0x30] sm:$0xff]
  %v2041 = vld [vmem:[#allocation6 + $0x40] sm:$0xff]
  %v2042 = vld [vmem:[#allocation6 + $0x50] sm:$0xff]
  %v2043 = vld [vmem:[#allocation6 + $0x60] sm:$0xff]
  %v2044 = vld [vmem:[#allocation6 + $0x70] sm:$0xff]
  %v2045 = vld [vmem:[#allocation6 + $0x8] sm:$0xff]
  %v2046 = vld [vmem:[#allocation6 + $0x18] sm:$0xff]
  %v2047 = vld [vmem:[#allocation6 + $0x28] sm:$0xff]
  %v2048 = vld [vmem:[#allocation6 + $0x38] sm:$0xff]
  %v2049 = vld [vmem:[#allocation6 + $0x48] sm:$0xff]
  %v2050 = vld [vmem:[#allocation6 + $0x58] sm:$0xff]
  %v2051 = vld [vmem:[#allocation6 + $0x68] sm:$0xff]
  %v2052 = vld [vmem:[#allocation6 + $0x78] sm:$0xff]
  %2053 = vrot.lane.b32.xlu0 %v2045, 32
  %v2054 = vpop.permute.xlu0 %2053
  %2055 = vrot.lane.b32.xlu0 %v2046, 32
  %v2056 = vpop.permute.xlu0 %2055
  %2057 = vrot.lane.b32.xlu0 %v2047, 32
  %v2058 = vpop.permute.xlu0 %2057
  %2059 = vrot.lane.b32.xlu0 %v2048, 32
  %v2060 = vpop.permute.xlu0 %2059
  %2061 = vrot.lane.b32.xlu0 %v2049, 32
  %v2062 = vpop.permute.xlu0 %2061
  %2063 = vrot.lane.b32.xlu0 %v2050, 32
  %v2064 = vpop.permute.xlu0 %2063
  %2065 = vrot.lane.b32.xlu0 %v2051, 32
  %v2066 = vpop.permute.xlu0 %2065
  %2067 = vrot.lane.b32.xlu0 %v2052, 32
  %v2068 = vpop.permute.xlu0 %2067
  %v2069 = vsel %vm1053, %v2054, 0.0
  %v2070 = vsel %vm1053, %v2056, 0.0
  %v2071 = vsel %vm1053, %v2058, 0.0
  %v2072 = vsel %vm1053, %v2060, 0.0
  %v2073 = vsel %vm1053, %v2062, 0.0
  %v2074 = vsel %vm1053, %v2064, 0.0
  %v2075 = vsel %vm1053, %v2066, 0.0
  %v2076 = vsel %vm1053, %v2068, 0.0
  %v2077 = vsel %vm1052, %v2037, %v2069
  %v2078 = vsel %vm1052, %v2038, %v2070
  %v2079 = vsel %vm1052, %v2039, %v2071
  %v2080 = vsel %vm1052, %v2040, %v2072
  %v2081 = vsel %vm1052, %v2041, %v2073
  %v2082 = vsel %vm1052, %v2042, %v2074
  %v2083 = vsel %vm1052, %v2043, %v2075
  %v2084 = vsel %vm1052, %v2044, %v2076
  %2085 = vst [vmem:[%s7] sm:$0xff] %v2077
  %2086 = vst [vmem:[%s7 + $0x8] sm:$0xff] %v2078
  %2087 = vst [vmem:[%s7 + $0x10] sm:$0xff] %v2079
  %2088 = vst [vmem:[%s7 + $0x18] sm:$0xff] %v2080
  %2089 = vst [vmem:[%s7 + $0x20] sm:$0xff] %v2081
  %2090 = vst [vmem:[%s7 + $0x28] sm:$0xff] %v2082
  %2091 = vst [vmem:[%s7 + $0x30] sm:$0xff] %v2083
  %2092 = vst [vmem:[%s7 + $0x38] sm:$0xff] %v2084
  // Predicated region
  $region30: #{_lambda_.1} parent=0 // pred_check
    _
  $region31: #{_lambda_.1} parent=0 // pred_check_branch
    %2094 = sbr.rel (0) target = $region33
  $region32: #{_lambda_.1} parent=0 // pred_region
    _
  $region33: #{_lambda_.1} parent=0 // pred_fallthru
    _
  // Predicated region
  $region34: #{_lambda_.1} parent=0 // pred_check
    _
  $region35: #{_lambda_.1} parent=0 // pred_check_branch
    %2096 = sbr.rel (0) target = $region37
  $region36: #{_lambda_.1} parent=0 // pred_region
    _
  $region37: #{_lambda_.1} parent=0 // pred_fallthru
    _

</llo_original>
